<compile_context>
chip_gen: v5e
topology: v5e:2x2
jax: 0.10.0
libtpu: 0.0.40
codegen_flags: <defaults>
</compile_context>

<pallas_src>
import jax
import jax.numpy as jnp
from jax import lax
from jax.experimental import pallas as pl
from jax.experimental.pallas import tpu as pltpu


def _round_up(x, m):
    return ((x + m - 1) // m) * m


def _upsample_kernel(x_ref, w_ref, b_ref, o_ref):
    """One batch sample of ConvTranspose2d(k=4, s=2, p=1) via 4 sub-pixel convs.

    x_ref: (1, H+2, W+2, C)        bf16  spatially zero-padded NHWC input
    w_ref: (2, 2, 2, 2, C, Opad)   bf16  [py, px, dr, dc, c_in, c_out] tap weights
                                          = w_torch[c, o, 3-py-2*dr, 3-px-2*dc]
    b_ref: (1, Opad)               f32   bias, zero-padded to Opad lanes
    o_ref: (1, H, 2, W, 2*Opad)    f32   o_ref[0, q, py, r, px*Opad + o]
                                          == y[2q+py, 2r+px, o]
    """
    H = o_ref.shape[1]
    W = o_ref.shape[3]
    C = x_ref.shape[3]
    Opad = b_ref.shape[1]

    x = x_ref[0]                       # (H+2, W+2, C) bf16, stays on-chip
    bias = b_ref[...]                  # (1, Opad) f32

    # Static unroll: 4 output phases x 4 taps each (fused im2col, K split per tap).
    for py in range(2):
        phase_out = []
        for px in range(2):
            acc = jnp.zeros((H * W, Opad), jnp.float32)
            for dr in range(2):
                for dc in range(2):
                    tap = x[py + dr:py + dr + H, px + dc:px + dc + W, :]
                    acc = acc + jnp.dot(
                        tap.reshape(H * W, C),
                        w_ref[py, px, dr, dc],
                        preferred_element_type=jnp.float32)
            acc = acc + bias
            phase_out.append(acc.reshape(H, W, Opad))
        # One lane-dense (W, 2*Opad) store per (sample, py): unmasked 256-wide vst.
        o_ref[0, :, py, :, :] = jnp.concatenate(phase_out, axis=-1)


def upsample_forward(w, b, x_nchw):
    """PyTorch-equivalent Upsample.forward.

    w: (C_in, C_out, 4, 4)   torch ConvTranspose2d weight layout
    b: (C_out,)
    x_nchw: (N, C_in, H, W)  ->  (N, C_out, 2H, 2W)
    """
    nb, ci, h, wd = x_nchw.shape
    ci_w, co, kh, kw = w.shape
    assert (ci_w, kh, kw) == (ci, 4, 4)
    opad = _round_up(co, 128)

    # NCHW -> NHWC, spatial zero-pad of 1, bf16 operands for the MXU.
    x = jnp.transpose(x_nchw, (0, 2, 3, 1))
    xp = jnp.pad(x, ((0, 0), (1, 1), (1, 1), (0, 0))).astype(jnp.bfloat16)

    # Per-phase 2x2 tap weights: W[py, px, dr, dc, c, o] = w[c, o, 3-py-2dr, 3-px-2dc]
    w_r = w[:, :, ::-1, ::-1].reshape(ci, co, 2, 2, 2, 2)   # (c, o, dr, py, dc, px)
    w_ph = jnp.transpose(w_r, (3, 5, 2, 4, 0, 1))           # (py, px, dr, dc, c, o)
    w_ph = jnp.pad(w_ph, ((0, 0),) * 5 + ((0, opad - co),)).astype(jnp.bfloat16)
    b_p = jnp.pad(b, (0, opad - co)).reshape(1, opad).astype(jnp.float32)

    # Grid over batch only: per-sample tiles (<= a few MB for the sizes this module
    # is used at in SimpleUNet) fit VMEM comfortably on v5e/v6e/v7x.
    out = pl.pallas_call(
        _upsample_kernel,
        out_shape=jax.ShapeDtypeStruct((nb, h, 2, wd, 2 * opad), jnp.float32),
        grid=(nb,),
        in_specs=[
            pl.BlockSpec((1, h + 2, wd + 2, ci), lambda n: (n, 0, 0, 0)),
            pl.BlockSpec((2, 2, 2, 2, ci, opad),
                         lambda n: (0, 0, 0, 0, 0, 0)),
            pl.BlockSpec((1, opad), lambda n: (0, 0)),
        ],
        out_specs=pl.BlockSpec((1, h, 2, wd, 2 * opad),
                               lambda n: (n, 0, 0, 0, 0)),
        compiler_params=pltpu.CompilerParams(
            dimension_semantics=("parallel",)),
    )(xp, w_ph, b_p)

    # (N, H, 2, W, 2*Opad) -> (N, 2H, 2W, Opad) is a free row-major reshape;
    # then drop the channel padding and return NCHW like PyTorch.
    out = out.reshape(nb, 2 * h, 2 * wd, opad)[..., :co]
    return jnp.transpose(out, (0, 3, 1, 2))


def upsample_reference(w, b, x_nchw):
    """Pure-JAX reference (same bf16 operands, f32 accumulation) for validation."""
    w_eq = jnp.transpose(w[:, :, ::-1, ::-1], (1, 0, 2, 3))   # (O, I, 4, 4)
    y = lax.conv_general_dilated(
        x_nchw.astype(jnp.bfloat16), w_eq.astype(jnp.bfloat16),
        window_strides=(1, 1), padding=((2, 2), (2, 2)),
        lhs_dilation=(2, 2), rhs_dilation=(1, 1),
        dimension_numbers=("NCHW", "OIHW", "NCHW"),
        preferred_element_type=jnp.float32)
    return y + b[None, :, None, None]


if __name__ == "__main__":
    key = jax.random.PRNGKey(0)
    kx, kw_, kb = jax.random.split(key, 3)

    n, c_in, c_out, h, w_sp = 2, 4, 8, 16, 16
    s = 1.0 / jnp.sqrt(jnp.float32(c_in * 4 * 4))
    x = jax.random.normal(kx, (n, c_in, h, w_sp), jnp.float32)
    w = jax.random.uniform(kw_, (c_in, c_out, 4, 4), jnp.float32, -s, s)
    b = jax.random.uniform(kb, (c_out,), jnp.float32, -s, s)

    fwd = jax.jit(upsample_forward)
    out = jax.block_until_ready(fwd(w, b, x))

    assert out.shape == (n, c_out, 2 * h, 2 * w_sp), out.shape
    assert out.dtype == jnp.float32
    assert bool(jnp.all(jnp.isfinite(out)))

    ref = jax.block_until_ready(jax.jit(upsample_reference)(w, b, x))
    max_err = float(jnp.max(jnp.abs(out - ref)))
    assert bool(jnp.allclose(out, ref, atol=2e-2, rtol=2e-2)), max_err

    print("KERNEL_OK")
</pallas_src>

<mosaic_0001>
module attributes {stable_mosaic.version = 11 : i64} {
  func.func @_upsample_kernel(%arg0: i32, %arg1: memref<1x18x18x4xbf16, #tpu.memory_space<vmem>>, %arg2: memref<2x2x2x2x4x128xbf16, #tpu.memory_space<vmem>>, %arg3: memref<1x128xf32, #tpu.memory_space<vmem>>, %arg4: memref<1x16x2x16x256xf32, #tpu.memory_space<vmem>>) attributes {dimension_semantics = [#tpu.dimension_semantics<parallel>], iteration_bounds = array<i64: 2>, scalar_prefetch = 0 : i64, scratch_operands = 0 : i64, tpu.core_type = #tpu.core_type<tc>, window_params = [{transform_indices = @transform_0, window_bounds = array<i64: 1, 18, 18, 4>}, {pipeline_mode = #tpu.pipeline_mode<synchronous>, transform_indices = @transform_1, window_bounds = array<i64: 2, 2, 2, 2, 4, 128>}, {pipeline_mode = #tpu.pipeline_mode<synchronous>, transform_indices = @transform_2, window_bounds = array<i64: 1, 128>}, {transform_indices = @transform_3, window_bounds = array<i64: 1, 16, 2, 16, 256>}]} {
    %c0 = arith.constant 0 : index
    %c0_0 = arith.constant 0 : index
    %c0_1 = arith.constant 0 : index
    %c0_2 = arith.constant 0 : index
    %0 = vector.load %arg1[%c0, %c0_0, %c0_1, %c0_2] : memref<1x18x18x4xbf16, #tpu.memory_space<vmem>>, vector<1x18x18x4xbf16>
    %1 = vector.shape_cast %0 : vector<1x18x18x4xbf16> to vector<18x18x4xbf16>
    %c0_3 = arith.constant 0 : index
    %c0_4 = arith.constant 0 : index
    %2 = vector.load %arg3[%c0_3, %c0_4] : memref<1x128xf32, #tpu.memory_space<vmem>>, vector<1x128xf32>
    %cst = arith.constant 0.000000e+00 : f32
    %3 = vector.broadcast %cst : f32 to vector<256x128xf32>
    %4 = vector.extract_strided_slice %1 {offsets = [0, 0, 0], sizes = [16, 16, 4], strides = [1, 1, 1]} : vector<18x18x4xbf16> to vector<16x16x4xbf16>
    %5 = vector.shape_cast %4 : vector<16x16x4xbf16> to vector<256x4xbf16>
    %c0_5 = arith.constant 0 : index
    %c0_6 = arith.constant 0 : index
    %c0_7 = arith.constant 0 : index
    %c0_8 = arith.constant 0 : index
    %c0_9 = arith.constant 0 : index
    %c0_10 = arith.constant 0 : index
    %6 = vector.load %arg2[%c0_5, %c0_6, %c0_7, %c0_8, %c0_9, %c0_10] : memref<2x2x2x2x4x128xbf16, #tpu.memory_space<vmem>>, vector<1x1x1x1x4x128xbf16>
    %7 = vector.shape_cast %6 : vector<1x1x1x1x4x128xbf16> to vector<4x128xbf16>
    %cst_11 = arith.constant dense<0.000000e+00> : vector<256x128xf32>
    %8 = tpu.matmul %5, %7, %cst_11 {dimension_numbers = #tpu.dot_dimension_numbers<[1], [0], [0], [1], [0, 0, 1, 1], [], []>} : vector<256x4xbf16>, vector<4x128xbf16>, vector<256x128xf32> -> vector<256x128xf32>
    %9 = arith.addf %3, %8 : vector<256x128xf32>
    %10 = vector.extract_strided_slice %1 {offsets = [0, 1, 0], sizes = [16, 16, 4], strides = [1, 1, 1]} : vector<18x18x4xbf16> to vector<16x16x4xbf16>
    %11 = vector.shape_cast %10 : vector<16x16x4xbf16> to vector<256x4xbf16>
    %c0_12 = arith.constant 0 : index
    %c0_13 = arith.constant 0 : index
    %c0_14 = arith.constant 0 : index
    %c1 = arith.constant 1 : index
    %c0_15 = arith.constant 0 : index
    %c0_16 = arith.constant 0 : index
    %12 = vector.load %arg2[%c0_12, %c0_13, %c0_14, %c1, %c0_15, %c0_16] : memref<2x2x2x2x4x128xbf16, #tpu.memory_space<vmem>>, vector<1x1x1x1x4x128xbf16>
    %13 = vector.shape_cast %12 : vector<1x1x1x1x4x128xbf16> to vector<4x128xbf16>
    %cst_17 = arith.constant dense<0.000000e+00> : vector<256x128xf32>
    %14 = tpu.matmul %11, %13, %cst_17 {dimension_numbers = #tpu.dot_dimension_numbers<[1], [0], [0], [1], [0, 0, 1, 1], [], []>} : vector<256x4xbf16>, vector<4x128xbf16>, vector<256x128xf32> -> vector<256x128xf32>
    %15 = arith.addf %9, %14 : vector<256x128xf32>
    %16 = vector.extract_strided_slice %1 {offsets = [1, 0, 0], sizes = [16, 16, 4], strides = [1, 1, 1]} : vector<18x18x4xbf16> to vector<16x16x4xbf16>
    %17 = vector.shape_cast %16 : vector<16x16x4xbf16> to vector<256x4xbf16>
    %c0_18 = arith.constant 0 : index
    %c0_19 = arith.constant 0 : index
    %c1_20 = arith.constant 1 : index
    %c0_21 = arith.constant 0 : index
    %c0_22 = arith.constant 0 : index
    %c0_23 = arith.constant 0 : index
    %18 = vector.load %arg2[%c0_18, %c0_19, %c1_20, %c0_21, %c0_22, %c0_23] : memref<2x2x2x2x4x128xbf16, #tpu.memory_space<vmem>>, vector<1x1x1x1x4x128xbf16>
    %19 = vector.shape_cast %18 : vector<1x1x1x1x4x128xbf16> to vector<4x128xbf16>
    %cst_24 = arith.constant dense<0.000000e+00> : vector<256x128xf32>
    %20 = tpu.matmul %17, %19, %cst_24 {dimension_numbers = #tpu.dot_dimension_numbers<[1], [0], [0], [1], [0, 0, 1, 1], [], []>} : vector<256x4xbf16>, vector<4x128xbf16>, vector<256x128xf32> -> vector<256x128xf32>
    %21 = arith.addf %15, %20 : vector<256x128xf32>
    %22 = vector.extract_strided_slice %1 {offsets = [1, 1, 0], sizes = [16, 16, 4], strides = [1, 1, 1]} : vector<18x18x4xbf16> to vector<16x16x4xbf16>
    %23 = vector.shape_cast %22 : vector<16x16x4xbf16> to vector<256x4xbf16>
    %c0_25 = arith.constant 0 : index
    %c0_26 = arith.constant 0 : index
    %c1_27 = arith.constant 1 : index
    %c1_28 = arith.constant 1 : index
    %c0_29 = arith.constant 0 : index
    %c0_30 = arith.constant 0 : index
    %24 = vector.load %arg2[%c0_25, %c0_26, %c1_27, %c1_28, %c0_29, %c0_30] : memref<2x2x2x2x4x128xbf16, #tpu.memory_space<vmem>>, vector<1x1x1x1x4x128xbf16>
    %25 = vector.shape_cast %24 : vector<1x1x1x1x4x128xbf16> to vector<4x128xbf16>
    %cst_31 = arith.constant dense<0.000000e+00> : vector<256x128xf32>
    %26 = tpu.matmul %23, %25, %cst_31 {dimension_numbers = #tpu.dot_dimension_numbers<[1], [0], [0], [1], [0, 0, 1, 1], [], []>} : vector<256x4xbf16>, vector<4x128xbf16>, vector<256x128xf32> -> vector<256x128xf32>
    %27 = arith.addf %21, %26 : vector<256x128xf32>
    %28 = vector.broadcast %2 : vector<1x128xf32> to vector<256x128xf32>
    %29 = arith.addf %27, %28 : vector<256x128xf32>
    %30 = vector.shape_cast %29 : vector<256x128xf32> to vector<16x16x128xf32>
    %cst_32 = arith.constant 0.000000e+00 : f32
    %31 = vector.broadcast %cst_32 : f32 to vector<256x128xf32>
    %32 = vector.extract_strided_slice %1 {offsets = [0, 1, 0], sizes = [16, 16, 4], strides = [1, 1, 1]} : vector<18x18x4xbf16> to vector<16x16x4xbf16>
    %33 = vector.shape_cast %32 : vector<16x16x4xbf16> to vector<256x4xbf16>
    %c0_33 = arith.constant 0 : index
    %c1_34 = arith.constant 1 : index
    %c0_35 = arith.constant 0 : index
    %c0_36 = arith.constant 0 : index
    %c0_37 = arith.constant 0 : index
    %c0_38 = arith.constant 0 : index
    %34 = vector.load %arg2[%c0_33, %c1_34, %c0_35, %c0_36, %c0_37, %c0_38] : memref<2x2x2x2x4x128xbf16, #tpu.memory_space<vmem>>, vector<1x1x1x1x4x128xbf16>
    %35 = vector.shape_cast %34 : vector<1x1x1x1x4x128xbf16> to vector<4x128xbf16>
    %cst_39 = arith.constant dense<0.000000e+00> : vector<256x128xf32>
    %36 = tpu.matmul %33, %35, %cst_39 {dimension_numbers = #tpu.dot_dimension_numbers<[1], [0], [0], [1], [0, 0, 1, 1], [], []>} : vector<256x4xbf16>, vector<4x128xbf16>, vector<256x128xf32> -> vector<256x128xf32>
    %37 = arith.addf %31, %36 : vector<256x128xf32>
    %38 = vector.extract_strided_slice %1 {offsets = [0, 2, 0], sizes = [16, 16, 4], strides = [1, 1, 1]} : vector<18x18x4xbf16> to vector<16x16x4xbf16>
    %39 = vector.shape_cast %38 : vector<16x16x4xbf16> to vector<256x4xbf16>
    %c0_40 = arith.constant 0 : index
    %c1_41 = arith.constant 1 : index
    %c0_42 = arith.constant 0 : index
    %c1_43 = arith.constant 1 : index
    %c0_44 = arith.constant 0 : index
    %c0_45 = arith.constant 0 : index
    %40 = vector.load %arg2[%c0_40, %c1_41, %c0_42, %c1_43, %c0_44, %c0_45] : memref<2x2x2x2x4x128xbf16, #tpu.memory_space<vmem>>, vector<1x1x1x1x4x128xbf16>
    %41 = vector.shape_cast %40 : vector<1x1x1x1x4x128xbf16> to vector<4x128xbf16>
    %cst_46 = arith.constant dense<0.000000e+00> : vector<256x128xf32>
    %42 = tpu.matmul %39, %41, %cst_46 {dimension_numbers = #tpu.dot_dimension_numbers<[1], [0], [0], [1], [0, 0, 1, 1], [], []>} : vector<256x4xbf16>, vector<4x128xbf16>, vector<256x128xf32> -> vector<256x128xf32>
    %43 = arith.addf %37, %42 : vector<256x128xf32>
    %44 = vector.extract_strided_slice %1 {offsets = [1, 1, 0], sizes = [16, 16, 4], strides = [1, 1, 1]} : vector<18x18x4xbf16> to vector<16x16x4xbf16>
    %45 = vector.shape_cast %44 : vector<16x16x4xbf16> to vector<256x4xbf16>
    %c0_47 = arith.constant 0 : index
    %c1_48 = arith.constant 1 : index
    %c1_49 = arith.constant 1 : index
    %c0_50 = arith.constant 0 : index
    %c0_51 = arith.constant 0 : index
    %c0_52 = arith.constant 0 : index
    %46 = vector.load %arg2[%c0_47, %c1_48, %c1_49, %c0_50, %c0_51, %c0_52] : memref<2x2x2x2x4x128xbf16, #tpu.memory_space<vmem>>, vector<1x1x1x1x4x128xbf16>
    %47 = vector.shape_cast %46 : vector<1x1x1x1x4x128xbf16> to vector<4x128xbf16>
    %cst_53 = arith.constant dense<0.000000e+00> : vector<256x128xf32>
    %48 = tpu.matmul %45, %47, %cst_53 {dimension_numbers = #tpu.dot_dimension_numbers<[1], [0], [0], [1], [0, 0, 1, 1], [], []>} : vector<256x4xbf16>, vector<4x128xbf16>, vector<256x128xf32> -> vector<256x128xf32>
    %49 = arith.addf %43, %48 : vector<256x128xf32>
    %50 = vector.extract_strided_slice %1 {offsets = [1, 2, 0], sizes = [16, 16, 4], strides = [1, 1, 1]} : vector<18x18x4xbf16> to vector<16x16x4xbf16>
    %51 = vector.shape_cast %50 : vector<16x16x4xbf16> to vector<256x4xbf16>
    %c0_54 = arith.constant 0 : index
    %c1_55 = arith.constant 1 : index
    %c1_56 = arith.constant 1 : index
    %c1_57 = arith.constant 1 : index
    %c0_58 = arith.constant 0 : index
    %c0_59 = arith.constant 0 : index
    %52 = vector.load %arg2[%c0_54, %c1_55, %c1_56, %c1_57, %c0_58, %c0_59] : memref<2x2x2x2x4x128xbf16, #tpu.memory_space<vmem>>, vector<1x1x1x1x4x128xbf16>
    %53 = vector.shape_cast %52 : vector<1x1x1x1x4x128xbf16> to vector<4x128xbf16>
    %cst_60 = arith.constant dense<0.000000e+00> : vector<256x128xf32>
    %54 = tpu.matmul %51, %53, %cst_60 {dimension_numbers = #tpu.dot_dimension_numbers<[1], [0], [0], [1], [0, 0, 1, 1], [], []>} : vector<256x4xbf16>, vector<4x128xbf16>, vector<256x128xf32> -> vector<256x128xf32>
    %55 = arith.addf %49, %54 : vector<256x128xf32>
    %56 = vector.broadcast %2 : vector<1x128xf32> to vector<256x128xf32>
    %57 = arith.addf %55, %56 : vector<256x128xf32>
    %58 = vector.shape_cast %57 : vector<256x128xf32> to vector<16x16x128xf32>
    %59 = tpu.concatenate %30, %58 in 2 : vector<16x16x128xf32>, vector<16x16x128xf32> -> vector<16x16x256xf32>
    %c0_61 = arith.constant 0 : index
    %c0_62 = arith.constant 0 : index
    %c0_63 = arith.constant 0 : index
    %c0_64 = arith.constant 0 : index
    %c0_65 = arith.constant 0 : index
    %60 = vector.load %arg4[%c0_61, %c0_62, %c0_63, %c0_64, %c0_65] : memref<1x16x2x16x256xf32, #tpu.memory_space<vmem>>, vector<1x16x1x16x256xf32>
    %61 = vector.shape_cast %60 : vector<1x16x1x16x256xf32> to vector<16x16x256xf32>
    %62 = vector.shape_cast %59 : vector<16x16x256xf32> to vector<1x16x1x16x256xf32>
    tpu.vector_store %arg4[%c0_61, %c0_62, %c0_63, %c0_64, %c0_65], %62 {strides = array<i32>} : memref<1x16x2x16x256xf32, #tpu.memory_space<vmem>>, vector<1x16x1x16x256xf32>,
    %cst_66 = arith.constant 0.000000e+00 : f32
    %63 = vector.broadcast %cst_66 : f32 to vector<256x128xf32>
    %64 = vector.extract_strided_slice %1 {offsets = [1, 0, 0], sizes = [16, 16, 4], strides = [1, 1, 1]} : vector<18x18x4xbf16> to vector<16x16x4xbf16>
    %65 = vector.shape_cast %64 : vector<16x16x4xbf16> to vector<256x4xbf16>
    %c1_67 = arith.constant 1 : index
    %c0_68 = arith.constant 0 : index
    %c0_69 = arith.constant 0 : index
    %c0_70 = arith.constant 0 : index
    %c0_71 = arith.constant 0 : index
    %c0_72 = arith.constant 0 : index
    %66 = vector.load %arg2[%c1_67, %c0_68, %c0_69, %c0_70, %c0_71, %c0_72] : memref<2x2x2x2x4x128xbf16, #tpu.memory_space<vmem>>, vector<1x1x1x1x4x128xbf16>
    %67 = vector.shape_cast %66 : vector<1x1x1x1x4x128xbf16> to vector<4x128xbf16>
    %cst_73 = arith.constant dense<0.000000e+00> : vector<256x128xf32>
    %68 = tpu.matmul %65, %67, %cst_73 {dimension_numbers = #tpu.dot_dimension_numbers<[1], [0], [0], [1], [0, 0, 1, 1], [], []>} : vector<256x4xbf16>, vector<4x128xbf16>, vector<256x128xf32> -> vector<256x128xf32>
    %69 = arith.addf %63, %68 : vector<256x128xf32>
    %70 = vector.extract_strided_slice %1 {offsets = [1, 1, 0], sizes = [16, 16, 4], strides = [1, 1, 1]} : vector<18x18x4xbf16> to vector<16x16x4xbf16>
    %71 = vector.shape_cast %70 : vector<16x16x4xbf16> to vector<256x4xbf16>
    %c1_74 = arith.constant 1 : index
    %c0_75 = arith.constant 0 : index
    %c0_76 = arith.constant 0 : index
    %c1_77 = arith.constant 1 : index
    %c0_78 = arith.constant 0 : index
    %c0_79 = arith.constant 0 : index
    %72 = vector.load %arg2[%c1_74, %c0_75, %c0_76, %c1_77, %c0_78, %c0_79] : memref<2x2x2x2x4x128xbf16, #tpu.memory_space<vmem>>, vector<1x1x1x1x4x128xbf16>
    %73 = vector.shape_cast %72 : vector<1x1x1x1x4x128xbf16> to vector<4x128xbf16>
    %cst_80 = arith.constant dense<0.000000e+00> : vector<256x128xf32>
    %74 = tpu.matmul %71, %73, %cst_80 {dimension_numbers = #tpu.dot_dimension_numbers<[1], [0], [0], [1], [0, 0, 1, 1], [], []>} : vector<256x4xbf16>, vector<4x128xbf16>, vector<256x128xf32> -> vector<256x128xf32>
    %75 = arith.addf %69, %74 : vector<256x128xf32>
    %76 = vector.extract_strided_slice %1 {offsets = [2, 0, 0], sizes = [16, 16, 4], strides = [1, 1, 1]} : vector<18x18x4xbf16> to vector<16x16x4xbf16>
    %77 = vector.shape_cast %76 : vector<16x16x4xbf16> to vector<256x4xbf16>
    %c1_81 = arith.constant 1 : index
    %c0_82 = arith.constant 0 : index
    %c1_83 = arith.constant 1 : index
    %c0_84 = arith.constant 0 : index
    %c0_85 = arith.constant 0 : index
    %c0_86 = arith.constant 0 : index
    %78 = vector.load %arg2[%c1_81, %c0_82, %c1_83, %c0_84, %c0_85, %c0_86] : memref<2x2x2x2x4x128xbf16, #tpu.memory_space<vmem>>, vector<1x1x1x1x4x128xbf16>
    %79 = vector.shape_cast %78 : vector<1x1x1x1x4x128xbf16> to vector<4x128xbf16>
    %cst_87 = arith.constant dense<0.000000e+00> : vector<256x128xf32>
    %80 = tpu.matmul %77, %79, %cst_87 {dimension_numbers = #tpu.dot_dimension_numbers<[1], [0], [0], [1], [0, 0, 1, 1], [], []>} : vector<256x4xbf16>, vector<4x128xbf16>, vector<256x128xf32> -> vector<256x128xf32>
    %81 = arith.addf %75, %80 : vector<256x128xf32>
    %82 = vector.extract_strided_slice %1 {offsets = [2, 1, 0], sizes = [16, 16, 4], strides = [1, 1, 1]} : vector<18x18x4xbf16> to vector<16x16x4xbf16>
    %83 = vector.shape_cast %82 : vector<16x16x4xbf16> to vector<256x4xbf16>
    %c1_88 = arith.constant 1 : index
    %c0_89 = arith.constant 0 : index
    %c1_90 = arith.constant 1 : index
    %c1_91 = arith.constant 1 : index
    %c0_92 = arith.constant 0 : index
    %c0_93 = arith.constant 0 : index
    %84 = vector.load %arg2[%c1_88, %c0_89, %c1_90, %c1_91, %c0_92, %c0_93] : memref<2x2x2x2x4x128xbf16, #tpu.memory_space<vmem>>, vector<1x1x1x1x4x128xbf16>
    %85 = vector.shape_cast %84 : vector<1x1x1x1x4x128xbf16> to vector<4x128xbf16>
    %cst_94 = arith.constant dense<0.000000e+00> : vector<256x128xf32>
    %86 = tpu.matmul %83, %85, %cst_94 {dimension_numbers = #tpu.dot_dimension_numbers<[1], [0], [0], [1], [0, 0, 1, 1], [], []>} : vector<256x4xbf16>, vector<4x128xbf16>, vector<256x128xf32> -> vector<256x128xf32>
    %87 = arith.addf %81, %86 : vector<256x128xf32>
    %88 = vector.broadcast %2 : vector<1x128xf32> to vector<256x128xf32>
    %89 = arith.addf %87, %88 : vector<256x128xf32>
    %90 = vector.shape_cast %89 : vector<256x128xf32> to vector<16x16x128xf32>
    %cst_95 = arith.constant 0.000000e+00 : f32
    %91 = vector.broadcast %cst_95 : f32 to vector<256x128xf32>
    %92 = vector.extract_strided_slice %1 {offsets = [1, 1, 0], sizes = [16, 16, 4], strides = [1, 1, 1]} : vector<18x18x4xbf16> to vector<16x16x4xbf16>
    %93 = vector.shape_cast %92 : vector<16x16x4xbf16> to vector<256x4xbf16>
    %c1_96 = arith.constant 1 : index
    %c1_97 = arith.constant 1 : index
    %c0_98 = arith.constant 0 : index
    %c0_99 = arith.constant 0 : index
    %c0_100 = arith.constant 0 : index
    %c0_101 = arith.constant 0 : index
    %94 = vector.load %arg2[%c1_96, %c1_97, %c0_98, %c0_99, %c0_100, %c0_101] : memref<2x2x2x2x4x128xbf16, #tpu.memory_space<vmem>>, vector<1x1x1x1x4x128xbf16>
    %95 = vector.shape_cast %94 : vector<1x1x1x1x4x128xbf16> to vector<4x128xbf16>
    %cst_102 = arith.constant dense<0.000000e+00> : vector<256x128xf32>
    %96 = tpu.matmul %93, %95, %cst_102 {dimension_numbers = #tpu.dot_dimension_numbers<[1], [0], [0], [1], [0, 0, 1, 1], [], []>} : vector<256x4xbf16>, vector<4x128xbf16>, vector<256x128xf32> -> vector<256x128xf32>
    %97 = arith.addf %91, %96 : vector<256x128xf32>
    %98 = vector.extract_strided_slice %1 {offsets = [1, 2, 0], sizes = [16, 16, 4], strides = [1, 1, 1]} : vector<18x18x4xbf16> to vector<16x16x4xbf16>
    %99 = vector.shape_cast %98 : vector<16x16x4xbf16> to vector<256x4xbf16>
    %c1_103 = arith.constant 1 : index
    %c1_104 = arith.constant 1 : index
    %c0_105 = arith.constant 0 : index
    %c1_106 = arith.constant 1 : index
    %c0_107 = arith.constant 0 : index
    %c0_108 = arith.constant 0 : index
    %100 = vector.load %arg2[%c1_103, %c1_104, %c0_105, %c1_106, %c0_107, %c0_108] : memref<2x2x2x2x4x128xbf16, #tpu.memory_space<vmem>>, vector<1x1x1x1x4x128xbf16>
    %101 = vector.shape_cast %100 : vector<1x1x1x1x4x128xbf16> to vector<4x128xbf16>
    %cst_109 = arith.constant dense<0.000000e+00> : vector<256x128xf32>
    %102 = tpu.matmul %99, %101, %cst_109 {dimension_numbers = #tpu.dot_dimension_numbers<[1], [0], [0], [1], [0, 0, 1, 1], [], []>} : vector<256x4xbf16>, vector<4x128xbf16>, vector<256x128xf32> -> vector<256x128xf32>
    %103 = arith.addf %97, %102 : vector<256x128xf32>
    %104 = vector.extract_strided_slice %1 {offsets = [2, 1, 0], sizes = [16, 16, 4], strides = [1, 1, 1]} : vector<18x18x4xbf16> to vector<16x16x4xbf16>
    %105 = vector.shape_cast %104 : vector<16x16x4xbf16> to vector<256x4xbf16>
    %c1_110 = arith.constant 1 : index
    %c1_111 = arith.constant 1 : index
    %c1_112 = arith.constant 1 : index
    %c0_113 = arith.constant 0 : index
    %c0_114 = arith.constant 0 : index
    %c0_115 = arith.constant 0 : index
    %106 = vector.load %arg2[%c1_110, %c1_111, %c1_112, %c0_113, %c0_114, %c0_115] : memref<2x2x2x2x4x128xbf16, #tpu.memory_space<vmem>>, vector<1x1x1x1x4x128xbf16>
    %107 = vector.shape_cast %106 : vector<1x1x1x1x4x128xbf16> to vector<4x128xbf16>
    %cst_116 = arith.constant dense<0.000000e+00> : vector<256x128xf32>
    %108 = tpu.matmul %105, %107, %cst_116 {dimension_numbers = #tpu.dot_dimension_numbers<[1], [0], [0], [1], [0, 0, 1, 1], [], []>} : vector<256x4xbf16>, vector<4x128xbf16>, vector<256x128xf32> -> vector<256x128xf32>
    %109 = arith.addf %103, %108 : vector<256x128xf32>
    %110 = vector.extract_strided_slice %1 {offsets = [2, 2, 0], sizes = [16, 16, 4], strides = [1, 1, 1]} : vector<18x18x4xbf16> to vector<16x16x4xbf16>
    %111 = vector.shape_cast %110 : vector<16x16x4xbf16> to vector<256x4xbf16>
    %c1_117 = arith.constant 1 : index
    %c1_118 = arith.constant 1 : index
    %c1_119 = arith.constant 1 : index
    %c1_120 = arith.constant 1 : index
    %c0_121 = arith.constant 0 : index
    %c0_122 = arith.constant 0 : index
    %112 = vector.load %arg2[%c1_117, %c1_118, %c1_119, %c1_120, %c0_121, %c0_122] : memref<2x2x2x2x4x128xbf16, #tpu.memory_space<vmem>>, vector<1x1x1x1x4x128xbf16>
    %113 = vector.shape_cast %112 : vector<1x1x1x1x4x128xbf16> to vector<4x128xbf16>
    %cst_123 = arith.constant dense<0.000000e+00> : vector<256x128xf32>
    %114 = tpu.matmul %111, %113, %cst_123 {dimension_numbers = #tpu.dot_dimension_numbers<[1], [0], [0], [1], [0, 0, 1, 1], [], []>} : vector<256x4xbf16>, vector<4x128xbf16>, vector<256x128xf32> -> vector<256x128xf32>
    %115 = arith.addf %109, %114 : vector<256x128xf32>
    %116 = vector.broadcast %2 : vector<1x128xf32> to vector<256x128xf32>
    %117 = arith.addf %115, %116 : vector<256x128xf32>
    %118 = vector.shape_cast %117 : vector<256x128xf32> to vector<16x16x128xf32>
    %119 = tpu.concatenate %90, %118 in 2 : vector<16x16x128xf32>, vector<16x16x128xf32> -> vector<16x16x256xf32>
    %c0_124 = arith.constant 0 : index
    %c0_125 = arith.constant 0 : index
    %c1_126 = arith.constant 1 : index
    %c0_127 = arith.constant 0 : index
    %c0_128 = arith.constant 0 : index
    %120 = vector.load %arg4[%c0_124, %c0_125, %c1_126, %c0_127, %c0_128] : memref<1x16x2x16x256xf32, #tpu.memory_space<vmem>>, vector<1x16x1x16x256xf32>
    %121 = vector.shape_cast %120 : vector<1x16x1x16x256xf32> to vector<16x16x256xf32>
    %122 = vector.shape_cast %119 : vector<16x16x256xf32> to vector<1x16x1x16x256xf32>
    tpu.vector_store %arg4[%c0_124, %c0_125, %c1_126, %c0_127, %c0_128], %122 {strides = array<i32>} : memref<1x16x2x16x256xf32, #tpu.memory_space<vmem>>, vector<1x16x1x16x256xf32>,
    return
  }
  func.func @transform_0(%arg0: i32) -> (i32, i32, i32, i32) {
    %c0_i32 = arith.constant 0 : i32
    %c0_i32_0 = arith.constant 0 : i32
    %c0_i32_1 = arith.constant 0 : i32
    %c0_i32_2 = arith.constant 0 : i32
    return %arg0, %c0_i32, %c0_i32_0, %c0_i32_1 : i32, i32, i32, i32
  }
  func.func @transform_1(%arg0: i32) -> (i32, i32, i32, i32, i32, i32) {
    %c0_i32 = arith.constant 0 : i32
    %c0_i32_0 = arith.constant 0 : i32
    %c0_i32_1 = arith.constant 0 : i32
    %c0_i32_2 = arith.constant 0 : i32
    %c0_i32_3 = arith.constant 0 : i32
    %c0_i32_4 = arith.constant 0 : i32
    %c0_i32_5 = arith.constant 0 : i32
    return %c0_i32, %c0_i32_0, %c0_i32_1, %c0_i32_2, %c0_i32_3, %c0_i32_4 : i32, i32, i32, i32, i32, i32
  }
  func.func @transform_2(%arg0: i32) -> (i32, i32) {
    %c0_i32 = arith.constant 0 : i32
    %c0_i32_0 = arith.constant 0 : i32
    %c0_i32_1 = arith.constant 0 : i32
    return %c0_i32, %c0_i32_0 : i32, i32
  }
  func.func @transform_3(%arg0: i32) -> (i32, i32, i32, i32, i32) {
    %c0_i32 = arith.constant 0 : i32
    %c0_i32_0 = arith.constant 0 : i32
    %c0_i32_1 = arith.constant 0 : i32
    %c0_i32_2 = arith.constant 0 : i32
    %c0_i32_3 = arith.constant 0 : i32
    return %arg0, %c0_i32, %c0_i32_0, %c0_i32_1, %c0_i32_2 : i32, i32, i32, i32, i32
  }
}

</mosaic_0001>

<llo_original>
// kernel: upsample_forward.1
$region0: #{upsample_forward.1}
  #allocation0 [shape = 'u32[]', space=smem, size = 0x4, offset = 0x4, fixed_abs, tag = 'smem constant byte address 0x4 - core index']
  #allocation1 [shape = 'u32[72,128]{1,0:T(1,128)}', space=vmem, size = 0x9000, scoped, tag = 'internal scratch']
  %s0 = inlined_call_operand.vmem [shape: bf16[2,18,18,4], index: 0, kind: input, shape index: {}]
  %s1 = inlined_call_operand.vmem [shape: bf16[2,2,2,2,4,128], index: 1, kind: input, shape index: {}]
  %s2 = inlined_call_operand.vmem [shape: f32[1,128], index: 2, kind: input, shape index: {}]
  %s3 = inlined_call_operand.vmem [shape: f32[2,16,2,16,256], index: 3, kind: output, shape index: {}]
  %s4 = sld [smem:[#allocation0]]
  $region45: #{upsample_forward.1} parent=0
    _
  %s6 = ssub.s32 1, %s4
  %s7 = scalar_select 0, %s6, %s4
  loop: start=0, step=1, limit=4
  $region2: #{upsample_forward.1} parent=0 // loop_pre_header
    _
  $region3: #{upsample_forward.1} parent=0 // loop_header
    %s9 = sphi 0, %s13
    %p10 = scmp.ge.s32.totalorder %s9, 4
    %s19 = sphi 0, %s21
    %s22 = sphi 0, %s19
    %s23 = sphi 0, %s22
    %s39 = sphi 0, %s23
    %s43 = sphi 0, %s43
    %s45 = sphi 0, %s43
    %s46 = sphi 0, %s45
    %s60 = sphi 0, %s46
    %s64 = sphi 0, %s64
    %s66 = sphi 0, %s64
    %s67 = sphi 0, %s66
    %s81 = sphi 0, %s67
    %s87 = sphi 0, %s89
    %s90 = sphi 0, %s87
    %s91 = sphi 0, %s90
    %s107 = sphi 0, %s91
  $region4: #{upsample_forward.1} parent=0 // loop_header_branch
    %12 = sbr.rel (%p10) target = $region8
  $region5: #{upsample_forward.1} parent=0 // loop_body
    %s14 = ssub.s32 %s9, 1
    %s15 = ssub.s32 %s9, 2
    %s16 = sadd.s32 %s9, 1
    %s17 = ssub.s32 %s9, %s16
    %p18 = scmp.eq.s32.totalorder %s17, 0
    %s20 = sadd.s32 %s19, 1
    %s21 = scalar_select %p18, %s19, %s20
    %p24 = pneg %p18
    %p25 = scmp.eq.s32.totalorder %s9, 1
    %p26 = por %p24, %p25
    %p27 = scmp.ne.s32.totalorder %s19, %s22
    %p28 = scmp.eq.s32.totalorder %s9, 0
    %p29 = por %p27, %p28
    %p30 = scmp.ne.s32.totalorder %s19, %s22
    %p31 = scmp.eq.s32.totalorder %s14, 1
    %p32 = por %p30, %p31
    %p33 = scmp.ne.s32.totalorder %s22, %s23
    %p34 = scmp.eq.s32.totalorder %s14, 0
    %p35 = por %p33, %p34
    %p36 = scmp.ne.s32.totalorder %s22, %s23
    %p37 = scmp.eq.s32.totalorder %s15, 1
    %p38 = por %p36, %p37
    %p40 = scmp.ne.s32.totalorder %s23, %s39
    %p41 = scmp.eq.s32.totalorder %s15, 0
    %p42 = por %p40, %p41
    %s44 = sadd.s32 %s43, 1
    %p47 = scmp.eq.s32.totalorder %s9, 1
    %p48 = scmp.ne.s32.totalorder %s43, %s45
    %p49 = scmp.eq.s32.totalorder %s9, 0
    %p50 = por %p48, %p49
    %p51 = scmp.ne.s32.totalorder %s43, %s45
    %p52 = scmp.eq.s32.totalorder %s14, 1
    %p53 = por %p51, %p52
    %p54 = scmp.ne.s32.totalorder %s45, %s46
    %p55 = scmp.eq.s32.totalorder %s14, 0
    %p56 = por %p54, %p55
    %p57 = scmp.ne.s32.totalorder %s45, %s46
    %p58 = scmp.eq.s32.totalorder %s15, 1
    %p59 = por %p57, %p58
    %p61 = scmp.ne.s32.totalorder %s46, %s60
    %p62 = scmp.eq.s32.totalorder %s15, 0
    %p63 = por %p61, %p62
    %s65 = sadd.s32 %s64, 1
    %p68 = scmp.eq.s32.totalorder %s9, 1
    %p69 = scmp.ne.s32.totalorder %s64, %s66
    %p70 = scmp.eq.s32.totalorder %s9, 0
    %p71 = por %p69, %p70
    %p72 = scmp.ne.s32.totalorder %s64, %s66
    %p73 = scmp.eq.s32.totalorder %s14, 1
    %p74 = por %p72, %p73
    %p75 = scmp.ne.s32.totalorder %s66, %s67
    %p76 = scmp.eq.s32.totalorder %s14, 0
    %p77 = por %p75, %p76
    %p78 = scmp.ne.s32.totalorder %s66, %s67
    %p79 = scmp.eq.s32.totalorder %s15, 1
    %p80 = por %p78, %p79
    %p82 = scmp.ne.s32.totalorder %s67, %s81
    %p83 = scmp.eq.s32.totalorder %s15, 0
    %p84 = por %p82, %p83
    %s85 = ssub.s32 %s9, %s16
    %p86 = scmp.eq.s32.totalorder %s85, 0
    %s88 = sadd.s32 %s87, 1
    %s89 = scalar_select %p86, %s87, %s88
    %p92 = pneg %p86
    %p93 = scmp.eq.s32.totalorder %s9, 1
    %p94 = por %p92, %p93
    %p95 = scmp.ne.s32.totalorder %s87, %s90
    %p96 = scmp.eq.s32.totalorder %s9, 0
    %p97 = por %p95, %p96
    %p98 = scmp.ne.s32.totalorder %s87, %s90
    %p99 = scmp.eq.s32.totalorder %s14, 1
    %p100 = por %p98, %p99
    %p101 = scmp.ne.s32.totalorder %s90, %s91
    %p102 = scmp.eq.s32.totalorder %s14, 0
    %p103 = por %p101, %p102
    %p104 = scmp.ne.s32.totalorder %s90, %s91
    %p105 = scmp.eq.s32.totalorder %s15, 1
    %p106 = por %p104, %p105
    %p108 = scmp.ne.s32.totalorder %s91, %s107
    %p109 = scmp.eq.s32.totalorder %s15, 0
    %p110 = por %p108, %p109
    %p111 = scmp.le.s32.totalorder 1, %s9
    %p112 = scmp.lt.s32.totalorder %s9, 3
    %p113 = pnand %p111, %p112
    %p114 = pneg %p113
    // Predicated region
    $region9: #{upsample_forward.1} parent=5 // pred_check
      _
    $region10: #{upsample_forward.1} parent=5 // pred_check_branch
      %116 = sbr.rel (%p113) target = $region12
    $region11: #{upsample_forward.1} parent=5 // pred_region
      %s117 = ssub.s32 %s9, 1
      // Predicated region
      $region13: #{upsample_forward.1} parent=11 // pred_check
        %p118 = pneg %p56
      $region14: #{upsample_forward.1} parent=11 // pred_check_branch
        %120 = sbr.rel (%p118) target = $region16
      $region15: #{upsample_forward.1} parent=11 // pred_region
        _
      $region16: #{upsample_forward.1} parent=11 // pred_fallthru
        _
      // Predicated region
      $region17: #{upsample_forward.1} parent=11 // pred_check
        %p121 = pneg %p77
      $region18: #{upsample_forward.1} parent=11 // pred_check_branch
        %123 = sbr.rel (%p121) target = $region20
      $region19: #{upsample_forward.1} parent=11 // pred_region
        _
      $region20: #{upsample_forward.1} parent=11 // pred_fallthru
        _
    $region12: #{upsample_forward.1} parent=5 // pred_fallthru
      _
    %p124 = scmp.lt.s32.totalorder %s9, 2
    // Predicated region
    $region21: #{upsample_forward.1} parent=5 // pred_check
      %p125 = pneg %p124
    $region22: #{upsample_forward.1} parent=5 // pred_check_branch
      %127 = sbr.rel (%p125) target = $region24
    $region23: #{upsample_forward.1} parent=5 // pred_region
      // Predicated region
      $region25: #{upsample_forward.1} parent=23 // pred_check
        %p128 = pneg %p29
      $region26: #{upsample_forward.1} parent=23 // pred_check_branch
        %130 = sbr.rel (%p128) target = $region28
      $region27: #{upsample_forward.1} parent=23 // pred_region
        %p131 = scmp.lt.s32.totalorder %s9, 1
        %s132 = scalar_select %p131, %s9, 1
        %s133 = smul.addr %s132, 54
        %s134 = smul.addr %s133, 4
        %s135 = scalar_lea.vmem %s0, %s134
      $region28: #{upsample_forward.1} parent=23 // pred_fallthru
        _
    $region24: #{upsample_forward.1} parent=5 // pred_fallthru
      _
    %p136 = scmp.le.s32.totalorder 1, %s9
    %p137 = scmp.lt.s32.totalorder %s9, 3
    %p138 = pnand %p136, %p137
    %p139 = pneg %p138
    // Predicated region
    $region29: #{upsample_forward.1} parent=5 // pred_check
      _
    $region30: #{upsample_forward.1} parent=5 // pred_check_branch
      %141 = sbr.rel (%p138) target = $region32
    $region31: #{upsample_forward.1} parent=5 // pred_region
      %s142 = ssub.s32 %s9, 1
      %p143 = scmp.lt.s32.totalorder %s14, 1
      %s144 = scalar_select %p143, %s14, 1
      %s145 = smul.addr %s144, 54
      %s146 = smul.addr %s145, 4
      %s147 = scalar_lea.vmem %s0, %s146
      %p148 = pneg %p35
      %p149 = pneg %p32
      %p150 = pneg %p56
      %p151 = pneg %p53
      %p152 = pneg %p77
      %p153 = pneg %p74
      %p154 = pneg %p103
      %p155 = pneg %p100
      %p156 = scmp.lt.s32.totalorder %s14, 1
      %s157 = scalar_select %p156, %s14, 1
      %s158 = smul.addr %s157, 128
      %s159 = smul.addr %s158, 8
      %s160 = scalar_lea.vmem %s3, %s159
      %p161 = scmp.lt.s32.totalorder %s14, 1
      %s162 = scalar_select %p161, %s14, 1
      %s163 = smul.addr %s162, 54
      %s164 = smul.addr %s163, 4
      %s165 = scalar_lea.vmem %s0, %s164
      %p166 = scmp.lt.s32.totalorder %s14, 1
      %s167 = scalar_select %p166, %s14, 1
      %s168 = smul.addr %s167, 128
      %s169 = smul.addr %s168, 8
      %s170 = scalar_lea.vmem %s3, %s169
      %v172 = vld [vmem:[%s165] sm:$0xf]
      %v173 = vld [vmem:[%s165 + $0x4] sm:$0xf]
      %v174 = vld [vmem:[%s165 + $0x8] sm:$0x1]
      %v175 = vld [vmem:[%s165 + $0xc] sm:$0xf]
      %v176 = vld [vmem:[%s165 + $0x10] sm:$0xf]
      %v177 = vld [vmem:[%s165 + $0x14] sm:$0x1]
      %v178 = vld [vmem:[%s165 + $0x18] sm:$0xf]
      %v179 = vld [vmem:[%s165 + $0x1c] sm:$0xf]
      %v180 = vld [vmem:[%s165 + $0x20] sm:$0x1]
      %v181 = vld [vmem:[%s165 + $0x24] sm:$0xf]
      %v182 = vld [vmem:[%s165 + $0x28] sm:$0xf]
      %v183 = vld [vmem:[%s165 + $0x2c] sm:$0x1]
      %v184 = vld [vmem:[%s165 + $0x30] sm:$0xf]
      %v185 = vld [vmem:[%s165 + $0x34] sm:$0xf]
      %v186 = vld [vmem:[%s165 + $0x38] sm:$0x1]
      %v187 = vld [vmem:[%s165 + $0x3c] sm:$0xf]
      %v188 = vld [vmem:[%s165 + $0x40] sm:$0xf]
      %v189 = vld [vmem:[%s165 + $0x44] sm:$0x1]
      %v190 = vld [vmem:[%s165 + $0x48] sm:$0xf]
      %v191 = vld [vmem:[%s165 + $0x4c] sm:$0xf]
      %v192 = vld [vmem:[%s165 + $0x50] sm:$0x1]
      %v193 = vld [vmem:[%s165 + $0x54] sm:$0xf]
      %v194 = vld [vmem:[%s165 + $0x58] sm:$0xf]
      %v195 = vld [vmem:[%s165 + $0x5c] sm:$0x1]
      %v196 = vld [vmem:[%s165 + $0x60] sm:$0xf]
      %v197 = vld [vmem:[%s165 + $0x64] sm:$0xf]
      %v198 = vld [vmem:[%s165 + $0x68] sm:$0x1]
      %v199 = vld [vmem:[%s165 + $0x6c] sm:$0xf]
      %v200 = vld [vmem:[%s165 + $0x70] sm:$0xf]
      %v201 = vld [vmem:[%s165 + $0x74] sm:$0x1]
      %v202 = vld [vmem:[%s165 + $0x78] sm:$0xf]
      %v203 = vld [vmem:[%s165 + $0x7c] sm:$0xf]
      %v204 = vld [vmem:[%s165 + $0x80] sm:$0x1]
      %v205 = vld [vmem:[%s165 + $0x84] sm:$0xf]
      %v206 = vld [vmem:[%s165 + $0x88] sm:$0xf]
      %v207 = vld [vmem:[%s165 + $0x8c] sm:$0x1]
      %v208 = vld [vmem:[%s165 + $0x90] sm:$0xf]
      %v209 = vld [vmem:[%s165 + $0x94] sm:$0xf]
      %v210 = vld [vmem:[%s165 + $0x98] sm:$0x1]
      %v211 = vld [vmem:[%s165 + $0x9c] sm:$0xf]
      %v212 = vld [vmem:[%s165 + $0xa0] sm:$0xf]
      %v213 = vld [vmem:[%s165 + $0xa4] sm:$0x1]
      %v214 = vld [vmem:[%s165 + $0xa8] sm:$0xf]
      %v215 = vld [vmem:[%s165 + $0xac] sm:$0xf]
      %v216 = vld [vmem:[%s165 + $0xb0] sm:$0x1]
      %v217 = vld [vmem:[%s165 + $0xb4] sm:$0xf]
      %v218 = vld [vmem:[%s165 + $0xb8] sm:$0xf]
      %v219 = vld [vmem:[%s165 + $0xbc] sm:$0x1]
      %v220 = vld [vmem:[%s165 + $0xc0] sm:$0xf]
      %v221 = vld [vmem:[%s165 + $0xc4] sm:$0xf]
      %v222 = vld [vmem:[%s165 + $0xc8] sm:$0x1]
      %v223 = vld [vmem:[%s165 + $0xcc] sm:$0xf]
      %v224 = vld [vmem:[%s165 + $0xd0] sm:$0xf]
      %v225 = vld [vmem:[%s165 + $0xd4] sm:$0x1]
      %v226 = vld [vmem:[%s2] sm:$0x1]
      %v227 = vld [vmem:[%s1] sm:$0x3]
      %vm228 = vsmask.f32 3328
      %vm229 = vsmask.f32 7440
      %vm230 = vmor %vm228, %vm229
      %v232 = vshrl.u32 %v172, 16
      %v234 = vrot.slane %v232, 4
      %v235 = vshll.u32 %v172, 16
      %v237 = vrot.slane %v235, 5
      %v238 = vor.u32 %v234, %v237
      %v239 = vrot.slane %v238, 4
      %v241 = vshll.u32 %v173, 16
      %v243 = vrot.slane %v241, 5
      %v244 = vsel %vm230, %v239, %v243
      %v245 = vshrl.u32 %v173, 16
      %v247 = vrot.slane %v245, 4
      %v248 = vor.u32 %v247, %v243
      %v249 = vrot.slane %v248, 4
      %v251 = vshll.u32 %v174, 16
      %v253 = vrot.slane %v251, 5
      %v254 = vsel %vm230, %v249, %v253
      %v256 = vshrl.u32 %v175, 16
      %v258 = vrot.slane %v256, 4
      %v259 = vshll.u32 %v175, 16
      %v261 = vrot.slane %v259, 5
      %v262 = vor.u32 %v258, %v261
      %v263 = vrot.slane %v262, 4
      %v265 = vshll.u32 %v176, 16
      %v267 = vrot.slane %v265, 5
      %v268 = vsel %vm230, %v263, %v267
      %v269 = vshrl.u32 %v176, 16
      %v271 = vrot.slane %v269, 4
      %v272 = vor.u32 %v271, %v267
      %v273 = vrot.slane %v272, 4
      %v275 = vshll.u32 %v177, 16
      %v277 = vrot.slane %v275, 5
      %v278 = vsel %vm230, %v273, %v277
      %v280 = vshrl.u32 %v178, 16
      %v282 = vrot.slane %v280, 4
      %v283 = vshll.u32 %v178, 16
      %v285 = vrot.slane %v283, 5
      %v286 = vor.u32 %v282, %v285
      %v287 = vrot.slane %v286, 4
      %v289 = vshll.u32 %v179, 16
      %v291 = vrot.slane %v289, 5
      %v292 = vsel %vm230, %v287, %v291
      %v293 = vshrl.u32 %v179, 16
      %v295 = vrot.slane %v293, 4
      %v296 = vor.u32 %v295, %v291
      %v297 = vrot.slane %v296, 4
      %v299 = vshll.u32 %v180, 16
      %v301 = vrot.slane %v299, 5
      %v302 = vsel %vm230, %v297, %v301
      %v304 = vshrl.u32 %v181, 16
      %v306 = vrot.slane %v304, 4
      %v307 = vshll.u32 %v181, 16
      %v309 = vrot.slane %v307, 5
      %v310 = vor.u32 %v306, %v309
      %v311 = vrot.slane %v310, 4
      %v313 = vshll.u32 %v182, 16
      %v315 = vrot.slane %v313, 5
      %v316 = vsel %vm230, %v311, %v315
      %v317 = vshrl.u32 %v182, 16
      %v319 = vrot.slane %v317, 4
      %v320 = vor.u32 %v319, %v315
      %v321 = vrot.slane %v320, 4
      %v323 = vshll.u32 %v183, 16
      %v325 = vrot.slane %v323, 5
      %v326 = vsel %vm230, %v321, %v325
      %v328 = vshrl.u32 %v184, 16
      %v330 = vrot.slane %v328, 4
      %v331 = vshll.u32 %v184, 16
      %v333 = vrot.slane %v331, 5
      %v334 = vor.u32 %v330, %v333
      %v335 = vrot.slane %v334, 4
      %v337 = vshll.u32 %v185, 16
      %v339 = vrot.slane %v337, 5
      %v340 = vsel %vm230, %v335, %v339
      %v341 = vshrl.u32 %v185, 16
      %v343 = vrot.slane %v341, 4
      %v344 = vor.u32 %v343, %v339
      %v345 = vrot.slane %v344, 4
      %v347 = vshll.u32 %v186, 16
      %v349 = vrot.slane %v347, 5
      %v350 = vsel %vm230, %v345, %v349
      %v352 = vshrl.u32 %v187, 16
      %v354 = vrot.slane %v352, 4
      %v355 = vshll.u32 %v187, 16
      %v357 = vrot.slane %v355, 5
      %v358 = vor.u32 %v354, %v357
      %v359 = vrot.slane %v358, 4
      %v361 = vshll.u32 %v188, 16
      %v363 = vrot.slane %v361, 5
      %v364 = vsel %vm230, %v359, %v363
      %v365 = vshrl.u32 %v188, 16
      %v367 = vrot.slane %v365, 4
      %v368 = vor.u32 %v367, %v363
      %v369 = vrot.slane %v368, 4
      %v371 = vshll.u32 %v189, 16
      %v373 = vrot.slane %v371, 5
      %v374 = vsel %vm230, %v369, %v373
      %v376 = vshrl.u32 %v190, 16
      %v378 = vrot.slane %v376, 4
      %v379 = vshll.u32 %v190, 16
      %v381 = vrot.slane %v379, 5
      %v382 = vor.u32 %v378, %v381
      %v383 = vrot.slane %v382, 4
      %v385 = vshll.u32 %v191, 16
      %v387 = vrot.slane %v385, 5
      %v388 = vsel %vm230, %v383, %v387
      %v389 = vshrl.u32 %v191, 16
      %v391 = vrot.slane %v389, 4
      %v392 = vor.u32 %v391, %v387
      %v393 = vrot.slane %v392, 4
      %v395 = vshll.u32 %v192, 16
      %v397 = vrot.slane %v395, 5
      %v398 = vsel %vm230, %v393, %v397
      %v400 = vshrl.u32 %v193, 16
      %v402 = vrot.slane %v400, 4
      %v403 = vshll.u32 %v193, 16
      %v405 = vrot.slane %v403, 5
      %v406 = vor.u32 %v402, %v405
      %v407 = vrot.slane %v406, 4
      %v409 = vshll.u32 %v194, 16
      %v411 = vrot.slane %v409, 5
      %v412 = vsel %vm230, %v407, %v411
      %v413 = vshrl.u32 %v194, 16
      %v415 = vrot.slane %v413, 4
      %v416 = vor.u32 %v415, %v411
      %v417 = vrot.slane %v416, 4
      %v419 = vshll.u32 %v195, 16
      %v421 = vrot.slane %v419, 5
      %v422 = vsel %vm230, %v417, %v421
      %v424 = vshrl.u32 %v196, 16
      %v426 = vrot.slane %v424, 4
      %v427 = vshll.u32 %v196, 16
      %v429 = vrot.slane %v427, 5
      %v430 = vor.u32 %v426, %v429
      %v431 = vrot.slane %v430, 4
      %v433 = vshll.u32 %v197, 16
      %v435 = vrot.slane %v433, 5
      %v436 = vsel %vm230, %v431, %v435
      %v437 = vshrl.u32 %v197, 16
      %v439 = vrot.slane %v437, 4
      %v440 = vor.u32 %v439, %v435
      %v441 = vrot.slane %v440, 4
      %v443 = vshll.u32 %v198, 16
      %v445 = vrot.slane %v443, 5
      %v446 = vsel %vm230, %v441, %v445
      %v448 = vshrl.u32 %v199, 16
      %v450 = vrot.slane %v448, 4
      %v451 = vshll.u32 %v199, 16
      %v453 = vrot.slane %v451, 5
      %v454 = vor.u32 %v450, %v453
      %v455 = vrot.slane %v454, 4
      %v457 = vshll.u32 %v200, 16
      %v459 = vrot.slane %v457, 5
      %v460 = vsel %vm230, %v455, %v459
      %v461 = vshrl.u32 %v200, 16
      %v463 = vrot.slane %v461, 4
      %v464 = vor.u32 %v463, %v459
      %v465 = vrot.slane %v464, 4
      %v467 = vshll.u32 %v201, 16
      %v469 = vrot.slane %v467, 5
      %v470 = vsel %vm230, %v465, %v469
      %v472 = vshrl.u32 %v202, 16
      %v474 = vrot.slane %v472, 4
      %v475 = vshll.u32 %v202, 16
      %v477 = vrot.slane %v475, 5
      %v478 = vor.u32 %v474, %v477
      %v479 = vrot.slane %v478, 4
      %v481 = vshll.u32 %v203, 16
      %v483 = vrot.slane %v481, 5
      %v484 = vsel %vm230, %v479, %v483
      %v485 = vshrl.u32 %v203, 16
      %v487 = vrot.slane %v485, 4
      %v488 = vor.u32 %v487, %v483
      %v489 = vrot.slane %v488, 4
      %v491 = vshll.u32 %v204, 16
      %v493 = vrot.slane %v491, 5
      %v494 = vsel %vm230, %v489, %v493
      %v496 = vshrl.u32 %v205, 16
      %v498 = vrot.slane %v496, 4
      %v499 = vshll.u32 %v205, 16
      %v501 = vrot.slane %v499, 5
      %v502 = vor.u32 %v498, %v501
      %v503 = vrot.slane %v502, 4
      %v505 = vshll.u32 %v206, 16
      %v507 = vrot.slane %v505, 5
      %v508 = vsel %vm230, %v503, %v507
      %v509 = vshrl.u32 %v206, 16
      %v511 = vrot.slane %v509, 4
      %v512 = vor.u32 %v511, %v507
      %v513 = vrot.slane %v512, 4
      %v515 = vshll.u32 %v207, 16
      %v517 = vrot.slane %v515, 5
      %v518 = vsel %vm230, %v513, %v517
      %v520 = vshrl.u32 %v208, 16
      %v522 = vrot.slane %v520, 4
      %v523 = vshll.u32 %v208, 16
      %v525 = vrot.slane %v523, 5
      %v526 = vor.u32 %v522, %v525
      %v527 = vrot.slane %v526, 4
      %v529 = vshll.u32 %v209, 16
      %v531 = vrot.slane %v529, 5
      %v532 = vsel %vm230, %v527, %v531
      %v533 = vshrl.u32 %v209, 16
      %v535 = vrot.slane %v533, 4
      %v536 = vor.u32 %v535, %v531
      %v537 = vrot.slane %v536, 4
      %v539 = vshll.u32 %v210, 16
      %v541 = vrot.slane %v539, 5
      %v542 = vsel %vm230, %v537, %v541
      %v544 = vshrl.u32 %v211, 16
      %v546 = vrot.slane %v544, 4
      %v547 = vshll.u32 %v211, 16
      %v549 = vrot.slane %v547, 5
      %v550 = vor.u32 %v546, %v549
      %v551 = vrot.slane %v550, 4
      %v553 = vshll.u32 %v212, 16
      %v555 = vrot.slane %v553, 5
      %v556 = vsel %vm230, %v551, %v555
      %v557 = vshrl.u32 %v212, 16
      %v559 = vrot.slane %v557, 4
      %v560 = vor.u32 %v559, %v555
      %v561 = vrot.slane %v560, 4
      %v563 = vshll.u32 %v213, 16
      %v565 = vrot.slane %v563, 5
      %v566 = vsel %vm230, %v561, %v565
      %v568 = vshrl.u32 %v214, 16
      %v570 = vrot.slane %v568, 4
      %v571 = vshll.u32 %v214, 16
      %v573 = vrot.slane %v571, 5
      %v574 = vor.u32 %v570, %v573
      %v575 = vrot.slane %v574, 4
      %v577 = vshll.u32 %v215, 16
      %v579 = vrot.slane %v577, 5
      %v580 = vsel %vm230, %v575, %v579
      %v581 = vshrl.u32 %v215, 16
      %v583 = vrot.slane %v581, 4
      %v584 = vor.u32 %v583, %v579
      %v585 = vrot.slane %v584, 4
      %v587 = vshll.u32 %v216, 16
      %v589 = vrot.slane %v587, 5
      %v590 = vsel %vm230, %v585, %v589
      %v592 = vshrl.u32 %v217, 16
      %v594 = vrot.slane %v592, 4
      %v595 = vshll.u32 %v217, 16
      %v597 = vrot.slane %v595, 5
      %v598 = vor.u32 %v594, %v597
      %v599 = vrot.slane %v598, 4
      %v601 = vshll.u32 %v218, 16
      %v603 = vrot.slane %v601, 5
      %v604 = vsel %vm230, %v599, %v603
      %v605 = vshrl.u32 %v218, 16
      %v607 = vrot.slane %v605, 4
      %v608 = vor.u32 %v607, %v603
      %v609 = vrot.slane %v608, 4
      %v611 = vshll.u32 %v219, 16
      %v613 = vrot.slane %v611, 5
      %v614 = vsel %vm230, %v609, %v613
      %s615 = scalar_lea.vmem %s1, 2
      %v616 = vld [vmem:[%s615] sm:$0x3]
      %v617 = vunpack.c.l.b16 %v244
      %v618 = vunpack.c.l.b16 %v254
      %v619 = vunpack.c.l.b16 %v268
      %v620 = vunpack.c.l.b16 %v278
      %v621 = vunpack.c.l.b16 %v292
      %v622 = vunpack.c.l.b16 %v302
      %v623 = vunpack.c.l.b16 %v316
      %v624 = vunpack.c.l.b16 %v326
      %v625 = vunpack.c.l.b16 %v340
      %v626 = vunpack.c.l.b16 %v350
      %v627 = vunpack.c.l.b16 %v364
      %v628 = vunpack.c.l.b16 %v374
      %v629 = vunpack.c.l.b16 %v388
      %v630 = vunpack.c.l.b16 %v398
      %v631 = vunpack.c.l.b16 %v412
      %v632 = vunpack.c.l.b16 %v422
      %v633 = vunpack.c.l.b16 %v436
      %v634 = vunpack.c.l.b16 %v446
      %v635 = vunpack.c.l.b16 %v460
      %v636 = vunpack.c.l.b16 %v470
      %v637 = vunpack.c.l.b16 %v484
      %v638 = vunpack.c.l.b16 %v494
      %v639 = vunpack.c.l.b16 %v508
      %v640 = vunpack.c.l.b16 %v518
      %v641 = vunpack.c.l.b16 %v532
      %v642 = vunpack.c.l.b16 %v542
      %v643 = vunpack.c.l.b16 %v556
      %v644 = vunpack.c.l.b16 %v566
      %v645 = vunpack.c.l.b16 %v580
      %v646 = vunpack.c.l.b16 %v590
      %v647 = vunpack.c.l.b16 %v604
      %v648 = vunpack.c.l.b16 %v614
      %v649 = vpack.c.b16 %v618, %v617
      %v650 = vpack.c.b16 %v620, %v619
      %v651 = vpack.c.b16 %v622, %v621
      %v652 = vpack.c.b16 %v624, %v623
      %v653 = vpack.c.b16 %v626, %v625
      %v654 = vpack.c.b16 %v628, %v627
      %v655 = vpack.c.b16 %v630, %v629
      %v656 = vpack.c.b16 %v632, %v631
      %v657 = vpack.c.b16 %v634, %v633
      %v658 = vpack.c.b16 %v636, %v635
      %v659 = vpack.c.b16 %v638, %v637
      %v660 = vpack.c.b16 %v640, %v639
      %v661 = vpack.c.b16 %v642, %v641
      %v662 = vpack.c.b16 %v644, %v643
      %v663 = vpack.c.b16 %v646, %v645
      %v664 = vpack.c.b16 %v648, %v647
      %vm665 = vcmask 31744
      %v667 = vsel %vm665, %v649, 0
      %v670 = vsel %vm665, %v650, 0
      %v673 = vsel %vm665, %v651, 0
      %v676 = vsel %vm665, %v652, 0
      %v679 = vsel %vm665, %v653, 0
      %v682 = vsel %vm665, %v654, 0
      %v685 = vsel %vm665, %v655, 0
      %v688 = vsel %vm665, %v656, 0
      %v691 = vsel %vm665, %v657, 0
      %v694 = vsel %vm665, %v658, 0
      %v697 = vsel %vm665, %v659, 0
      %v700 = vsel %vm665, %v660, 0
      %v703 = vsel %vm665, %v661, 0
      %v706 = vsel %vm665, %v662, 0
      %v709 = vsel %vm665, %v663, 0
      %v712 = vsel %vm665, %v664, 0
      %vm714 = vcmask 1041408
      %v716 = vsel %vm714, %v616, 0
      %718 = vmatpush.bf16.msra.mxu0 0
      %719 = vmatpush.bf16.msra.mxu0 0
      %720 = vmatpush.bf16.msra.mxu0 0
      %721 = vmatpush.bf16.msra.mxu0 0
      %722 = vmatpush.bf16.msra.mxu0 0
      %723 = vmatpush.bf16.msra.mxu0 0
      %724 = vmatpush.bf16.msra.mxu0 0
      %725 = vmatpush.bf16.msra.mxu0 %v716
      %726 = vmatmul.bf16.gmra.mxu0 %v667
      %v727 = vpop.f32.mrf.mxu0
      %v728 = vadd.f32 0.0, %v727
      %v729 = vpop.f32.mrf.mxu0
      %v730 = vadd.f32 0.0, %v729
      %731 = vmatmul.bf16.gmra.mxu0 %v670
      %v732 = vpop.f32.mrf.mxu0
      %v733 = vadd.f32 0.0, %v732
      %v734 = vpop.f32.mrf.mxu0
      %v735 = vadd.f32 0.0, %v734
      %736 = vmatmul.bf16.gmra.mxu0 %v673
      %v737 = vpop.f32.mrf.mxu0
      %v738 = vadd.f32 0.0, %v737
      %v739 = vpop.f32.mrf.mxu0
      %v740 = vadd.f32 0.0, %v739
      %741 = vmatmul.bf16.gmra.mxu0 %v676
      %v742 = vpop.f32.mrf.mxu0
      %v743 = vadd.f32 0.0, %v742
      %v744 = vpop.f32.mrf.mxu0
      %v745 = vadd.f32 0.0, %v744
      %746 = vmatmul.bf16.gmra.mxu0 %v679
      %v747 = vpop.f32.mrf.mxu0
      %v748 = vadd.f32 0.0, %v747
      %v749 = vpop.f32.mrf.mxu0
      %v750 = vadd.f32 0.0, %v749
      %751 = vmatmul.bf16.gmra.mxu0 %v682
      %v752 = vpop.f32.mrf.mxu0
      %v753 = vadd.f32 0.0, %v752
      %v754 = vpop.f32.mrf.mxu0
      %v755 = vadd.f32 0.0, %v754
      %756 = vmatmul.bf16.gmra.mxu0 %v685
      %v757 = vpop.f32.mrf.mxu0
      %v758 = vadd.f32 0.0, %v757
      %v759 = vpop.f32.mrf.mxu0
      %v760 = vadd.f32 0.0, %v759
      %761 = vmatmul.bf16.gmra.mxu0 %v688
      %v762 = vpop.f32.mrf.mxu0
      %v763 = vadd.f32 0.0, %v762
      %v764 = vpop.f32.mrf.mxu0
      %v765 = vadd.f32 0.0, %v764
      %766 = vmatmul.bf16.gmra.mxu0 %v691
      %v767 = vpop.f32.mrf.mxu0
      %v768 = vadd.f32 0.0, %v767
      %v769 = vpop.f32.mrf.mxu0
      %v770 = vadd.f32 0.0, %v769
      %771 = vmatmul.bf16.gmra.mxu0 %v694
      %v772 = vpop.f32.mrf.mxu0
      %v773 = vadd.f32 0.0, %v772
      %v774 = vpop.f32.mrf.mxu0
      %v775 = vadd.f32 0.0, %v774
      %776 = vmatmul.bf16.gmra.mxu0 %v697
      %v777 = vpop.f32.mrf.mxu0
      %v778 = vadd.f32 0.0, %v777
      %v779 = vpop.f32.mrf.mxu0
      %v780 = vadd.f32 0.0, %v779
      %781 = vmatmul.bf16.gmra.mxu0 %v700
      %v782 = vpop.f32.mrf.mxu0
      %v783 = vadd.f32 0.0, %v782
      %v784 = vpop.f32.mrf.mxu0
      %v785 = vadd.f32 0.0, %v784
      %786 = vmatmul.bf16.gmra.mxu0 %v703
      %v787 = vpop.f32.mrf.mxu0
      %v788 = vadd.f32 0.0, %v787
      %v789 = vpop.f32.mrf.mxu0
      %v790 = vadd.f32 0.0, %v789
      %791 = vmatmul.bf16.gmra.mxu0 %v706
      %v792 = vpop.f32.mrf.mxu0
      %v793 = vadd.f32 0.0, %v792
      %v794 = vpop.f32.mrf.mxu0
      %v795 = vadd.f32 0.0, %v794
      %796 = vmatmul.bf16.gmra.mxu0 %v709
      %v797 = vpop.f32.mrf.mxu0
      %v798 = vadd.f32 0.0, %v797
      %v799 = vpop.f32.mrf.mxu0
      %v800 = vadd.f32 0.0, %v799
      %801 = vmatmul.bf16.gmra.mxu0 %v712
      %v802 = vpop.f32.mrf.mxu0
      %v803 = vadd.f32 0.0, %v802
      %v804 = vpop.f32.mrf.mxu0
      %v805 = vadd.f32 0.0, %v804
      %806 = vdwg.mxu0
      %v839 = vunpack.c.l.b16 %v172
      %v840 = vunpack.c.l.b16 %v173
      %v841 = vunpack.c.l.b16 %v175
      %v842 = vunpack.c.l.b16 %v176
      %v843 = vunpack.c.l.b16 %v178
      %v844 = vunpack.c.l.b16 %v179
      %v845 = vunpack.c.l.b16 %v181
      %v846 = vunpack.c.l.b16 %v182
      %v847 = vunpack.c.l.b16 %v184
      %v848 = vunpack.c.l.b16 %v185
      %v849 = vunpack.c.l.b16 %v187
      %v850 = vunpack.c.l.b16 %v188
      %v851 = vunpack.c.l.b16 %v190
      %v852 = vunpack.c.l.b16 %v191
      %v853 = vunpack.c.l.b16 %v193
      %v854 = vunpack.c.l.b16 %v194
      %v855 = vunpack.c.l.b16 %v196
      %v856 = vunpack.c.l.b16 %v197
      %v857 = vunpack.c.l.b16 %v199
      %v858 = vunpack.c.l.b16 %v200
      %v859 = vunpack.c.l.b16 %v202
      %v860 = vunpack.c.l.b16 %v203
      %v861 = vunpack.c.l.b16 %v205
      %v862 = vunpack.c.l.b16 %v206
      %v863 = vunpack.c.l.b16 %v208
      %v864 = vunpack.c.l.b16 %v209
      %v865 = vunpack.c.l.b16 %v211
      %v866 = vunpack.c.l.b16 %v212
      %v867 = vunpack.c.l.b16 %v214
      %v868 = vunpack.c.l.b16 %v215
      %v869 = vunpack.c.l.b16 %v217
      %v870 = vunpack.c.l.b16 %v218
      %v871 = vpack.c.b16 %v840, %v839
      %v872 = vpack.c.b16 %v842, %v841
      %v873 = vpack.c.b16 %v844, %v843
      %v874 = vpack.c.b16 %v846, %v845
      %v875 = vpack.c.b16 %v848, %v847
      %v876 = vpack.c.b16 %v850, %v849
      %v877 = vpack.c.b16 %v852, %v851
      %v878 = vpack.c.b16 %v854, %v853
      %v879 = vpack.c.b16 %v856, %v855
      %v880 = vpack.c.b16 %v858, %v857
      %v881 = vpack.c.b16 %v860, %v859
      %v882 = vpack.c.b16 %v862, %v861
      %v883 = vpack.c.b16 %v864, %v863
      %v884 = vpack.c.b16 %v866, %v865
      %v885 = vpack.c.b16 %v868, %v867
      %v886 = vpack.c.b16 %v870, %v869
      %v888 = vsel %vm665, %v871, 0
      %v891 = vsel %vm665, %v872, 0
      %v894 = vsel %vm665, %v873, 0
      %v897 = vsel %vm665, %v874, 0
      %v900 = vsel %vm665, %v875, 0
      %v903 = vsel %vm665, %v876, 0
      %v906 = vsel %vm665, %v877, 0
      %v909 = vsel %vm665, %v878, 0
      %v912 = vsel %vm665, %v879, 0
      %v915 = vsel %vm665, %v880, 0
      %v918 = vsel %vm665, %v881, 0
      %v921 = vsel %vm665, %v882, 0
      %v924 = vsel %vm665, %v883, 0
      %v927 = vsel %vm665, %v884, 0
      %v930 = vsel %vm665, %v885, 0
      %v933 = vsel %vm665, %v886, 0
      %v936 = vsel %vm714, %v227, 0
      %938 = vmatpush.bf16.msra.mxu0 0
      %939 = vmatpush.bf16.msra.mxu0 0
      %940 = vmatpush.bf16.msra.mxu0 0
      %941 = vmatpush.bf16.msra.mxu0 0
      %942 = vmatpush.bf16.msra.mxu0 0
      %943 = vmatpush.bf16.msra.mxu0 0
      %944 = vmatpush.bf16.msra.mxu0 0
      %945 = vmatpush.bf16.msra.mxu0 %v936
      %946 = vmatmul.bf16.gmra.mxu0 %v888
      %v947 = vpop.f32.mrf.mxu0
      %v948 = vadd.f32 %v728, %v947
      %v949 = vpop.f32.mrf.mxu0
      %v950 = vadd.f32 %v730, %v949
      %951 = vmatmul.bf16.gmra.mxu0 %v891
      %v952 = vpop.f32.mrf.mxu0
      %v953 = vadd.f32 %v733, %v952
      %v954 = vpop.f32.mrf.mxu0
      %v955 = vadd.f32 %v735, %v954
      %956 = vmatmul.bf16.gmra.mxu0 %v894
      %v957 = vpop.f32.mrf.mxu0
      %v958 = vadd.f32 %v738, %v957
      %v959 = vpop.f32.mrf.mxu0
      %v960 = vadd.f32 %v740, %v959
      %961 = vmatmul.bf16.gmra.mxu0 %v897
      %v962 = vpop.f32.mrf.mxu0
      %v963 = vadd.f32 %v743, %v962
      %v964 = vpop.f32.mrf.mxu0
      %v965 = vadd.f32 %v745, %v964
      %966 = vmatmul.bf16.gmra.mxu0 %v900
      %v967 = vpop.f32.mrf.mxu0
      %v968 = vadd.f32 %v748, %v967
      %v969 = vpop.f32.mrf.mxu0
      %v970 = vadd.f32 %v750, %v969
      %971 = vmatmul.bf16.gmra.mxu0 %v903
      %v972 = vpop.f32.mrf.mxu0
      %v973 = vadd.f32 %v753, %v972
      %v974 = vpop.f32.mrf.mxu0
      %v975 = vadd.f32 %v755, %v974
      %976 = vmatmul.bf16.gmra.mxu0 %v906
      %v977 = vpop.f32.mrf.mxu0
      %v978 = vadd.f32 %v758, %v977
      %v979 = vpop.f32.mrf.mxu0
      %v980 = vadd.f32 %v760, %v979
      %981 = vmatmul.bf16.gmra.mxu0 %v909
      %v982 = vpop.f32.mrf.mxu0
      %v983 = vadd.f32 %v763, %v982
      %v984 = vpop.f32.mrf.mxu0
      %v985 = vadd.f32 %v765, %v984
      %986 = vmatmul.bf16.gmra.mxu0 %v912
      %v987 = vpop.f32.mrf.mxu0
      %v988 = vadd.f32 %v768, %v987
      %v989 = vpop.f32.mrf.mxu0
      %v990 = vadd.f32 %v770, %v989
      %991 = vmatmul.bf16.gmra.mxu0 %v915
      %v992 = vpop.f32.mrf.mxu0
      %v993 = vadd.f32 %v773, %v992
      %v994 = vpop.f32.mrf.mxu0
      %v995 = vadd.f32 %v775, %v994
      %996 = vmatmul.bf16.gmra.mxu0 %v918
      %v997 = vpop.f32.mrf.mxu0
      %v998 = vadd.f32 %v778, %v997
      %v999 = vpop.f32.mrf.mxu0
      %v1000 = vadd.f32 %v780, %v999
      %1001 = vmatmul.bf16.gmra.mxu0 %v921
      %v1002 = vpop.f32.mrf.mxu0
      %v1003 = vadd.f32 %v783, %v1002
      %v1004 = vpop.f32.mrf.mxu0
      %v1005 = vadd.f32 %v785, %v1004
      %1006 = vmatmul.bf16.gmra.mxu0 %v924
      %v1007 = vpop.f32.mrf.mxu0
      %v1008 = vadd.f32 %v788, %v1007
      %v1009 = vpop.f32.mrf.mxu0
      %v1010 = vadd.f32 %v790, %v1009
      %1011 = vmatmul.bf16.gmra.mxu0 %v927
      %v1012 = vpop.f32.mrf.mxu0
      %v1013 = vadd.f32 %v793, %v1012
      %v1014 = vpop.f32.mrf.mxu0
      %v1015 = vadd.f32 %v795, %v1014
      %1016 = vmatmul.bf16.gmra.mxu0 %v930
      %v1017 = vpop.f32.mrf.mxu0
      %v1018 = vadd.f32 %v798, %v1017
      %v1019 = vpop.f32.mrf.mxu0
      %v1020 = vadd.f32 %v800, %v1019
      %1021 = vmatmul.bf16.gmra.mxu0 %v933
      %v1022 = vpop.f32.mrf.mxu0
      %v1023 = vadd.f32 %v803, %v1022
      %v1024 = vpop.f32.mrf.mxu0
      %v1025 = vadd.f32 %v805, %v1024
      %1026 = vdwg.mxu0
      %s1027 = scalar_lea.vmem %s1, 4
      %v1028 = vld [vmem:[%s1027] sm:$0x3]
      %v1031 = vunpack.c.l.b16 %v220
      %v1032 = vunpack.c.l.b16 %v221
      %v1033 = vpack.c.b16 %v1032, %v1031
      %v1035 = vsel %vm665, %v1033, 0
      %v1038 = vsel %vm714, %v1028, 0
      %1040 = vmatpush.bf16.msra.mxu0 0
      %1041 = vmatpush.bf16.msra.mxu0 0
      %1042 = vmatpush.bf16.msra.mxu0 0
      %1043 = vmatpush.bf16.msra.mxu0 0
      %1044 = vmatpush.bf16.msra.mxu0 0
      %1045 = vmatpush.bf16.msra.mxu0 0
      %1046 = vmatpush.bf16.msra.mxu0 0
      %1047 = vmatpush.bf16.msra.mxu0 %v1038
      %1048 = vmatmul.bf16.gmra.mxu0 %v891
      %v1049 = vpop.f32.mrf.mxu0
      %v1050 = vadd.f32 0.0, %v1049
      %v1051 = vpop.f32.mrf.mxu0
      %v1052 = vadd.f32 0.0, %v1051
      %1053 = vmatmul.bf16.gmra.mxu0 %v894
      %v1054 = vpop.f32.mrf.mxu0
      %v1055 = vadd.f32 0.0, %v1054
      %v1056 = vpop.f32.mrf.mxu0
      %v1057 = vadd.f32 0.0, %v1056
      %1058 = vmatmul.bf16.gmra.mxu0 %v897
      %v1059 = vpop.f32.mrf.mxu0
      %v1060 = vadd.f32 0.0, %v1059
      %v1061 = vpop.f32.mrf.mxu0
      %v1062 = vadd.f32 0.0, %v1061
      %1063 = vmatmul.bf16.gmra.mxu0 %v900
      %v1064 = vpop.f32.mrf.mxu0
      %v1065 = vadd.f32 0.0, %v1064
      %v1066 = vpop.f32.mrf.mxu0
      %v1067 = vadd.f32 0.0, %v1066
      %1068 = vmatmul.bf16.gmra.mxu0 %v903
      %v1069 = vpop.f32.mrf.mxu0
      %v1070 = vadd.f32 0.0, %v1069
      %v1071 = vpop.f32.mrf.mxu0
      %v1072 = vadd.f32 0.0, %v1071
      %1073 = vmatmul.bf16.gmra.mxu0 %v906
      %v1074 = vpop.f32.mrf.mxu0
      %v1075 = vadd.f32 0.0, %v1074
      %v1076 = vpop.f32.mrf.mxu0
      %v1077 = vadd.f32 0.0, %v1076
      %1078 = vmatmul.bf16.gmra.mxu0 %v909
      %v1079 = vpop.f32.mrf.mxu0
      %v1080 = vadd.f32 0.0, %v1079
      %v1081 = vpop.f32.mrf.mxu0
      %v1082 = vadd.f32 0.0, %v1081
      %1083 = vmatmul.bf16.gmra.mxu0 %v912
      %v1084 = vpop.f32.mrf.mxu0
      %v1085 = vadd.f32 0.0, %v1084
      %v1086 = vpop.f32.mrf.mxu0
      %v1087 = vadd.f32 0.0, %v1086
      %1088 = vmatmul.bf16.gmra.mxu0 %v915
      %v1089 = vpop.f32.mrf.mxu0
      %v1090 = vadd.f32 0.0, %v1089
      %v1091 = vpop.f32.mrf.mxu0
      %v1092 = vadd.f32 0.0, %v1091
      %1093 = vmatmul.bf16.gmra.mxu0 %v918
      %v1094 = vpop.f32.mrf.mxu0
      %v1095 = vadd.f32 0.0, %v1094
      %v1096 = vpop.f32.mrf.mxu0
      %v1097 = vadd.f32 0.0, %v1096
      %1098 = vmatmul.bf16.gmra.mxu0 %v921
      %v1099 = vpop.f32.mrf.mxu0
      %v1100 = vadd.f32 0.0, %v1099
      %v1101 = vpop.f32.mrf.mxu0
      %v1102 = vadd.f32 0.0, %v1101
      %1103 = vmatmul.bf16.gmra.mxu0 %v924
      %v1104 = vpop.f32.mrf.mxu0
      %v1105 = vadd.f32 0.0, %v1104
      %v1106 = vpop.f32.mrf.mxu0
      %v1107 = vadd.f32 0.0, %v1106
      %1108 = vmatmul.bf16.gmra.mxu0 %v927
      %v1109 = vpop.f32.mrf.mxu0
      %v1110 = vadd.f32 0.0, %v1109
      %v1111 = vpop.f32.mrf.mxu0
      %v1112 = vadd.f32 0.0, %v1111
      %1113 = vmatmul.bf16.gmra.mxu0 %v930
      %v1114 = vpop.f32.mrf.mxu0
      %v1115 = vadd.f32 0.0, %v1114
      %v1116 = vpop.f32.mrf.mxu0
      %v1117 = vadd.f32 0.0, %v1116
      %1118 = vmatmul.bf16.gmra.mxu0 %v933
      %v1119 = vpop.f32.mrf.mxu0
      %v1120 = vadd.f32 0.0, %v1119
      %v1121 = vpop.f32.mrf.mxu0
      %v1122 = vadd.f32 0.0, %v1121
      %1123 = vmatmul.bf16.gmra.mxu0 %v1035
      %v1124 = vpop.f32.mrf.mxu0
      %v1125 = vadd.f32 0.0, %v1124
      %v1126 = vpop.f32.mrf.mxu0
      %v1127 = vadd.f32 0.0, %v1126
      %1128 = vdwg.mxu0
      %v1129 = vadd.f32 %v948, %v1050
      %v1130 = vadd.f32 %v950, %v1052
      %v1131 = vadd.f32 %v953, %v1055
      %v1132 = vadd.f32 %v955, %v1057
      %v1133 = vadd.f32 %v958, %v1060
      %v1134 = vadd.f32 %v960, %v1062
      %v1135 = vadd.f32 %v963, %v1065
      %v1136 = vadd.f32 %v965, %v1067
      %v1137 = vadd.f32 %v968, %v1070
      %v1138 = vadd.f32 %v970, %v1072
      %v1139 = vadd.f32 %v973, %v1075
      %v1140 = vadd.f32 %v975, %v1077
      %v1141 = vadd.f32 %v978, %v1080
      %v1142 = vadd.f32 %v980, %v1082
      %v1143 = vadd.f32 %v983, %v1085
      %v1144 = vadd.f32 %v985, %v1087
      %v1145 = vadd.f32 %v988, %v1090
      %v1146 = vadd.f32 %v990, %v1092
      %v1147 = vadd.f32 %v993, %v1095
      %v1148 = vadd.f32 %v995, %v1097
      %v1149 = vadd.f32 %v998, %v1100
      %v1150 = vadd.f32 %v1000, %v1102
      %v1151 = vadd.f32 %v1003, %v1105
      %v1152 = vadd.f32 %v1005, %v1107
      %v1153 = vadd.f32 %v1008, %v1110
      %v1154 = vadd.f32 %v1010, %v1112
      %v1155 = vadd.f32 %v1013, %v1115
      %v1156 = vadd.f32 %v1015, %v1117
      %v1157 = vadd.f32 %v1018, %v1120
      %v1158 = vadd.f32 %v1020, %v1122
      %v1159 = vadd.f32 %v1023, %v1125
      %v1160 = vadd.f32 %v1025, %v1127
      %v1162 = vshrl.u32 %v220, 16
      %v1164 = vrot.slane %v1162, 4
      %v1165 = vshll.u32 %v220, 16
      %v1167 = vrot.slane %v1165, 5
      %v1168 = vor.u32 %v1164, %v1167
      %v1169 = vrot.slane %v1168, 4
      %v1171 = vshll.u32 %v221, 16
      %v1173 = vrot.slane %v1171, 5
      %v1174 = vsel %vm230, %v1169, %v1173
      %v1175 = vshrl.u32 %v221, 16
      %v1177 = vrot.slane %v1175, 4
      %v1178 = vor.u32 %v1177, %v1173
      %v1179 = vrot.slane %v1178, 4
      %v1181 = vshll.u32 %v222, 16
      %v1183 = vrot.slane %v1181, 5
      %v1184 = vsel %vm230, %v1179, %v1183
      %s1185 = scalar_lea.vmem %s1, 6
      %v1186 = vld [vmem:[%s1185] sm:$0x3]
      %v1187 = vunpack.c.l.b16 %v1174
      %v1188 = vunpack.c.l.b16 %v1184
      %v1189 = vpack.c.b16 %v1188, %v1187
      %v1191 = vsel %vm665, %v1189, 0
      %v1194 = vsel %vm714, %v1186, 0
      %1196 = vmatpush.bf16.msra.mxu0 0
      %1197 = vmatpush.bf16.msra.mxu0 0
      %1198 = vmatpush.bf16.msra.mxu0 0
      %1199 = vmatpush.bf16.msra.mxu0 0
      %1200 = vmatpush.bf16.msra.mxu0 0
      %1201 = vmatpush.bf16.msra.mxu0 0
      %1202 = vmatpush.bf16.msra.mxu0 0
      %1203 = vmatpush.bf16.msra.mxu0 %v1194
      %1204 = vmatmul.bf16.gmra.mxu0 %v670
      %v1205 = vpop.f32.mrf.mxu0
      %v1206 = vadd.f32 0.0, %v1205
      %v1207 = vpop.f32.mrf.mxu0
      %v1208 = vadd.f32 0.0, %v1207
      %1209 = vmatmul.bf16.gmra.mxu0 %v673
      %v1210 = vpop.f32.mrf.mxu0
      %v1211 = vadd.f32 0.0, %v1210
      %v1212 = vpop.f32.mrf.mxu0
      %v1213 = vadd.f32 0.0, %v1212
      %1214 = vmatmul.bf16.gmra.mxu0 %v676
      %v1215 = vpop.f32.mrf.mxu0
      %v1216 = vadd.f32 0.0, %v1215
      %v1217 = vpop.f32.mrf.mxu0
      %v1218 = vadd.f32 0.0, %v1217
      %1219 = vmatmul.bf16.gmra.mxu0 %v679
      %v1220 = vpop.f32.mrf.mxu0
      %v1221 = vadd.f32 0.0, %v1220
      %v1222 = vpop.f32.mrf.mxu0
      %v1223 = vadd.f32 0.0, %v1222
      %1224 = vmatmul.bf16.gmra.mxu0 %v682
      %v1225 = vpop.f32.mrf.mxu0
      %v1226 = vadd.f32 0.0, %v1225
      %v1227 = vpop.f32.mrf.mxu0
      %v1228 = vadd.f32 0.0, %v1227
      %1229 = vmatmul.bf16.gmra.mxu0 %v685
      %v1230 = vpop.f32.mrf.mxu0
      %v1231 = vadd.f32 0.0, %v1230
      %v1232 = vpop.f32.mrf.mxu0
      %v1233 = vadd.f32 0.0, %v1232
      %1234 = vmatmul.bf16.gmra.mxu0 %v688
      %v1235 = vpop.f32.mrf.mxu0
      %v1236 = vadd.f32 0.0, %v1235
      %v1237 = vpop.f32.mrf.mxu0
      %v1238 = vadd.f32 0.0, %v1237
      %1239 = vmatmul.bf16.gmra.mxu0 %v691
      %v1240 = vpop.f32.mrf.mxu0
      %v1241 = vadd.f32 0.0, %v1240
      %v1242 = vpop.f32.mrf.mxu0
      %v1243 = vadd.f32 0.0, %v1242
      %1244 = vmatmul.bf16.gmra.mxu0 %v694
      %v1245 = vpop.f32.mrf.mxu0
      %v1246 = vadd.f32 0.0, %v1245
      %v1247 = vpop.f32.mrf.mxu0
      %v1248 = vadd.f32 0.0, %v1247
      %1249 = vmatmul.bf16.gmra.mxu0 %v697
      %v1250 = vpop.f32.mrf.mxu0
      %v1251 = vadd.f32 0.0, %v1250
      %v1252 = vpop.f32.mrf.mxu0
      %v1253 = vadd.f32 0.0, %v1252
      %1254 = vmatmul.bf16.gmra.mxu0 %v700
      %v1255 = vpop.f32.mrf.mxu0
      %v1256 = vadd.f32 0.0, %v1255
      %v1257 = vpop.f32.mrf.mxu0
      %v1258 = vadd.f32 0.0, %v1257
      %1259 = vmatmul.bf16.gmra.mxu0 %v703
      %v1260 = vpop.f32.mrf.mxu0
      %v1261 = vadd.f32 0.0, %v1260
      %v1262 = vpop.f32.mrf.mxu0
      %v1263 = vadd.f32 0.0, %v1262
      %1264 = vmatmul.bf16.gmra.mxu0 %v706
      %v1265 = vpop.f32.mrf.mxu0
      %v1266 = vadd.f32 0.0, %v1265
      %v1267 = vpop.f32.mrf.mxu0
      %v1268 = vadd.f32 0.0, %v1267
      %1269 = vmatmul.bf16.gmra.mxu0 %v709
      %v1270 = vpop.f32.mrf.mxu0
      %v1271 = vadd.f32 0.0, %v1270
      %v1272 = vpop.f32.mrf.mxu0
      %v1273 = vadd.f32 0.0, %v1272
      %1274 = vmatmul.bf16.gmra.mxu0 %v712
      %v1275 = vpop.f32.mrf.mxu0
      %v1276 = vadd.f32 0.0, %v1275
      %v1277 = vpop.f32.mrf.mxu0
      %v1278 = vadd.f32 0.0, %v1277
      %1279 = vmatmul.bf16.gmra.mxu0 %v1191
      %v1280 = vpop.f32.mrf.mxu0
      %v1281 = vadd.f32 0.0, %v1280
      %v1282 = vpop.f32.mrf.mxu0
      %v1283 = vadd.f32 0.0, %v1282
      %1284 = vdwg.mxu0
      %v1285 = vadd.f32 %v1129, %v1206
      %v1286 = vadd.f32 %v1130, %v1208
      %v1287 = vadd.f32 %v1131, %v1211
      %v1288 = vadd.f32 %v1132, %v1213
      %v1289 = vadd.f32 %v1133, %v1216
      %v1290 = vadd.f32 %v1134, %v1218
      %v1291 = vadd.f32 %v1135, %v1221
      %v1292 = vadd.f32 %v1136, %v1223
      %v1293 = vadd.f32 %v1137, %v1226
      %v1294 = vadd.f32 %v1138, %v1228
      %v1295 = vadd.f32 %v1139, %v1231
      %v1296 = vadd.f32 %v1140, %v1233
      %v1297 = vadd.f32 %v1141, %v1236
      %v1298 = vadd.f32 %v1142, %v1238
      %v1299 = vadd.f32 %v1143, %v1241
      %v1300 = vadd.f32 %v1144, %v1243
      %v1301 = vadd.f32 %v1145, %v1246
      %v1302 = vadd.f32 %v1146, %v1248
      %v1303 = vadd.f32 %v1147, %v1251
      %v1304 = vadd.f32 %v1148, %v1253
      %v1305 = vadd.f32 %v1149, %v1256
      %v1306 = vadd.f32 %v1150, %v1258
      %v1307 = vadd.f32 %v1151, %v1261
      %v1308 = vadd.f32 %v1152, %v1263
      %v1309 = vadd.f32 %v1153, %v1266
      %v1310 = vadd.f32 %v1154, %v1268
      %v1311 = vadd.f32 %v1155, %v1271
      %v1312 = vadd.f32 %v1156, %v1273
      %v1313 = vadd.f32 %v1157, %v1276
      %v1314 = vadd.f32 %v1158, %v1278
      %v1315 = vadd.f32 %v1159, %v1281
      %v1316 = vadd.f32 %v1160, %v1283
      %v1318 = vperm.slane %v226, 0
      %v1320 = vadd.f32 %v1285, %v1318
      %v1321 = vadd.f32 %v1286, %v1318
      %v1322 = vadd.f32 %v1287, %v1318
      %v1323 = vadd.f32 %v1288, %v1318
      %v1324 = vadd.f32 %v1289, %v1318
      %v1325 = vadd.f32 %v1290, %v1318
      %v1326 = vadd.f32 %v1291, %v1318
      %v1327 = vadd.f32 %v1292, %v1318
      %v1328 = vadd.f32 %v1293, %v1318
      %v1329 = vadd.f32 %v1294, %v1318
      %v1330 = vadd.f32 %v1295, %v1318
      %v1331 = vadd.f32 %v1296, %v1318
      %v1332 = vadd.f32 %v1297, %v1318
      %v1333 = vadd.f32 %v1298, %v1318
      %v1334 = vadd.f32 %v1299, %v1318
      %v1335 = vadd.f32 %v1300, %v1318
      %v1336 = vadd.f32 %v1301, %v1318
      %v1337 = vadd.f32 %v1302, %v1318
      %v1338 = vadd.f32 %v1303, %v1318
      %v1339 = vadd.f32 %v1304, %v1318
      %v1340 = vadd.f32 %v1305, %v1318
      %v1341 = vadd.f32 %v1306, %v1318
      %v1342 = vadd.f32 %v1307, %v1318
      %v1343 = vadd.f32 %v1308, %v1318
      %v1344 = vadd.f32 %v1309, %v1318
      %v1345 = vadd.f32 %v1310, %v1318
      %v1346 = vadd.f32 %v1311, %v1318
      %v1347 = vadd.f32 %v1312, %v1318
      %v1348 = vadd.f32 %v1313, %v1318
      %v1349 = vadd.f32 %v1314, %v1318
      %v1350 = vadd.f32 %v1315, %v1318
      %v1351 = vadd.f32 %v1316, %v1318
      %s1352 = scalar_lea.vmem %s1, 8
      %v1353 = vld [vmem:[%s1352] sm:$0x3]
      %vm1370 = vcmask 1042432
      %vm1371 = vcmask 1046532
      %vm1372 = vmor %vm1370, %vm1371
      %v1373 = vrot.slane %v172, 5
      %v1374 = vrot.slane %v1373, 4
      %v1375 = vrot.slane %v173, 5
      %v1376 = vsel %vm1372, %v1374, %v1375
      %v1377 = vrot.slane %v1375, 4
      %v1378 = vrot.slane %v174, 5
      %v1379 = vsel %vm1372, %v1377, %v1378
      %v1380 = vrot.slane %v175, 5
      %v1381 = vrot.slane %v1380, 4
      %v1382 = vrot.slane %v176, 5
      %v1383 = vsel %vm1372, %v1381, %v1382
      %v1384 = vrot.slane %v1382, 4
      %v1385 = vrot.slane %v177, 5
      %v1386 = vsel %vm1372, %v1384, %v1385
      %v1387 = vrot.slane %v178, 5
      %v1388 = vrot.slane %v1387, 4
      %v1389 = vrot.slane %v179, 5
      %v1390 = vsel %vm1372, %v1388, %v1389
      %v1391 = vrot.slane %v1389, 4
      %v1392 = vrot.slane %v180, 5
      %v1393 = vsel %vm1372, %v1391, %v1392
      %v1394 = vrot.slane %v181, 5
      %v1395 = vrot.slane %v1394, 4
      %v1396 = vrot.slane %v182, 5
      %v1397 = vsel %vm1372, %v1395, %v1396
      %v1398 = vrot.slane %v1396, 4
      %v1399 = vrot.slane %v183, 5
      %v1400 = vsel %vm1372, %v1398, %v1399
      %v1401 = vrot.slane %v184, 5
      %v1402 = vrot.slane %v1401, 4
      %v1403 = vrot.slane %v185, 5
      %v1404 = vsel %vm1372, %v1402, %v1403
      %v1405 = vrot.slane %v1403, 4
      %v1406 = vrot.slane %v186, 5
      %v1407 = vsel %vm1372, %v1405, %v1406
      %v1408 = vrot.slane %v187, 5
      %v1409 = vrot.slane %v1408, 4
      %v1410 = vrot.slane %v188, 5
      %v1411 = vsel %vm1372, %v1409, %v1410
      %v1412 = vrot.slane %v1410, 4
      %v1413 = vrot.slane %v189, 5
      %v1414 = vsel %vm1372, %v1412, %v1413
      %v1415 = vrot.slane %v190, 5
      %v1416 = vrot.slane %v1415, 4
      %v1417 = vrot.slane %v191, 5
      %v1418 = vsel %vm1372, %v1416, %v1417
      %v1419 = vrot.slane %v1417, 4
      %v1420 = vrot.slane %v192, 5
      %v1421 = vsel %vm1372, %v1419, %v1420
      %v1422 = vrot.slane %v193, 5
      %v1423 = vrot.slane %v1422, 4
      %v1424 = vrot.slane %v194, 5
      %v1425 = vsel %vm1372, %v1423, %v1424
      %v1426 = vrot.slane %v1424, 4
      %v1427 = vrot.slane %v195, 5
      %v1428 = vsel %vm1372, %v1426, %v1427
      %v1429 = vrot.slane %v196, 5
      %v1430 = vrot.slane %v1429, 4
      %v1431 = vrot.slane %v197, 5
      %v1432 = vsel %vm1372, %v1430, %v1431
      %v1433 = vrot.slane %v1431, 4
      %v1434 = vrot.slane %v198, 5
      %v1435 = vsel %vm1372, %v1433, %v1434
      %v1436 = vrot.slane %v199, 5
      %v1437 = vrot.slane %v1436, 4
      %v1438 = vrot.slane %v200, 5
      %v1439 = vsel %vm1372, %v1437, %v1438
      %v1440 = vrot.slane %v1438, 4
      %v1441 = vrot.slane %v201, 5
      %v1442 = vsel %vm1372, %v1440, %v1441
      %v1443 = vrot.slane %v202, 5
      %v1444 = vrot.slane %v1443, 4
      %v1445 = vrot.slane %v203, 5
      %v1446 = vsel %vm1372, %v1444, %v1445
      %v1447 = vrot.slane %v1445, 4
      %v1448 = vrot.slane %v204, 5
      %v1449 = vsel %vm1372, %v1447, %v1448
      %v1450 = vrot.slane %v205, 5
      %v1451 = vrot.slane %v1450, 4
      %v1452 = vrot.slane %v206, 5
      %v1453 = vsel %vm1372, %v1451, %v1452
      %v1454 = vrot.slane %v1452, 4
      %v1455 = vrot.slane %v207, 5
      %v1456 = vsel %vm1372, %v1454, %v1455
      %v1457 = vrot.slane %v208, 5
      %v1458 = vrot.slane %v1457, 4
      %v1459 = vrot.slane %v209, 5
      %v1460 = vsel %vm1372, %v1458, %v1459
      %v1461 = vrot.slane %v1459, 4
      %v1462 = vrot.slane %v210, 5
      %v1463 = vsel %vm1372, %v1461, %v1462
      %v1464 = vrot.slane %v211, 5
      %v1465 = vrot.slane %v1464, 4
      %v1466 = vrot.slane %v212, 5
      %v1467 = vsel %vm1372, %v1465, %v1466
      %v1468 = vrot.slane %v1466, 4
      %v1469 = vrot.slane %v213, 5
      %v1470 = vsel %vm1372, %v1468, %v1469
      %v1471 = vrot.slane %v214, 5
      %v1472 = vrot.slane %v1471, 4
      %v1473 = vrot.slane %v215, 5
      %v1474 = vsel %vm1372, %v1472, %v1473
      %v1475 = vrot.slane %v1473, 4
      %v1476 = vrot.slane %v216, 5
      %v1477 = vsel %vm1372, %v1475, %v1476
      %v1478 = vrot.slane %v217, 5
      %v1479 = vrot.slane %v1478, 4
      %v1480 = vrot.slane %v218, 5
      %v1481 = vsel %vm1372, %v1479, %v1480
      %v1482 = vrot.slane %v1480, 4
      %v1483 = vrot.slane %v219, 5
      %v1484 = vsel %vm1372, %v1482, %v1483
      %s1485 = scalar_lea.vmem %s1, 10
      %v1486 = vld [vmem:[%s1485] sm:$0x3]
      %v1487 = vunpack.c.l.b16 %v1376
      %v1488 = vunpack.c.l.b16 %v1379
      %v1489 = vunpack.c.l.b16 %v1383
      %v1490 = vunpack.c.l.b16 %v1386
      %v1491 = vunpack.c.l.b16 %v1390
      %v1492 = vunpack.c.l.b16 %v1393
      %v1493 = vunpack.c.l.b16 %v1397
      %v1494 = vunpack.c.l.b16 %v1400
      %v1495 = vunpack.c.l.b16 %v1404
      %v1496 = vunpack.c.l.b16 %v1407
      %v1497 = vunpack.c.l.b16 %v1411
      %v1498 = vunpack.c.l.b16 %v1414
      %v1499 = vunpack.c.l.b16 %v1418
      %v1500 = vunpack.c.l.b16 %v1421
      %v1501 = vunpack.c.l.b16 %v1425
      %v1502 = vunpack.c.l.b16 %v1428
      %v1503 = vunpack.c.l.b16 %v1432
      %v1504 = vunpack.c.l.b16 %v1435
      %v1505 = vunpack.c.l.b16 %v1439
      %v1506 = vunpack.c.l.b16 %v1442
      %v1507 = vunpack.c.l.b16 %v1446
      %v1508 = vunpack.c.l.b16 %v1449
      %v1509 = vunpack.c.l.b16 %v1453
      %v1510 = vunpack.c.l.b16 %v1456
      %v1511 = vunpack.c.l.b16 %v1460
      %v1512 = vunpack.c.l.b16 %v1463
      %v1513 = vunpack.c.l.b16 %v1467
      %v1514 = vunpack.c.l.b16 %v1470
      %v1515 = vunpack.c.l.b16 %v1474
      %v1516 = vunpack.c.l.b16 %v1477
      %v1517 = vunpack.c.l.b16 %v1481
      %v1518 = vunpack.c.l.b16 %v1484
      %v1519 = vpack.c.b16 %v1488, %v1487
      %v1520 = vpack.c.b16 %v1490, %v1489
      %v1521 = vpack.c.b16 %v1492, %v1491
      %v1522 = vpack.c.b16 %v1494, %v1493
      %v1523 = vpack.c.b16 %v1496, %v1495
      %v1524 = vpack.c.b16 %v1498, %v1497
      %v1525 = vpack.c.b16 %v1500, %v1499
      %v1526 = vpack.c.b16 %v1502, %v1501
      %v1527 = vpack.c.b16 %v1504, %v1503
      %v1528 = vpack.c.b16 %v1506, %v1505
      %v1529 = vpack.c.b16 %v1508, %v1507
      %v1530 = vpack.c.b16 %v1510, %v1509
      %v1531 = vpack.c.b16 %v1512, %v1511
      %v1532 = vpack.c.b16 %v1514, %v1513
      %v1533 = vpack.c.b16 %v1516, %v1515
      %v1534 = vpack.c.b16 %v1518, %v1517
      %v1536 = vsel %vm665, %v1519, 0
      %v1539 = vsel %vm665, %v1520, 0
      %v1542 = vsel %vm665, %v1521, 0
      %v1545 = vsel %vm665, %v1522, 0
      %v1548 = vsel %vm665, %v1523, 0
      %v1551 = vsel %vm665, %v1524, 0
      %v1554 = vsel %vm665, %v1525, 0
      %v1557 = vsel %vm665, %v1526, 0
      %v1560 = vsel %vm665, %v1527, 0
      %v1563 = vsel %vm665, %v1528, 0
      %v1566 = vsel %vm665, %v1529, 0
      %v1569 = vsel %vm665, %v1530, 0
      %v1572 = vsel %vm665, %v1531, 0
      %v1575 = vsel %vm665, %v1532, 0
      %v1578 = vsel %vm665, %v1533, 0
      %v1581 = vsel %vm665, %v1534, 0
      %v1584 = vsel %vm714, %v1486, 0
      %1586 = vmatpush.bf16.msra.mxu0 0
      %1587 = vmatpush.bf16.msra.mxu0 0
      %1588 = vmatpush.bf16.msra.mxu0 0
      %1589 = vmatpush.bf16.msra.mxu0 0
      %1590 = vmatpush.bf16.msra.mxu0 0
      %1591 = vmatpush.bf16.msra.mxu0 0
      %1592 = vmatpush.bf16.msra.mxu0 0
      %1593 = vmatpush.bf16.msra.mxu0 %v1584
      %1594 = vmatmul.bf16.gmra.mxu0 %v1536
      %v1595 = vpop.f32.mrf.mxu0
      %v1596 = vadd.f32 0.0, %v1595
      %v1597 = vpop.f32.mrf.mxu0
      %v1598 = vadd.f32 0.0, %v1597
      %1599 = vmatmul.bf16.gmra.mxu0 %v1539
      %v1600 = vpop.f32.mrf.mxu0
      %v1601 = vadd.f32 0.0, %v1600
      %v1602 = vpop.f32.mrf.mxu0
      %v1603 = vadd.f32 0.0, %v1602
      %1604 = vmatmul.bf16.gmra.mxu0 %v1542
      %v1605 = vpop.f32.mrf.mxu0
      %v1606 = vadd.f32 0.0, %v1605
      %v1607 = vpop.f32.mrf.mxu0
      %v1608 = vadd.f32 0.0, %v1607
      %1609 = vmatmul.bf16.gmra.mxu0 %v1545
      %v1610 = vpop.f32.mrf.mxu0
      %v1611 = vadd.f32 0.0, %v1610
      %v1612 = vpop.f32.mrf.mxu0
      %v1613 = vadd.f32 0.0, %v1612
      %1614 = vmatmul.bf16.gmra.mxu0 %v1548
      %v1615 = vpop.f32.mrf.mxu0
      %v1616 = vadd.f32 0.0, %v1615
      %v1617 = vpop.f32.mrf.mxu0
      %v1618 = vadd.f32 0.0, %v1617
      %1619 = vmatmul.bf16.gmra.mxu0 %v1551
      %v1620 = vpop.f32.mrf.mxu0
      %v1621 = vadd.f32 0.0, %v1620
      %v1622 = vpop.f32.mrf.mxu0
      %v1623 = vadd.f32 0.0, %v1622
      %1624 = vmatmul.bf16.gmra.mxu0 %v1554
      %v1625 = vpop.f32.mrf.mxu0
      %v1626 = vadd.f32 0.0, %v1625
      %v1627 = vpop.f32.mrf.mxu0
      %v1628 = vadd.f32 0.0, %v1627
      %1629 = vmatmul.bf16.gmra.mxu0 %v1557
      %v1630 = vpop.f32.mrf.mxu0
      %v1631 = vadd.f32 0.0, %v1630
      %v1632 = vpop.f32.mrf.mxu0
      %v1633 = vadd.f32 0.0, %v1632
      %1634 = vmatmul.bf16.gmra.mxu0 %v1560
      %v1635 = vpop.f32.mrf.mxu0
      %v1636 = vadd.f32 0.0, %v1635
      %v1637 = vpop.f32.mrf.mxu0
      %v1638 = vadd.f32 0.0, %v1637
      %1639 = vmatmul.bf16.gmra.mxu0 %v1563
      %v1640 = vpop.f32.mrf.mxu0
      %v1641 = vadd.f32 0.0, %v1640
      %v1642 = vpop.f32.mrf.mxu0
      %v1643 = vadd.f32 0.0, %v1642
      %1644 = vmatmul.bf16.gmra.mxu0 %v1566
      %v1645 = vpop.f32.mrf.mxu0
      %v1646 = vadd.f32 0.0, %v1645
      %v1647 = vpop.f32.mrf.mxu0
      %v1648 = vadd.f32 0.0, %v1647
      %1649 = vmatmul.bf16.gmra.mxu0 %v1569
      %v1650 = vpop.f32.mrf.mxu0
      %v1651 = vadd.f32 0.0, %v1650
      %v1652 = vpop.f32.mrf.mxu0
      %v1653 = vadd.f32 0.0, %v1652
      %1654 = vmatmul.bf16.gmra.mxu0 %v1572
      %v1655 = vpop.f32.mrf.mxu0
      %v1656 = vadd.f32 0.0, %v1655
      %v1657 = vpop.f32.mrf.mxu0
      %v1658 = vadd.f32 0.0, %v1657
      %1659 = vmatmul.bf16.gmra.mxu0 %v1575
      %v1660 = vpop.f32.mrf.mxu0
      %v1661 = vadd.f32 0.0, %v1660
      %v1662 = vpop.f32.mrf.mxu0
      %v1663 = vadd.f32 0.0, %v1662
      %1664 = vmatmul.bf16.gmra.mxu0 %v1578
      %v1665 = vpop.f32.mrf.mxu0
      %v1666 = vadd.f32 0.0, %v1665
      %v1667 = vpop.f32.mrf.mxu0
      %v1668 = vadd.f32 0.0, %v1667
      %1669 = vmatmul.bf16.gmra.mxu0 %v1581
      %v1670 = vpop.f32.mrf.mxu0
      %v1671 = vadd.f32 0.0, %v1670
      %v1672 = vpop.f32.mrf.mxu0
      %v1673 = vadd.f32 0.0, %v1672
      %1674 = vdwg.mxu0
      %v1676 = vsel %vm714, %v1353, 0
      %1678 = vmatpush.bf16.msra.mxu0 0
      %1679 = vmatpush.bf16.msra.mxu0 0
      %1680 = vmatpush.bf16.msra.mxu0 0
      %1681 = vmatpush.bf16.msra.mxu0 0
      %1682 = vmatpush.bf16.msra.mxu0 0
      %1683 = vmatpush.bf16.msra.mxu0 0
      %1684 = vmatpush.bf16.msra.mxu0 0
      %1685 = vmatpush.bf16.msra.mxu0 %v1676
      %1686 = vmatmul.bf16.gmra.mxu0 %v667
      %v1687 = vpop.f32.mrf.mxu0
      %v1688 = vadd.f32 %v1596, %v1687
      %v1689 = vpop.f32.mrf.mxu0
      %v1690 = vadd.f32 %v1598, %v1689
      %1691 = vmatmul.bf16.gmra.mxu0 %v670
      %v1692 = vpop.f32.mrf.mxu0
      %v1693 = vadd.f32 %v1601, %v1692
      %v1694 = vpop.f32.mrf.mxu0
      %v1695 = vadd.f32 %v1603, %v1694
      %1696 = vmatmul.bf16.gmra.mxu0 %v673
      %v1697 = vpop.f32.mrf.mxu0
      %v1698 = vadd.f32 %v1606, %v1697
      %v1699 = vpop.f32.mrf.mxu0
      %v1700 = vadd.f32 %v1608, %v1699
      %1701 = vmatmul.bf16.gmra.mxu0 %v676
      %v1702 = vpop.f32.mrf.mxu0
      %v1703 = vadd.f32 %v1611, %v1702
      %v1704 = vpop.f32.mrf.mxu0
      %v1705 = vadd.f32 %v1613, %v1704
      %1706 = vmatmul.bf16.gmra.mxu0 %v679
      %v1707 = vpop.f32.mrf.mxu0
      %v1708 = vadd.f32 %v1616, %v1707
      %v1709 = vpop.f32.mrf.mxu0
      %v1710 = vadd.f32 %v1618, %v1709
      %1711 = vmatmul.bf16.gmra.mxu0 %v682
      %v1712 = vpop.f32.mrf.mxu0
      %v1713 = vadd.f32 %v1621, %v1712
      %v1714 = vpop.f32.mrf.mxu0
      %v1715 = vadd.f32 %v1623, %v1714
      %1716 = vmatmul.bf16.gmra.mxu0 %v685
      %v1717 = vpop.f32.mrf.mxu0
      %v1718 = vadd.f32 %v1626, %v1717
      %v1719 = vpop.f32.mrf.mxu0
      %v1720 = vadd.f32 %v1628, %v1719
      %1721 = vmatmul.bf16.gmra.mxu0 %v688
      %v1722 = vpop.f32.mrf.mxu0
      %v1723 = vadd.f32 %v1631, %v1722
      %v1724 = vpop.f32.mrf.mxu0
      %v1725 = vadd.f32 %v1633, %v1724
      %1726 = vmatmul.bf16.gmra.mxu0 %v691
      %v1727 = vpop.f32.mrf.mxu0
      %v1728 = vadd.f32 %v1636, %v1727
      %v1729 = vpop.f32.mrf.mxu0
      %v1730 = vadd.f32 %v1638, %v1729
      %1731 = vmatmul.bf16.gmra.mxu0 %v694
      %v1732 = vpop.f32.mrf.mxu0
      %v1733 = vadd.f32 %v1641, %v1732
      %v1734 = vpop.f32.mrf.mxu0
      %v1735 = vadd.f32 %v1643, %v1734
      %1736 = vmatmul.bf16.gmra.mxu0 %v697
      %v1737 = vpop.f32.mrf.mxu0
      %v1738 = vadd.f32 %v1646, %v1737
      %v1739 = vpop.f32.mrf.mxu0
      %v1740 = vadd.f32 %v1648, %v1739
      %1741 = vmatmul.bf16.gmra.mxu0 %v700
      %v1742 = vpop.f32.mrf.mxu0
      %v1743 = vadd.f32 %v1651, %v1742
      %v1744 = vpop.f32.mrf.mxu0
      %v1745 = vadd.f32 %v1653, %v1744
      %1746 = vmatmul.bf16.gmra.mxu0 %v703
      %v1747 = vpop.f32.mrf.mxu0
      %v1748 = vadd.f32 %v1656, %v1747
      %v1749 = vpop.f32.mrf.mxu0
      %v1750 = vadd.f32 %v1658, %v1749
      %1751 = vmatmul.bf16.gmra.mxu0 %v706
      %v1752 = vpop.f32.mrf.mxu0
      %v1753 = vadd.f32 %v1661, %v1752
      %v1754 = vpop.f32.mrf.mxu0
      %v1755 = vadd.f32 %v1663, %v1754
      %1756 = vmatmul.bf16.gmra.mxu0 %v709
      %v1757 = vpop.f32.mrf.mxu0
      %v1758 = vadd.f32 %v1666, %v1757
      %v1759 = vpop.f32.mrf.mxu0
      %v1760 = vadd.f32 %v1668, %v1759
      %1761 = vmatmul.bf16.gmra.mxu0 %v712
      %v1762 = vpop.f32.mrf.mxu0
      %v1763 = vadd.f32 %v1671, %v1762
      %v1764 = vpop.f32.mrf.mxu0
      %v1765 = vadd.f32 %v1673, %v1764
      %1766 = vdwg.mxu0
      %s1767 = scalar_lea.vmem %s1, 12
      %v1768 = vld [vmem:[%s1767] sm:$0x3]
      %v1770 = vsel %vm714, %v1768, 0
      %1772 = vmatpush.bf16.msra.mxu0 0
      %1773 = vmatpush.bf16.msra.mxu0 0
      %1774 = vmatpush.bf16.msra.mxu0 0
      %1775 = vmatpush.bf16.msra.mxu0 0
      %1776 = vmatpush.bf16.msra.mxu0 0
      %1777 = vmatpush.bf16.msra.mxu0 0
      %1778 = vmatpush.bf16.msra.mxu0 0
      %1779 = vmatpush.bf16.msra.mxu0 %v1770
      %1780 = vmatmul.bf16.gmra.mxu0 %v670
      %v1781 = vpop.f32.mrf.mxu0
      %v1782 = vadd.f32 0.0, %v1781
      %v1783 = vpop.f32.mrf.mxu0
      %v1784 = vadd.f32 0.0, %v1783
      %1785 = vmatmul.bf16.gmra.mxu0 %v673
      %v1786 = vpop.f32.mrf.mxu0
      %v1787 = vadd.f32 0.0, %v1786
      %v1788 = vpop.f32.mrf.mxu0
      %v1789 = vadd.f32 0.0, %v1788
      %1790 = vmatmul.bf16.gmra.mxu0 %v676
      %v1791 = vpop.f32.mrf.mxu0
      %v1792 = vadd.f32 0.0, %v1791
      %v1793 = vpop.f32.mrf.mxu0
      %v1794 = vadd.f32 0.0, %v1793
      %1795 = vmatmul.bf16.gmra.mxu0 %v679
      %v1796 = vpop.f32.mrf.mxu0
      %v1797 = vadd.f32 0.0, %v1796
      %v1798 = vpop.f32.mrf.mxu0
      %v1799 = vadd.f32 0.0, %v1798
      %1800 = vmatmul.bf16.gmra.mxu0 %v682
      %v1801 = vpop.f32.mrf.mxu0
      %v1802 = vadd.f32 0.0, %v1801
      %v1803 = vpop.f32.mrf.mxu0
      %v1804 = vadd.f32 0.0, %v1803
      %1805 = vmatmul.bf16.gmra.mxu0 %v685
      %v1806 = vpop.f32.mrf.mxu0
      %v1807 = vadd.f32 0.0, %v1806
      %v1808 = vpop.f32.mrf.mxu0
      %v1809 = vadd.f32 0.0, %v1808
      %1810 = vmatmul.bf16.gmra.mxu0 %v688
      %v1811 = vpop.f32.mrf.mxu0
      %v1812 = vadd.f32 0.0, %v1811
      %v1813 = vpop.f32.mrf.mxu0
      %v1814 = vadd.f32 0.0, %v1813
      %1815 = vmatmul.bf16.gmra.mxu0 %v691
      %v1816 = vpop.f32.mrf.mxu0
      %v1817 = vadd.f32 0.0, %v1816
      %v1818 = vpop.f32.mrf.mxu0
      %v1819 = vadd.f32 0.0, %v1818
      %1820 = vmatmul.bf16.gmra.mxu0 %v694
      %v1821 = vpop.f32.mrf.mxu0
      %v1822 = vadd.f32 0.0, %v1821
      %v1823 = vpop.f32.mrf.mxu0
      %v1824 = vadd.f32 0.0, %v1823
      %1825 = vmatmul.bf16.gmra.mxu0 %v697
      %v1826 = vpop.f32.mrf.mxu0
      %v1827 = vadd.f32 0.0, %v1826
      %v1828 = vpop.f32.mrf.mxu0
      %v1829 = vadd.f32 0.0, %v1828
      %1830 = vmatmul.bf16.gmra.mxu0 %v700
      %v1831 = vpop.f32.mrf.mxu0
      %v1832 = vadd.f32 0.0, %v1831
      %v1833 = vpop.f32.mrf.mxu0
      %v1834 = vadd.f32 0.0, %v1833
      %1835 = vmatmul.bf16.gmra.mxu0 %v703
      %v1836 = vpop.f32.mrf.mxu0
      %v1837 = vadd.f32 0.0, %v1836
      %v1838 = vpop.f32.mrf.mxu0
      %v1839 = vadd.f32 0.0, %v1838
      %1840 = vmatmul.bf16.gmra.mxu0 %v706
      %v1841 = vpop.f32.mrf.mxu0
      %v1842 = vadd.f32 0.0, %v1841
      %v1843 = vpop.f32.mrf.mxu0
      %v1844 = vadd.f32 0.0, %v1843
      %1845 = vmatmul.bf16.gmra.mxu0 %v709
      %v1846 = vpop.f32.mrf.mxu0
      %v1847 = vadd.f32 0.0, %v1846
      %v1848 = vpop.f32.mrf.mxu0
      %v1849 = vadd.f32 0.0, %v1848
      %1850 = vmatmul.bf16.gmra.mxu0 %v712
      %v1851 = vpop.f32.mrf.mxu0
      %v1852 = vadd.f32 0.0, %v1851
      %v1853 = vpop.f32.mrf.mxu0
      %v1854 = vadd.f32 0.0, %v1853
      %1855 = vmatmul.bf16.gmra.mxu0 %v1191
      %v1856 = vpop.f32.mrf.mxu0
      %v1857 = vadd.f32 0.0, %v1856
      %v1858 = vpop.f32.mrf.mxu0
      %v1859 = vadd.f32 0.0, %v1858
      %1860 = vdwg.mxu0
      %v1861 = vadd.f32 %v1688, %v1782
      %v1862 = vadd.f32 %v1690, %v1784
      %v1863 = vadd.f32 %v1693, %v1787
      %v1864 = vadd.f32 %v1695, %v1789
      %v1865 = vadd.f32 %v1698, %v1792
      %v1866 = vadd.f32 %v1700, %v1794
      %v1867 = vadd.f32 %v1703, %v1797
      %v1868 = vadd.f32 %v1705, %v1799
      %v1869 = vadd.f32 %v1708, %v1802
      %v1870 = vadd.f32 %v1710, %v1804
      %v1871 = vadd.f32 %v1713, %v1807
      %v1872 = vadd.f32 %v1715, %v1809
      %v1873 = vadd.f32 %v1718, %v1812
      %v1874 = vadd.f32 %v1720, %v1814
      %v1875 = vadd.f32 %v1723, %v1817
      %v1876 = vadd.f32 %v1725, %v1819
      %v1877 = vadd.f32 %v1728, %v1822
      %v1878 = vadd.f32 %v1730, %v1824
      %v1879 = vadd.f32 %v1733, %v1827
      %v1880 = vadd.f32 %v1735, %v1829
      %v1881 = vadd.f32 %v1738, %v1832
      %v1882 = vadd.f32 %v1740, %v1834
      %v1883 = vadd.f32 %v1743, %v1837
      %v1884 = vadd.f32 %v1745, %v1839
      %v1885 = vadd.f32 %v1748, %v1842
      %v1886 = vadd.f32 %v1750, %v1844
      %v1887 = vadd.f32 %v1753, %v1847
      %v1888 = vadd.f32 %v1755, %v1849
      %v1889 = vadd.f32 %v1758, %v1852
      %v1890 = vadd.f32 %v1760, %v1854
      %v1891 = vadd.f32 %v1763, %v1857
      %v1892 = vadd.f32 %v1765, %v1859
      %v1894 = vrot.slane %v220, 5
      %v1895 = vrot.slane %v1894, 4
      %v1896 = vrot.slane %v221, 5
      %v1897 = vsel %vm1372, %v1895, %v1896
      %v1898 = vrot.slane %v1896, 4
      %v1899 = vrot.slane %v222, 5
      %v1900 = vsel %vm1372, %v1898, %v1899
      %s1901 = scalar_lea.vmem %s1, 14
      %v1902 = vld [vmem:[%s1901] sm:$0x3]
      %v1903 = vunpack.c.l.b16 %v1897
      %v1904 = vunpack.c.l.b16 %v1900
      %v1905 = vpack.c.b16 %v1904, %v1903
      %v1907 = vsel %vm665, %v1905, 0
      %v1910 = vsel %vm714, %v1902, 0
      %1912 = vmatpush.bf16.msra.mxu0 0
      %1913 = vmatpush.bf16.msra.mxu0 0
      %1914 = vmatpush.bf16.msra.mxu0 0
      %1915 = vmatpush.bf16.msra.mxu0 0
      %1916 = vmatpush.bf16.msra.mxu0 0
      %1917 = vmatpush.bf16.msra.mxu0 0
      %1918 = vmatpush.bf16.msra.mxu0 0
      %1919 = vmatpush.bf16.msra.mxu0 %v1910
      %1920 = vmatmul.bf16.gmra.mxu0 %v1539
      %v1921 = vpop.f32.mrf.mxu0
      %v1922 = vadd.f32 0.0, %v1921
      %v1923 = vpop.f32.mrf.mxu0
      %v1924 = vadd.f32 0.0, %v1923
      %1925 = vmatmul.bf16.gmra.mxu0 %v1542
      %v1926 = vpop.f32.mrf.mxu0
      %v1927 = vadd.f32 0.0, %v1926
      %v1928 = vpop.f32.mrf.mxu0
      %v1929 = vadd.f32 0.0, %v1928
      %1930 = vmatmul.bf16.gmra.mxu0 %v1545
      %v1931 = vpop.f32.mrf.mxu0
      %v1932 = vadd.f32 0.0, %v1931
      %v1933 = vpop.f32.mrf.mxu0
      %v1934 = vadd.f32 0.0, %v1933
      %1935 = vmatmul.bf16.gmra.mxu0 %v1548
      %v1936 = vpop.f32.mrf.mxu0
      %v1937 = vadd.f32 0.0, %v1936
      %v1938 = vpop.f32.mrf.mxu0
      %v1939 = vadd.f32 0.0, %v1938
      %1940 = vmatmul.bf16.gmra.mxu0 %v1551
      %v1941 = vpop.f32.mrf.mxu0
      %v1942 = vadd.f32 0.0, %v1941
      %v1943 = vpop.f32.mrf.mxu0
      %v1944 = vadd.f32 0.0, %v1943
      %1945 = vmatmul.bf16.gmra.mxu0 %v1554
      %v1946 = vpop.f32.mrf.mxu0
      %v1947 = vadd.f32 0.0, %v1946
      %v1948 = vpop.f32.mrf.mxu0
      %v1949 = vadd.f32 0.0, %v1948
      %1950 = vmatmul.bf16.gmra.mxu0 %v1557
      %v1951 = vpop.f32.mrf.mxu0
      %v1952 = vadd.f32 0.0, %v1951
      %v1953 = vpop.f32.mrf.mxu0
      %v1954 = vadd.f32 0.0, %v1953
      %1955 = vmatmul.bf16.gmra.mxu0 %v1560
      %v1956 = vpop.f32.mrf.mxu0
      %v1957 = vadd.f32 0.0, %v1956
      %v1958 = vpop.f32.mrf.mxu0
      %v1959 = vadd.f32 0.0, %v1958
      %1960 = vmatmul.bf16.gmra.mxu0 %v1563
      %v1961 = vpop.f32.mrf.mxu0
      %v1962 = vadd.f32 0.0, %v1961
      %v1963 = vpop.f32.mrf.mxu0
      %v1964 = vadd.f32 0.0, %v1963
      %1965 = vmatmul.bf16.gmra.mxu0 %v1566
      %v1966 = vpop.f32.mrf.mxu0
      %v1967 = vadd.f32 0.0, %v1966
      %v1968 = vpop.f32.mrf.mxu0
      %v1969 = vadd.f32 0.0, %v1968
      %1970 = vmatmul.bf16.gmra.mxu0 %v1569
      %v1971 = vpop.f32.mrf.mxu0
      %v1972 = vadd.f32 0.0, %v1971
      %v1973 = vpop.f32.mrf.mxu0
      %v1974 = vadd.f32 0.0, %v1973
      %1975 = vmatmul.bf16.gmra.mxu0 %v1572
      %v1976 = vpop.f32.mrf.mxu0
      %v1977 = vadd.f32 0.0, %v1976
      %v1978 = vpop.f32.mrf.mxu0
      %v1979 = vadd.f32 0.0, %v1978
      %1980 = vmatmul.bf16.gmra.mxu0 %v1575
      %v1981 = vpop.f32.mrf.mxu0
      %v1982 = vadd.f32 0.0, %v1981
      %v1983 = vpop.f32.mrf.mxu0
      %v1984 = vadd.f32 0.0, %v1983
      %1985 = vmatmul.bf16.gmra.mxu0 %v1578
      %v1986 = vpop.f32.mrf.mxu0
      %v1987 = vadd.f32 0.0, %v1986
      %v1988 = vpop.f32.mrf.mxu0
      %v1989 = vadd.f32 0.0, %v1988
      %1990 = vmatmul.bf16.gmra.mxu0 %v1581
      %v1991 = vpop.f32.mrf.mxu0
      %v1992 = vadd.f32 0.0, %v1991
      %v1993 = vpop.f32.mrf.mxu0
      %v1994 = vadd.f32 0.0, %v1993
      %1995 = vmatmul.bf16.gmra.mxu0 %v1907
      %v1996 = vpop.f32.mrf.mxu0
      %v1997 = vadd.f32 0.0, %v1996
      %v1998 = vpop.f32.mrf.mxu0
      %v1999 = vadd.f32 0.0, %v1998
      %2000 = vdwg.mxu0
      %v2001 = vadd.f32 %v1861, %v1922
      %v2002 = vadd.f32 %v1862, %v1924
      %v2003 = vadd.f32 %v1863, %v1927
      %v2004 = vadd.f32 %v1864, %v1929
      %v2005 = vadd.f32 %v1865, %v1932
      %v2006 = vadd.f32 %v1866, %v1934
      %v2007 = vadd.f32 %v1867, %v1937
      %v2008 = vadd.f32 %v1868, %v1939
      %v2009 = vadd.f32 %v1869, %v1942
      %v2010 = vadd.f32 %v1870, %v1944
      %v2011 = vadd.f32 %v1871, %v1947
      %v2012 = vadd.f32 %v1872, %v1949
      %v2013 = vadd.f32 %v1873, %v1952
      %v2014 = vadd.f32 %v1874, %v1954
      %v2015 = vadd.f32 %v1875, %v1957
      %v2016 = vadd.f32 %v1876, %v1959
      %v2017 = vadd.f32 %v1877, %v1962
      %v2018 = vadd.f32 %v1878, %v1964
      %v2019 = vadd.f32 %v1879, %v1967
      %v2020 = vadd.f32 %v1880, %v1969
      %v2021 = vadd.f32 %v1881, %v1972
      %v2022 = vadd.f32 %v1882, %v1974
      %v2023 = vadd.f32 %v1883, %v1977
      %v2024 = vadd.f32 %v1884, %v1979
      %v2025 = vadd.f32 %v1885, %v1982
      %v2026 = vadd.f32 %v1886, %v1984
      %v2027 = vadd.f32 %v1887, %v1987
      %v2028 = vadd.f32 %v1888, %v1989
      %v2029 = vadd.f32 %v1889, %v1992
      %v2030 = vadd.f32 %v1890, %v1994
      %v2031 = vadd.f32 %v1891, %v1997
      %v2032 = vadd.f32 %v1892, %v1999
      %v2033 = vadd.f32 %v2001, %v1318
      %v2034 = vadd.f32 %v2002, %v1318
      %v2035 = vadd.f32 %v2003, %v1318
      %v2036 = vadd.f32 %v2004, %v1318
      %v2037 = vadd.f32 %v2005, %v1318
      %v2038 = vadd.f32 %v2006, %v1318
      %v2039 = vadd.f32 %v2007, %v1318
      %v2040 = vadd.f32 %v2008, %v1318
      %v2041 = vadd.f32 %v2009, %v1318
      %v2042 = vadd.f32 %v2010, %v1318
      %v2043 = vadd.f32 %v2011, %v1318
      %v2044 = vadd.f32 %v2012, %v1318
      %v2045 = vadd.f32 %v2013, %v1318
      %v2046 = vadd.f32 %v2014, %v1318
      %v2047 = vadd.f32 %v2015, %v1318
      %v2048 = vadd.f32 %v2016, %v1318
      %v2049 = vadd.f32 %v2017, %v1318
      %v2050 = vadd.f32 %v2018, %v1318
      %v2051 = vadd.f32 %v2019, %v1318
      %v2052 = vadd.f32 %v2020, %v1318
      %v2053 = vadd.f32 %v2021, %v1318
      %v2054 = vadd.f32 %v2022, %v1318
      %v2055 = vadd.f32 %v2023, %v1318
      %v2056 = vadd.f32 %v2024, %v1318
      %v2057 = vadd.f32 %v2025, %v1318
      %v2058 = vadd.f32 %v2026, %v1318
      %v2059 = vadd.f32 %v2027, %v1318
      %v2060 = vadd.f32 %v2028, %v1318
      %v2061 = vadd.f32 %v2029, %v1318
      %v2062 = vadd.f32 %v2030, %v1318
      %v2063 = vadd.f32 %v2031, %v1318
      %v2064 = vadd.f32 %v2032, %v1318
      %2065 = vst [vmem:[%s170] sm:$0xff] %v1320
      %2066 = vst [vmem:[%s170 + $0x8] sm:$0xff] %v2033
      %2067 = vst [vmem:[%s170 + $0x10] sm:$0xff] %v1321
      %2068 = vst [vmem:[%s170 + $0x18] sm:$0xff] %v2034
      %2069 = vst [vmem:[%s170 + $0x40] sm:$0xff] %v1322
      %2070 = vst [vmem:[%s170 + $0x48] sm:$0xff] %v2035
      %2071 = vst [vmem:[%s170 + $0x50] sm:$0xff] %v1323
      %2072 = vst [vmem:[%s170 + $0x58] sm:$0xff] %v2036
      %2073 = vst [vmem:[%s170 + $0x80] sm:$0xff] %v1324
      %2074 = vst [vmem:[%s170 + $0x88] sm:$0xff] %v2037
      %2075 = vst [vmem:[%s170 + $0x90] sm:$0xff] %v1325
      %2076 = vst [vmem:[%s170 + $0x98] sm:$0xff] %v2038
      %2077 = vst [vmem:[%s170 + $0xc0] sm:$0xff] %v1326
      %2078 = vst [vmem:[%s170 + $0xc8] sm:$0xff] %v2039
      %2079 = vst [vmem:[%s170 + $0xd0] sm:$0xff] %v1327
      %2080 = vst [vmem:[%s170 + $0xd8] sm:$0xff] %v2040
      %2081 = vst [vmem:[%s170 + $0x100] sm:$0xff] %v1328
      %2082 = vst [vmem:[%s170 + $0x108] sm:$0xff] %v2041
      %2083 = vst [vmem:[%s170 + $0x110] sm:$0xff] %v1329
      %2084 = vst [vmem:[%s170 + $0x118] sm:$0xff] %v2042
      %2085 = vst [vmem:[%s170 + $0x140] sm:$0xff] %v1330
      %2086 = vst [vmem:[%s170 + $0x148] sm:$0xff] %v2043
      %2087 = vst [vmem:[%s170 + $0x150] sm:$0xff] %v1331
      %2088 = vst [vmem:[%s170 + $0x158] sm:$0xff] %v2044
      %2089 = vst [vmem:[%s170 + $0x180] sm:$0xff] %v1332
      %2090 = vst [vmem:[%s170 + $0x188] sm:$0xff] %v2045
      %2091 = vst [vmem:[%s170 + $0x190] sm:$0xff] %v1333
      %2092 = vst [vmem:[%s170 + $0x198] sm:$0xff] %v2046
      %2093 = vst [vmem:[%s170 + $0x1c0] sm:$0xff] %v1334
      %2094 = vst [vmem:[%s170 + $0x1c8] sm:$0xff] %v2047
      %2095 = vst [vmem:[%s170 + $0x1d0] sm:$0xff] %v1335
      %2096 = vst [vmem:[%s170 + $0x1d8] sm:$0xff] %v2048
      %2097 = vst [vmem:[%s170 + $0x200] sm:$0xff] %v1336
      %2098 = vst [vmem:[%s170 + $0x208] sm:$0xff] %v2049
      %2099 = vst [vmem:[%s170 + $0x210] sm:$0xff] %v1337
      %2100 = vst [vmem:[%s170 + $0x218] sm:$0xff] %v2050
      %2101 = vst [vmem:[%s170 + $0x240] sm:$0xff] %v1338
      %2102 = vst [vmem:[%s170 + $0x248] sm:$0xff] %v2051
      %2103 = vst [vmem:[%s170 + $0x250] sm:$0xff] %v1339
      %2104 = vst [vmem:[%s170 + $0x258] sm:$0xff] %v2052
      %2105 = vst [vmem:[%s170 + $0x280] sm:$0xff] %v1340
      %2106 = vst [vmem:[%s170 + $0x288] sm:$0xff] %v2053
      %2107 = vst [vmem:[%s170 + $0x290] sm:$0xff] %v1341
      %2108 = vst [vmem:[%s170 + $0x298] sm:$0xff] %v2054
      %2109 = vst [vmem:[%s170 + $0x2c0] sm:$0xff] %v1342
      %2110 = vst [vmem:[%s170 + $0x2c8] sm:$0xff] %v2055
      %2111 = vst [vmem:[%s170 + $0x2d0] sm:$0xff] %v1343
      %2112 = vst [vmem:[%s170 + $0x2d8] sm:$0xff] %v2056
      %2113 = vst [vmem:[%s170 + $0x300] sm:$0xff] %v1344
      %2114 = vst [vmem:[%s170 + $0x308] sm:$0xff] %v2057
      %2115 = vst [vmem:[%s170 + $0x310] sm:$0xff] %v1345
      %2116 = vst [vmem:[%s170 + $0x318] sm:$0xff] %v2058
      %2117 = vst [vmem:[%s170 + $0x340] sm:$0xff] %v1346
      %2118 = vst [vmem:[%s170 + $0x348] sm:$0xff] %v2059
      %2119 = vst [vmem:[%s170 + $0x350] sm:$0xff] %v1347
      %2120 = vst [vmem:[%s170 + $0x358] sm:$0xff] %v2060
      %2121 = vst [vmem:[%s170 + $0x380] sm:$0xff] %v1348
      %2122 = vst [vmem:[%s170 + $0x388] sm:$0xff] %v2061
      %2123 = vst [vmem:[%s170 + $0x390] sm:$0xff] %v1349
      %2124 = vst [vmem:[%s170 + $0x398] sm:$0xff] %v2062
      %2125 = vst [vmem:[%s170 + $0x3c0] sm:$0xff] %v1350
      %2126 = vst [vmem:[%s170 + $0x3c8] sm:$0xff] %v2063
      %2127 = vst [vmem:[%s170 + $0x3d0] sm:$0xff] %v1351
      %2128 = vst [vmem:[%s170 + $0x3d8] sm:$0xff] %v2064
      %s2129 = scalar_lea.vmem %s1, 16
      %v2130 = vld [vmem:[%s2129] sm:$0x3]
      %s2131 = scalar_lea.vmem %s1, 18
      %v2132 = vld [vmem:[%s2131] sm:$0x3]
      %v2134 = vsel %vm714, %v2132, 0
      %2136 = vmatpush.bf16.msra.mxu0 0
      %2137 = vmatpush.bf16.msra.mxu0 0
      %2138 = vmatpush.bf16.msra.mxu0 0
      %2139 = vmatpush.bf16.msra.mxu0 0
      %2140 = vmatpush.bf16.msra.mxu0 0
      %2141 = vmatpush.bf16.msra.mxu0 0
      %2142 = vmatpush.bf16.msra.mxu0 0
      %2143 = vmatpush.bf16.msra.mxu0 %v2134
      %2144 = vmatmul.bf16.gmra.mxu0 %v670
      %v2145 = vpop.f32.mrf.mxu0
      %v2146 = vadd.f32 0.0, %v2145
      %v2147 = vpop.f32.mrf.mxu0
      %v2148 = vadd.f32 0.0, %v2147
      %2149 = vmatmul.bf16.gmra.mxu0 %v673
      %v2150 = vpop.f32.mrf.mxu0
      %v2151 = vadd.f32 0.0, %v2150
      %v2152 = vpop.f32.mrf.mxu0
      %v2153 = vadd.f32 0.0, %v2152
      %2154 = vmatmul.bf16.gmra.mxu0 %v676
      %v2155 = vpop.f32.mrf.mxu0
      %v2156 = vadd.f32 0.0, %v2155
      %v2157 = vpop.f32.mrf.mxu0
      %v2158 = vadd.f32 0.0, %v2157
      %2159 = vmatmul.bf16.gmra.mxu0 %v679
      %v2160 = vpop.f32.mrf.mxu0
      %v2161 = vadd.f32 0.0, %v2160
      %v2162 = vpop.f32.mrf.mxu0
      %v2163 = vadd.f32 0.0, %v2162
      %2164 = vmatmul.bf16.gmra.mxu0 %v682
      %v2165 = vpop.f32.mrf.mxu0
      %v2166 = vadd.f32 0.0, %v2165
      %v2167 = vpop.f32.mrf.mxu0
      %v2168 = vadd.f32 0.0, %v2167
      %2169 = vmatmul.bf16.gmra.mxu0 %v685
      %v2170 = vpop.f32.mrf.mxu0
      %v2171 = vadd.f32 0.0, %v2170
      %v2172 = vpop.f32.mrf.mxu0
      %v2173 = vadd.f32 0.0, %v2172
      %2174 = vmatmul.bf16.gmra.mxu0 %v688
      %v2175 = vpop.f32.mrf.mxu0
      %v2176 = vadd.f32 0.0, %v2175
      %v2177 = vpop.f32.mrf.mxu0
      %v2178 = vadd.f32 0.0, %v2177
      %2179 = vmatmul.bf16.gmra.mxu0 %v691
      %v2180 = vpop.f32.mrf.mxu0
      %v2181 = vadd.f32 0.0, %v2180
      %v2182 = vpop.f32.mrf.mxu0
      %v2183 = vadd.f32 0.0, %v2182
      %2184 = vmatmul.bf16.gmra.mxu0 %v694
      %v2185 = vpop.f32.mrf.mxu0
      %v2186 = vadd.f32 0.0, %v2185
      %v2187 = vpop.f32.mrf.mxu0
      %v2188 = vadd.f32 0.0, %v2187
      %2189 = vmatmul.bf16.gmra.mxu0 %v697
      %v2190 = vpop.f32.mrf.mxu0
      %v2191 = vadd.f32 0.0, %v2190
      %v2192 = vpop.f32.mrf.mxu0
      %v2193 = vadd.f32 0.0, %v2192
      %2194 = vmatmul.bf16.gmra.mxu0 %v700
      %v2195 = vpop.f32.mrf.mxu0
      %v2196 = vadd.f32 0.0, %v2195
      %v2197 = vpop.f32.mrf.mxu0
      %v2198 = vadd.f32 0.0, %v2197
      %2199 = vmatmul.bf16.gmra.mxu0 %v703
      %v2200 = vpop.f32.mrf.mxu0
      %v2201 = vadd.f32 0.0, %v2200
      %v2202 = vpop.f32.mrf.mxu0
      %v2203 = vadd.f32 0.0, %v2202
      %2204 = vmatmul.bf16.gmra.mxu0 %v706
      %v2205 = vpop.f32.mrf.mxu0
      %v2206 = vadd.f32 0.0, %v2205
      %v2207 = vpop.f32.mrf.mxu0
      %v2208 = vadd.f32 0.0, %v2207
      %2209 = vmatmul.bf16.gmra.mxu0 %v709
      %v2210 = vpop.f32.mrf.mxu0
      %v2211 = vadd.f32 0.0, %v2210
      %v2212 = vpop.f32.mrf.mxu0
      %v2213 = vadd.f32 0.0, %v2212
      %2214 = vmatmul.bf16.gmra.mxu0 %v712
      %v2215 = vpop.f32.mrf.mxu0
      %v2216 = vadd.f32 0.0, %v2215
      %v2217 = vpop.f32.mrf.mxu0
      %v2218 = vadd.f32 0.0, %v2217
      %2219 = vmatmul.bf16.gmra.mxu0 %v1191
      %v2220 = vpop.f32.mrf.mxu0
      %v2221 = vadd.f32 0.0, %v2220
      %v2222 = vpop.f32.mrf.mxu0
      %v2223 = vadd.f32 0.0, %v2222
      %2224 = vdwg.mxu0
      %v2226 = vsel %vm714, %v2130, 0
      %2228 = vmatpush.bf16.msra.mxu0 0
      %2229 = vmatpush.bf16.msra.mxu0 0
      %2230 = vmatpush.bf16.msra.mxu0 0
      %2231 = vmatpush.bf16.msra.mxu0 0
      %2232 = vmatpush.bf16.msra.mxu0 0
      %2233 = vmatpush.bf16.msra.mxu0 0
      %2234 = vmatpush.bf16.msra.mxu0 0
      %2235 = vmatpush.bf16.msra.mxu0 %v2226
      %2236 = vmatmul.bf16.gmra.mxu0 %v891
      %v2237 = vpop.f32.mrf.mxu0
      %v2238 = vadd.f32 %v2146, %v2237
      %v2239 = vpop.f32.mrf.mxu0
      %v2240 = vadd.f32 %v2148, %v2239
      %2241 = vmatmul.bf16.gmra.mxu0 %v894
      %v2242 = vpop.f32.mrf.mxu0
      %v2243 = vadd.f32 %v2151, %v2242
      %v2244 = vpop.f32.mrf.mxu0
      %v2245 = vadd.f32 %v2153, %v2244
      %2246 = vmatmul.bf16.gmra.mxu0 %v897
      %v2247 = vpop.f32.mrf.mxu0
      %v2248 = vadd.f32 %v2156, %v2247
      %v2249 = vpop.f32.mrf.mxu0
      %v2250 = vadd.f32 %v2158, %v2249
      %2251 = vmatmul.bf16.gmra.mxu0 %v900
      %v2252 = vpop.f32.mrf.mxu0
      %v2253 = vadd.f32 %v2161, %v2252
      %v2254 = vpop.f32.mrf.mxu0
      %v2255 = vadd.f32 %v2163, %v2254
      %2256 = vmatmul.bf16.gmra.mxu0 %v903
      %v2257 = vpop.f32.mrf.mxu0
      %v2258 = vadd.f32 %v2166, %v2257
      %v2259 = vpop.f32.mrf.mxu0
      %v2260 = vadd.f32 %v2168, %v2259
      %2261 = vmatmul.bf16.gmra.mxu0 %v906
      %v2262 = vpop.f32.mrf.mxu0
      %v2263 = vadd.f32 %v2171, %v2262
      %v2264 = vpop.f32.mrf.mxu0
      %v2265 = vadd.f32 %v2173, %v2264
      %2266 = vmatmul.bf16.gmra.mxu0 %v909
      %v2267 = vpop.f32.mrf.mxu0
      %v2268 = vadd.f32 %v2176, %v2267
      %v2269 = vpop.f32.mrf.mxu0
      %v2270 = vadd.f32 %v2178, %v2269
      %2271 = vmatmul.bf16.gmra.mxu0 %v912
      %v2272 = vpop.f32.mrf.mxu0
      %v2273 = vadd.f32 %v2181, %v2272
      %v2274 = vpop.f32.mrf.mxu0
      %v2275 = vadd.f32 %v2183, %v2274
      %2276 = vmatmul.bf16.gmra.mxu0 %v915
      %v2277 = vpop.f32.mrf.mxu0
      %v2278 = vadd.f32 %v2186, %v2277
      %v2279 = vpop.f32.mrf.mxu0
      %v2280 = vadd.f32 %v2188, %v2279
      %2281 = vmatmul.bf16.gmra.mxu0 %v918
      %v2282 = vpop.f32.mrf.mxu0
      %v2283 = vadd.f32 %v2191, %v2282
      %v2284 = vpop.f32.mrf.mxu0
      %v2285 = vadd.f32 %v2193, %v2284
      %2286 = vmatmul.bf16.gmra.mxu0 %v921
      %v2287 = vpop.f32.mrf.mxu0
      %v2288 = vadd.f32 %v2196, %v2287
      %v2289 = vpop.f32.mrf.mxu0
      %v2290 = vadd.f32 %v2198, %v2289
      %2291 = vmatmul.bf16.gmra.mxu0 %v924
      %v2292 = vpop.f32.mrf.mxu0
      %v2293 = vadd.f32 %v2201, %v2292
      %v2294 = vpop.f32.mrf.mxu0
      %v2295 = vadd.f32 %v2203, %v2294
      %2296 = vmatmul.bf16.gmra.mxu0 %v927
      %v2297 = vpop.f32.mrf.mxu0
      %v2298 = vadd.f32 %v2206, %v2297
      %v2299 = vpop.f32.mrf.mxu0
      %v2300 = vadd.f32 %v2208, %v2299
      %2301 = vmatmul.bf16.gmra.mxu0 %v930
      %v2302 = vpop.f32.mrf.mxu0
      %v2303 = vadd.f32 %v2211, %v2302
      %v2304 = vpop.f32.mrf.mxu0
      %v2305 = vadd.f32 %v2213, %v2304
      %2306 = vmatmul.bf16.gmra.mxu0 %v933
      %v2307 = vpop.f32.mrf.mxu0
      %v2308 = vadd.f32 %v2216, %v2307
      %v2309 = vpop.f32.mrf.mxu0
      %v2310 = vadd.f32 %v2218, %v2309
      %2311 = vmatmul.bf16.gmra.mxu0 %v1035
      %v2312 = vpop.f32.mrf.mxu0
      %v2313 = vadd.f32 %v2221, %v2312
      %v2314 = vpop.f32.mrf.mxu0
      %v2315 = vadd.f32 %v2223, %v2314
      %2316 = vdwg.mxu0
      %s2317 = scalar_lea.vmem %s1, 20
      %v2318 = vld [vmem:[%s2317] sm:$0x3]
      %v2321 = vunpack.c.l.b16 %v223
      %v2322 = vunpack.c.l.b16 %v224
      %v2323 = vpack.c.b16 %v2322, %v2321
      %v2325 = vsel %vm665, %v2323, 0
      %v2328 = vsel %vm714, %v2318, 0
      %2330 = vmatpush.bf16.msra.mxu0 0
      %2331 = vmatpush.bf16.msra.mxu0 0
      %2332 = vmatpush.bf16.msra.mxu0 0
      %2333 = vmatpush.bf16.msra.mxu0 0
      %2334 = vmatpush.bf16.msra.mxu0 0
      %2335 = vmatpush.bf16.msra.mxu0 0
      %2336 = vmatpush.bf16.msra.mxu0 0
      %2337 = vmatpush.bf16.msra.mxu0 %v2328
      %2338 = vmatmul.bf16.gmra.mxu0 %v894
      %v2339 = vpop.f32.mrf.mxu0
      %v2340 = vadd.f32 0.0, %v2339
      %v2341 = vpop.f32.mrf.mxu0
      %v2342 = vadd.f32 0.0, %v2341
      %2343 = vmatmul.bf16.gmra.mxu0 %v897
      %v2344 = vpop.f32.mrf.mxu0
      %v2345 = vadd.f32 0.0, %v2344
      %v2346 = vpop.f32.mrf.mxu0
      %v2347 = vadd.f32 0.0, %v2346
      %2348 = vmatmul.bf16.gmra.mxu0 %v900
      %v2349 = vpop.f32.mrf.mxu0
      %v2350 = vadd.f32 0.0, %v2349
      %v2351 = vpop.f32.mrf.mxu0
      %v2352 = vadd.f32 0.0, %v2351
      %2353 = vmatmul.bf16.gmra.mxu0 %v903
      %v2354 = vpop.f32.mrf.mxu0
      %v2355 = vadd.f32 0.0, %v2354
      %v2356 = vpop.f32.mrf.mxu0
      %v2357 = vadd.f32 0.0, %v2356
      %2358 = vmatmul.bf16.gmra.mxu0 %v906
      %v2359 = vpop.f32.mrf.mxu0
      %v2360 = vadd.f32 0.0, %v2359
      %v2361 = vpop.f32.mrf.mxu0
      %v2362 = vadd.f32 0.0, %v2361
      %2363 = vmatmul.bf16.gmra.mxu0 %v909
      %v2364 = vpop.f32.mrf.mxu0
      %v2365 = vadd.f32 0.0, %v2364
      %v2366 = vpop.f32.mrf.mxu0
      %v2367 = vadd.f32 0.0, %v2366
      %2368 = vmatmul.bf16.gmra.mxu0 %v912
      %v2369 = vpop.f32.mrf.mxu0
      %v2370 = vadd.f32 0.0, %v2369
      %v2371 = vpop.f32.mrf.mxu0
      %v2372 = vadd.f32 0.0, %v2371
      %2373 = vmatmul.bf16.gmra.mxu0 %v915
      %v2374 = vpop.f32.mrf.mxu0
      %v2375 = vadd.f32 0.0, %v2374
      %v2376 = vpop.f32.mrf.mxu0
      %v2377 = vadd.f32 0.0, %v2376
      %2378 = vmatmul.bf16.gmra.mxu0 %v918
      %v2379 = vpop.f32.mrf.mxu0
      %v2380 = vadd.f32 0.0, %v2379
      %v2381 = vpop.f32.mrf.mxu0
      %v2382 = vadd.f32 0.0, %v2381
      %2383 = vmatmul.bf16.gmra.mxu0 %v921
      %v2384 = vpop.f32.mrf.mxu0
      %v2385 = vadd.f32 0.0, %v2384
      %v2386 = vpop.f32.mrf.mxu0
      %v2387 = vadd.f32 0.0, %v2386
      %2388 = vmatmul.bf16.gmra.mxu0 %v924
      %v2389 = vpop.f32.mrf.mxu0
      %v2390 = vadd.f32 0.0, %v2389
      %v2391 = vpop.f32.mrf.mxu0
      %v2392 = vadd.f32 0.0, %v2391
      %2393 = vmatmul.bf16.gmra.mxu0 %v927
      %v2394 = vpop.f32.mrf.mxu0
      %v2395 = vadd.f32 0.0, %v2394
      %v2396 = vpop.f32.mrf.mxu0
      %v2397 = vadd.f32 0.0, %v2396
      %2398 = vmatmul.bf16.gmra.mxu0 %v930
      %v2399 = vpop.f32.mrf.mxu0
      %v2400 = vadd.f32 0.0, %v2399
      %v2401 = vpop.f32.mrf.mxu0
      %v2402 = vadd.f32 0.0, %v2401
      %2403 = vmatmul.bf16.gmra.mxu0 %v933
      %v2404 = vpop.f32.mrf.mxu0
      %v2405 = vadd.f32 0.0, %v2404
      %v2406 = vpop.f32.mrf.mxu0
      %v2407 = vadd.f32 0.0, %v2406
      %2408 = vmatmul.bf16.gmra.mxu0 %v1035
      %v2409 = vpop.f32.mrf.mxu0
      %v2410 = vadd.f32 0.0, %v2409
      %v2411 = vpop.f32.mrf.mxu0
      %v2412 = vadd.f32 0.0, %v2411
      %2413 = vmatmul.bf16.gmra.mxu0 %v2325
      %v2414 = vpop.f32.mrf.mxu0
      %v2415 = vadd.f32 0.0, %v2414
      %v2416 = vpop.f32.mrf.mxu0
      %v2417 = vadd.f32 0.0, %v2416
      %2418 = vdwg.mxu0
      %v2419 = vadd.f32 %v2238, %v2340
      %v2420 = vadd.f32 %v2240, %v2342
      %v2421 = vadd.f32 %v2243, %v2345
      %v2422 = vadd.f32 %v2245, %v2347
      %v2423 = vadd.f32 %v2248, %v2350
      %v2424 = vadd.f32 %v2250, %v2352
      %v2425 = vadd.f32 %v2253, %v2355
      %v2426 = vadd.f32 %v2255, %v2357
      %v2427 = vadd.f32 %v2258, %v2360
      %v2428 = vadd.f32 %v2260, %v2362
      %v2429 = vadd.f32 %v2263, %v2365
      %v2430 = vadd.f32 %v2265, %v2367
      %v2431 = vadd.f32 %v2268, %v2370
      %v2432 = vadd.f32 %v2270, %v2372
      %v2433 = vadd.f32 %v2273, %v2375
      %v2434 = vadd.f32 %v2275, %v2377
      %v2435 = vadd.f32 %v2278, %v2380
      %v2436 = vadd.f32 %v2280, %v2382
      %v2437 = vadd.f32 %v2283, %v2385
      %v2438 = vadd.f32 %v2285, %v2387
      %v2439 = vadd.f32 %v2288, %v2390
      %v2440 = vadd.f32 %v2290, %v2392
      %v2441 = vadd.f32 %v2293, %v2395
      %v2442 = vadd.f32 %v2295, %v2397
      %v2443 = vadd.f32 %v2298, %v2400
      %v2444 = vadd.f32 %v2300, %v2402
      %v2445 = vadd.f32 %v2303, %v2405
      %v2446 = vadd.f32 %v2305, %v2407
      %v2447 = vadd.f32 %v2308, %v2410
      %v2448 = vadd.f32 %v2310, %v2412
      %v2449 = vadd.f32 %v2313, %v2415
      %v2450 = vadd.f32 %v2315, %v2417
      %v2452 = vshrl.u32 %v223, 16
      %v2454 = vrot.slane %v2452, 4
      %v2455 = vshll.u32 %v223, 16
      %v2457 = vrot.slane %v2455, 5
      %v2458 = vor.u32 %v2454, %v2457
      %v2459 = vrot.slane %v2458, 4
      %v2461 = vshll.u32 %v224, 16
      %v2463 = vrot.slane %v2461, 5
      %v2464 = vsel %vm230, %v2459, %v2463
      %v2465 = vshrl.u32 %v224, 16
      %v2467 = vrot.slane %v2465, 4
      %v2468 = vor.u32 %v2467, %v2463
      %v2469 = vrot.slane %v2468, 4
      %v2471 = vshll.u32 %v225, 16
      %v2473 = vrot.slane %v2471, 5
      %v2474 = vsel %vm230, %v2469, %v2473
      %s2475 = scalar_lea.vmem %s1, 22
      %v2476 = vld [vmem:[%s2475] sm:$0x3]
      %v2477 = vunpack.c.l.b16 %v2464
      %v2478 = vunpack.c.l.b16 %v2474
      %v2479 = vpack.c.b16 %v2478, %v2477
      %v2481 = vsel %vm665, %v2479, 0
      %v2484 = vsel %vm714, %v2476, 0
      %2486 = vmatpush.bf16.msra.mxu0 0
      %2487 = vmatpush.bf16.msra.mxu0 0
      %2488 = vmatpush.bf16.msra.mxu0 0
      %2489 = vmatpush.bf16.msra.mxu0 0
      %2490 = vmatpush.bf16.msra.mxu0 0
      %2491 = vmatpush.bf16.msra.mxu0 0
      %2492 = vmatpush.bf16.msra.mxu0 0
      %2493 = vmatpush.bf16.msra.mxu0 %v2484
      %2494 = vmatmul.bf16.gmra.mxu0 %v673
      %v2495 = vpop.f32.mrf.mxu0
      %v2496 = vadd.f32 0.0, %v2495
      %v2497 = vpop.f32.mrf.mxu0
      %v2498 = vadd.f32 0.0, %v2497
      %2499 = vmatmul.bf16.gmra.mxu0 %v676
      %v2500 = vpop.f32.mrf.mxu0
      %v2501 = vadd.f32 0.0, %v2500
      %v2502 = vpop.f32.mrf.mxu0
      %v2503 = vadd.f32 0.0, %v2502
      %2504 = vmatmul.bf16.gmra.mxu0 %v679
      %v2505 = vpop.f32.mrf.mxu0
      %v2506 = vadd.f32 0.0, %v2505
      %v2507 = vpop.f32.mrf.mxu0
      %v2508 = vadd.f32 0.0, %v2507
      %2509 = vmatmul.bf16.gmra.mxu0 %v682
      %v2510 = vpop.f32.mrf.mxu0
      %v2511 = vadd.f32 0.0, %v2510
      %v2512 = vpop.f32.mrf.mxu0
      %v2513 = vadd.f32 0.0, %v2512
      %2514 = vmatmul.bf16.gmra.mxu0 %v685
      %v2515 = vpop.f32.mrf.mxu0
      %v2516 = vadd.f32 0.0, %v2515
      %v2517 = vpop.f32.mrf.mxu0
      %v2518 = vadd.f32 0.0, %v2517
      %2519 = vmatmul.bf16.gmra.mxu0 %v688
      %v2520 = vpop.f32.mrf.mxu0
      %v2521 = vadd.f32 0.0, %v2520
      %v2522 = vpop.f32.mrf.mxu0
      %v2523 = vadd.f32 0.0, %v2522
      %2524 = vmatmul.bf16.gmra.mxu0 %v691
      %v2525 = vpop.f32.mrf.mxu0
      %v2526 = vadd.f32 0.0, %v2525
      %v2527 = vpop.f32.mrf.mxu0
      %v2528 = vadd.f32 0.0, %v2527
      %2529 = vmatmul.bf16.gmra.mxu0 %v694
      %v2530 = vpop.f32.mrf.mxu0
      %v2531 = vadd.f32 0.0, %v2530
      %v2532 = vpop.f32.mrf.mxu0
      %v2533 = vadd.f32 0.0, %v2532
      %2534 = vmatmul.bf16.gmra.mxu0 %v697
      %v2535 = vpop.f32.mrf.mxu0
      %v2536 = vadd.f32 0.0, %v2535
      %v2537 = vpop.f32.mrf.mxu0
      %v2538 = vadd.f32 0.0, %v2537
      %2539 = vmatmul.bf16.gmra.mxu0 %v700
      %v2540 = vpop.f32.mrf.mxu0
      %v2541 = vadd.f32 0.0, %v2540
      %v2542 = vpop.f32.mrf.mxu0
      %v2543 = vadd.f32 0.0, %v2542
      %2544 = vmatmul.bf16.gmra.mxu0 %v703
      %v2545 = vpop.f32.mrf.mxu0
      %v2546 = vadd.f32 0.0, %v2545
      %v2547 = vpop.f32.mrf.mxu0
      %v2548 = vadd.f32 0.0, %v2547
      %2549 = vmatmul.bf16.gmra.mxu0 %v706
      %v2550 = vpop.f32.mrf.mxu0
      %v2551 = vadd.f32 0.0, %v2550
      %v2552 = vpop.f32.mrf.mxu0
      %v2553 = vadd.f32 0.0, %v2552
      %2554 = vmatmul.bf16.gmra.mxu0 %v709
      %v2555 = vpop.f32.mrf.mxu0
      %v2556 = vadd.f32 0.0, %v2555
      %v2557 = vpop.f32.mrf.mxu0
      %v2558 = vadd.f32 0.0, %v2557
      %2559 = vmatmul.bf16.gmra.mxu0 %v712
      %v2560 = vpop.f32.mrf.mxu0
      %v2561 = vadd.f32 0.0, %v2560
      %v2562 = vpop.f32.mrf.mxu0
      %v2563 = vadd.f32 0.0, %v2562
      %2564 = vmatmul.bf16.gmra.mxu0 %v1191
      %v2565 = vpop.f32.mrf.mxu0
      %v2566 = vadd.f32 0.0, %v2565
      %v2567 = vpop.f32.mrf.mxu0
      %v2568 = vadd.f32 0.0, %v2567
      %2569 = vmatmul.bf16.gmra.mxu0 %v2481
      %v2570 = vpop.f32.mrf.mxu0
      %v2571 = vadd.f32 0.0, %v2570
      %v2572 = vpop.f32.mrf.mxu0
      %v2573 = vadd.f32 0.0, %v2572
      %2574 = vdwg.mxu0
      %v2575 = vadd.f32 %v2419, %v2496
      %v2576 = vadd.f32 %v2420, %v2498
      %v2577 = vadd.f32 %v2421, %v2501
      %v2578 = vadd.f32 %v2422, %v2503
      %v2579 = vadd.f32 %v2423, %v2506
      %v2580 = vadd.f32 %v2424, %v2508
      %v2581 = vadd.f32 %v2425, %v2511
      %v2582 = vadd.f32 %v2426, %v2513
      %v2583 = vadd.f32 %v2427, %v2516
      %v2584 = vadd.f32 %v2428, %v2518
      %v2585 = vadd.f32 %v2429, %v2521
      %v2586 = vadd.f32 %v2430, %v2523
      %v2587 = vadd.f32 %v2431, %v2526
      %v2588 = vadd.f32 %v2432, %v2528
      %v2589 = vadd.f32 %v2433, %v2531
      %v2590 = vadd.f32 %v2434, %v2533
      %v2591 = vadd.f32 %v2435, %v2536
      %v2592 = vadd.f32 %v2436, %v2538
      %v2593 = vadd.f32 %v2437, %v2541
      %v2594 = vadd.f32 %v2438, %v2543
      %v2595 = vadd.f32 %v2439, %v2546
      %v2596 = vadd.f32 %v2440, %v2548
      %v2597 = vadd.f32 %v2441, %v2551
      %v2598 = vadd.f32 %v2442, %v2553
      %v2599 = vadd.f32 %v2443, %v2556
      %v2600 = vadd.f32 %v2444, %v2558
      %v2601 = vadd.f32 %v2445, %v2561
      %v2602 = vadd.f32 %v2446, %v2563
      %v2603 = vadd.f32 %v2447, %v2566
      %v2604 = vadd.f32 %v2448, %v2568
      %v2605 = vadd.f32 %v2449, %v2571
      %v2606 = vadd.f32 %v2450, %v2573
      %v2607 = vadd.f32 %v2575, %v1318
      %v2608 = vadd.f32 %v2576, %v1318
      %v2609 = vadd.f32 %v2577, %v1318
      %v2610 = vadd.f32 %v2578, %v1318
      %v2611 = vadd.f32 %v2579, %v1318
      %v2612 = vadd.f32 %v2580, %v1318
      %v2613 = vadd.f32 %v2581, %v1318
      %v2614 = vadd.f32 %v2582, %v1318
      %v2615 = vadd.f32 %v2583, %v1318
      %v2616 = vadd.f32 %v2584, %v1318
      %v2617 = vadd.f32 %v2585, %v1318
      %v2618 = vadd.f32 %v2586, %v1318
      %v2619 = vadd.f32 %v2587, %v1318
      %v2620 = vadd.f32 %v2588, %v1318
      %v2621 = vadd.f32 %v2589, %v1318
      %v2622 = vadd.f32 %v2590, %v1318
      %v2623 = vadd.f32 %v2591, %v1318
      %v2624 = vadd.f32 %v2592, %v1318
      %v2625 = vadd.f32 %v2593, %v1318
      %v2626 = vadd.f32 %v2594, %v1318
      %v2627 = vadd.f32 %v2595, %v1318
      %v2628 = vadd.f32 %v2596, %v1318
      %v2629 = vadd.f32 %v2597, %v1318
      %v2630 = vadd.f32 %v2598, %v1318
      %v2631 = vadd.f32 %v2599, %v1318
      %v2632 = vadd.f32 %v2600, %v1318
      %v2633 = vadd.f32 %v2601, %v1318
      %v2634 = vadd.f32 %v2602, %v1318
      %v2635 = vadd.f32 %v2603, %v1318
      %v2636 = vadd.f32 %v2604, %v1318
      %v2637 = vadd.f32 %v2605, %v1318
      %v2638 = vadd.f32 %v2606, %v1318
      %s2639 = scalar_lea.vmem %s1, 24
      %v2640 = vld [vmem:[%s2639] sm:$0x3]
      %s2641 = scalar_lea.vmem %s1, 26
      %v2642 = vld [vmem:[%s2641] sm:$0x3]
      %v2644 = vsel %vm714, %v2642, 0
      %2646 = vmatpush.bf16.msra.mxu0 0
      %2647 = vmatpush.bf16.msra.mxu0 0
      %2648 = vmatpush.bf16.msra.mxu0 0
      %2649 = vmatpush.bf16.msra.mxu0 0
      %2650 = vmatpush.bf16.msra.mxu0 0
      %2651 = vmatpush.bf16.msra.mxu0 0
      %2652 = vmatpush.bf16.msra.mxu0 0
      %2653 = vmatpush.bf16.msra.mxu0 %v2644
      %2654 = vmatmul.bf16.gmra.mxu0 %v1539
      %v2655 = vpop.f32.mrf.mxu0
      %v2656 = vadd.f32 0.0, %v2655
      %v2657 = vpop.f32.mrf.mxu0
      %v2658 = vadd.f32 0.0, %v2657
      %2659 = vmatmul.bf16.gmra.mxu0 %v1542
      %v2660 = vpop.f32.mrf.mxu0
      %v2661 = vadd.f32 0.0, %v2660
      %v2662 = vpop.f32.mrf.mxu0
      %v2663 = vadd.f32 0.0, %v2662
      %2664 = vmatmul.bf16.gmra.mxu0 %v1545
      %v2665 = vpop.f32.mrf.mxu0
      %v2666 = vadd.f32 0.0, %v2665
      %v2667 = vpop.f32.mrf.mxu0
      %v2668 = vadd.f32 0.0, %v2667
      %2669 = vmatmul.bf16.gmra.mxu0 %v1548
      %v2670 = vpop.f32.mrf.mxu0
      %v2671 = vadd.f32 0.0, %v2670
      %v2672 = vpop.f32.mrf.mxu0
      %v2673 = vadd.f32 0.0, %v2672
      %2674 = vmatmul.bf16.gmra.mxu0 %v1551
      %v2675 = vpop.f32.mrf.mxu0
      %v2676 = vadd.f32 0.0, %v2675
      %v2677 = vpop.f32.mrf.mxu0
      %v2678 = vadd.f32 0.0, %v2677
      %2679 = vmatmul.bf16.gmra.mxu0 %v1554
      %v2680 = vpop.f32.mrf.mxu0
      %v2681 = vadd.f32 0.0, %v2680
      %v2682 = vpop.f32.mrf.mxu0
      %v2683 = vadd.f32 0.0, %v2682
      %2684 = vmatmul.bf16.gmra.mxu0 %v1557
      %v2685 = vpop.f32.mrf.mxu0
      %v2686 = vadd.f32 0.0, %v2685
      %v2687 = vpop.f32.mrf.mxu0
      %v2688 = vadd.f32 0.0, %v2687
      %2689 = vmatmul.bf16.gmra.mxu0 %v1560
      %v2690 = vpop.f32.mrf.mxu0
      %v2691 = vadd.f32 0.0, %v2690
      %v2692 = vpop.f32.mrf.mxu0
      %v2693 = vadd.f32 0.0, %v2692
      %2694 = vmatmul.bf16.gmra.mxu0 %v1563
      %v2695 = vpop.f32.mrf.mxu0
      %v2696 = vadd.f32 0.0, %v2695
      %v2697 = vpop.f32.mrf.mxu0
      %v2698 = vadd.f32 0.0, %v2697
      %2699 = vmatmul.bf16.gmra.mxu0 %v1566
      %v2700 = vpop.f32.mrf.mxu0
      %v2701 = vadd.f32 0.0, %v2700
      %v2702 = vpop.f32.mrf.mxu0
      %v2703 = vadd.f32 0.0, %v2702
      %2704 = vmatmul.bf16.gmra.mxu0 %v1569
      %v2705 = vpop.f32.mrf.mxu0
      %v2706 = vadd.f32 0.0, %v2705
      %v2707 = vpop.f32.mrf.mxu0
      %v2708 = vadd.f32 0.0, %v2707
      %2709 = vmatmul.bf16.gmra.mxu0 %v1572
      %v2710 = vpop.f32.mrf.mxu0
      %v2711 = vadd.f32 0.0, %v2710
      %v2712 = vpop.f32.mrf.mxu0
      %v2713 = vadd.f32 0.0, %v2712
      %2714 = vmatmul.bf16.gmra.mxu0 %v1575
      %v2715 = vpop.f32.mrf.mxu0
      %v2716 = vadd.f32 0.0, %v2715
      %v2717 = vpop.f32.mrf.mxu0
      %v2718 = vadd.f32 0.0, %v2717
      %2719 = vmatmul.bf16.gmra.mxu0 %v1578
      %v2720 = vpop.f32.mrf.mxu0
      %v2721 = vadd.f32 0.0, %v2720
      %v2722 = vpop.f32.mrf.mxu0
      %v2723 = vadd.f32 0.0, %v2722
      %2724 = vmatmul.bf16.gmra.mxu0 %v1581
      %v2725 = vpop.f32.mrf.mxu0
      %v2726 = vadd.f32 0.0, %v2725
      %v2727 = vpop.f32.mrf.mxu0
      %v2728 = vadd.f32 0.0, %v2727
      %2729 = vmatmul.bf16.gmra.mxu0 %v1907
      %v2730 = vpop.f32.mrf.mxu0
      %v2731 = vadd.f32 0.0, %v2730
      %v2732 = vpop.f32.mrf.mxu0
      %v2733 = vadd.f32 0.0, %v2732
      %2734 = vdwg.mxu0
      %v2736 = vsel %vm714, %v2640, 0
      %2738 = vmatpush.bf16.msra.mxu0 0
      %2739 = vmatpush.bf16.msra.mxu0 0
      %2740 = vmatpush.bf16.msra.mxu0 0
      %2741 = vmatpush.bf16.msra.mxu0 0
      %2742 = vmatpush.bf16.msra.mxu0 0
      %2743 = vmatpush.bf16.msra.mxu0 0
      %2744 = vmatpush.bf16.msra.mxu0 0
      %2745 = vmatpush.bf16.msra.mxu0 %v2736
      %2746 = vmatmul.bf16.gmra.mxu0 %v670
      %v2747 = vpop.f32.mrf.mxu0
      %v2748 = vadd.f32 %v2656, %v2747
      %v2749 = vpop.f32.mrf.mxu0
      %v2750 = vadd.f32 %v2658, %v2749
      %2751 = vmatmul.bf16.gmra.mxu0 %v673
      %v2752 = vpop.f32.mrf.mxu0
      %v2753 = vadd.f32 %v2661, %v2752
      %v2754 = vpop.f32.mrf.mxu0
      %v2755 = vadd.f32 %v2663, %v2754
      %2756 = vmatmul.bf16.gmra.mxu0 %v676
      %v2757 = vpop.f32.mrf.mxu0
      %v2758 = vadd.f32 %v2666, %v2757
      %v2759 = vpop.f32.mrf.mxu0
      %v2760 = vadd.f32 %v2668, %v2759
      %2761 = vmatmul.bf16.gmra.mxu0 %v679
      %v2762 = vpop.f32.mrf.mxu0
      %v2763 = vadd.f32 %v2671, %v2762
      %v2764 = vpop.f32.mrf.mxu0
      %v2765 = vadd.f32 %v2673, %v2764
      %2766 = vmatmul.bf16.gmra.mxu0 %v682
      %v2767 = vpop.f32.mrf.mxu0
      %v2768 = vadd.f32 %v2676, %v2767
      %v2769 = vpop.f32.mrf.mxu0
      %v2770 = vadd.f32 %v2678, %v2769
      %2771 = vmatmul.bf16.gmra.mxu0 %v685
      %v2772 = vpop.f32.mrf.mxu0
      %v2773 = vadd.f32 %v2681, %v2772
      %v2774 = vpop.f32.mrf.mxu0
      %v2775 = vadd.f32 %v2683, %v2774
      %2776 = vmatmul.bf16.gmra.mxu0 %v688
      %v2777 = vpop.f32.mrf.mxu0
      %v2778 = vadd.f32 %v2686, %v2777
      %v2779 = vpop.f32.mrf.mxu0
      %v2780 = vadd.f32 %v2688, %v2779
      %2781 = vmatmul.bf16.gmra.mxu0 %v691
      %v2782 = vpop.f32.mrf.mxu0
      %v2783 = vadd.f32 %v2691, %v2782
      %v2784 = vpop.f32.mrf.mxu0
      %v2785 = vadd.f32 %v2693, %v2784
      %2786 = vmatmul.bf16.gmra.mxu0 %v694
      %v2787 = vpop.f32.mrf.mxu0
      %v2788 = vadd.f32 %v2696, %v2787
      %v2789 = vpop.f32.mrf.mxu0
      %v2790 = vadd.f32 %v2698, %v2789
      %2791 = vmatmul.bf16.gmra.mxu0 %v697
      %v2792 = vpop.f32.mrf.mxu0
      %v2793 = vadd.f32 %v2701, %v2792
      %v2794 = vpop.f32.mrf.mxu0
      %v2795 = vadd.f32 %v2703, %v2794
      %2796 = vmatmul.bf16.gmra.mxu0 %v700
      %v2797 = vpop.f32.mrf.mxu0
      %v2798 = vadd.f32 %v2706, %v2797
      %v2799 = vpop.f32.mrf.mxu0
      %v2800 = vadd.f32 %v2708, %v2799
      %2801 = vmatmul.bf16.gmra.mxu0 %v703
      %v2802 = vpop.f32.mrf.mxu0
      %v2803 = vadd.f32 %v2711, %v2802
      %v2804 = vpop.f32.mrf.mxu0
      %v2805 = vadd.f32 %v2713, %v2804
      %2806 = vmatmul.bf16.gmra.mxu0 %v706
      %v2807 = vpop.f32.mrf.mxu0
      %v2808 = vadd.f32 %v2716, %v2807
      %v2809 = vpop.f32.mrf.mxu0
      %v2810 = vadd.f32 %v2718, %v2809
      %2811 = vmatmul.bf16.gmra.mxu0 %v709
      %v2812 = vpop.f32.mrf.mxu0
      %v2813 = vadd.f32 %v2721, %v2812
      %v2814 = vpop.f32.mrf.mxu0
      %v2815 = vadd.f32 %v2723, %v2814
      %2816 = vmatmul.bf16.gmra.mxu0 %v712
      %v2817 = vpop.f32.mrf.mxu0
      %v2818 = vadd.f32 %v2726, %v2817
      %v2819 = vpop.f32.mrf.mxu0
      %v2820 = vadd.f32 %v2728, %v2819
      %2821 = vmatmul.bf16.gmra.mxu0 %v1191
      %v2822 = vpop.f32.mrf.mxu0
      %v2823 = vadd.f32 %v2731, %v2822
      %v2824 = vpop.f32.mrf.mxu0
      %v2825 = vadd.f32 %v2733, %v2824
      %2826 = vdwg.mxu0
      %s2827 = scalar_lea.vmem %s1, 28
      %v2828 = vld [vmem:[%s2827] sm:$0x3]
      %v2830 = vsel %vm714, %v2828, 0
      %2832 = vmatpush.bf16.msra.mxu0 0
      %2833 = vmatpush.bf16.msra.mxu0 0
      %2834 = vmatpush.bf16.msra.mxu0 0
      %2835 = vmatpush.bf16.msra.mxu0 0
      %2836 = vmatpush.bf16.msra.mxu0 0
      %2837 = vmatpush.bf16.msra.mxu0 0
      %2838 = vmatpush.bf16.msra.mxu0 0
      %2839 = vmatpush.bf16.msra.mxu0 %v2830
      %2840 = vmatmul.bf16.gmra.mxu0 %v673
      %v2841 = vpop.f32.mrf.mxu0
      %v2842 = vadd.f32 0.0, %v2841
      %v2843 = vpop.f32.mrf.mxu0
      %v2844 = vadd.f32 0.0, %v2843
      %2845 = vmatmul.bf16.gmra.mxu0 %v676
      %v2846 = vpop.f32.mrf.mxu0
      %v2847 = vadd.f32 0.0, %v2846
      %v2848 = vpop.f32.mrf.mxu0
      %v2849 = vadd.f32 0.0, %v2848
      %2850 = vmatmul.bf16.gmra.mxu0 %v679
      %v2851 = vpop.f32.mrf.mxu0
      %v2852 = vadd.f32 0.0, %v2851
      %v2853 = vpop.f32.mrf.mxu0
      %v2854 = vadd.f32 0.0, %v2853
      %2855 = vmatmul.bf16.gmra.mxu0 %v682
      %v2856 = vpop.f32.mrf.mxu0
      %v2857 = vadd.f32 0.0, %v2856
      %v2858 = vpop.f32.mrf.mxu0
      %v2859 = vadd.f32 0.0, %v2858
      %2860 = vmatmul.bf16.gmra.mxu0 %v685
      %v2861 = vpop.f32.mrf.mxu0
      %v2862 = vadd.f32 0.0, %v2861
      %v2863 = vpop.f32.mrf.mxu0
      %v2864 = vadd.f32 0.0, %v2863
      %2865 = vmatmul.bf16.gmra.mxu0 %v688
      %v2866 = vpop.f32.mrf.mxu0
      %v2867 = vadd.f32 0.0, %v2866
      %v2868 = vpop.f32.mrf.mxu0
      %v2869 = vadd.f32 0.0, %v2868
      %2870 = vmatmul.bf16.gmra.mxu0 %v691
      %v2871 = vpop.f32.mrf.mxu0
      %v2872 = vadd.f32 0.0, %v2871
      %v2873 = vpop.f32.mrf.mxu0
      %v2874 = vadd.f32 0.0, %v2873
      %2875 = vmatmul.bf16.gmra.mxu0 %v694
      %v2876 = vpop.f32.mrf.mxu0
      %v2877 = vadd.f32 0.0, %v2876
      %v2878 = vpop.f32.mrf.mxu0
      %v2879 = vadd.f32 0.0, %v2878
      %2880 = vmatmul.bf16.gmra.mxu0 %v697
      %v2881 = vpop.f32.mrf.mxu0
      %v2882 = vadd.f32 0.0, %v2881
      %v2883 = vpop.f32.mrf.mxu0
      %v2884 = vadd.f32 0.0, %v2883
      %2885 = vmatmul.bf16.gmra.mxu0 %v700
      %v2886 = vpop.f32.mrf.mxu0
      %v2887 = vadd.f32 0.0, %v2886
      %v2888 = vpop.f32.mrf.mxu0
      %v2889 = vadd.f32 0.0, %v2888
      %2890 = vmatmul.bf16.gmra.mxu0 %v703
      %v2891 = vpop.f32.mrf.mxu0
      %v2892 = vadd.f32 0.0, %v2891
      %v2893 = vpop.f32.mrf.mxu0
      %v2894 = vadd.f32 0.0, %v2893
      %2895 = vmatmul.bf16.gmra.mxu0 %v706
      %v2896 = vpop.f32.mrf.mxu0
      %v2897 = vadd.f32 0.0, %v2896
      %v2898 = vpop.f32.mrf.mxu0
      %v2899 = vadd.f32 0.0, %v2898
      %2900 = vmatmul.bf16.gmra.mxu0 %v709
      %v2901 = vpop.f32.mrf.mxu0
      %v2902 = vadd.f32 0.0, %v2901
      %v2903 = vpop.f32.mrf.mxu0
      %v2904 = vadd.f32 0.0, %v2903
      %2905 = vmatmul.bf16.gmra.mxu0 %v712
      %v2906 = vpop.f32.mrf.mxu0
      %v2907 = vadd.f32 0.0, %v2906
      %v2908 = vpop.f32.mrf.mxu0
      %v2909 = vadd.f32 0.0, %v2908
      %2910 = vmatmul.bf16.gmra.mxu0 %v1191
      %v2911 = vpop.f32.mrf.mxu0
      %v2912 = vadd.f32 0.0, %v2911
      %v2913 = vpop.f32.mrf.mxu0
      %v2914 = vadd.f32 0.0, %v2913
      %2915 = vmatmul.bf16.gmra.mxu0 %v2481
      %v2916 = vpop.f32.mrf.mxu0
      %v2917 = vadd.f32 0.0, %v2916
      %v2918 = vpop.f32.mrf.mxu0
      %v2919 = vadd.f32 0.0, %v2918
      %2920 = vdwg.mxu0
      %v2921 = vadd.f32 %v2748, %v2842
      %v2922 = vadd.f32 %v2750, %v2844
      %v2923 = vadd.f32 %v2753, %v2847
      %v2924 = vadd.f32 %v2755, %v2849
      %v2925 = vadd.f32 %v2758, %v2852
      %v2926 = vadd.f32 %v2760, %v2854
      %v2927 = vadd.f32 %v2763, %v2857
      %v2928 = vadd.f32 %v2765, %v2859
      %v2929 = vadd.f32 %v2768, %v2862
      %v2930 = vadd.f32 %v2770, %v2864
      %v2931 = vadd.f32 %v2773, %v2867
      %v2932 = vadd.f32 %v2775, %v2869
      %v2933 = vadd.f32 %v2778, %v2872
      %v2934 = vadd.f32 %v2780, %v2874
      %v2935 = vadd.f32 %v2783, %v2877
      %v2936 = vadd.f32 %v2785, %v2879
      %v2937 = vadd.f32 %v2788, %v2882
      %v2938 = vadd.f32 %v2790, %v2884
      %v2939 = vadd.f32 %v2793, %v2887
      %v2940 = vadd.f32 %v2795, %v2889
      %v2941 = vadd.f32 %v2798, %v2892
      %v2942 = vadd.f32 %v2800, %v2894
      %v2943 = vadd.f32 %v2803, %v2897
      %v2944 = vadd.f32 %v2805, %v2899
      %v2945 = vadd.f32 %v2808, %v2902
      %v2946 = vadd.f32 %v2810, %v2904
      %v2947 = vadd.f32 %v2813, %v2907
      %v2948 = vadd.f32 %v2815, %v2909
      %v2949 = vadd.f32 %v2818, %v2912
      %v2950 = vadd.f32 %v2820, %v2914
      %v2951 = vadd.f32 %v2823, %v2917
      %v2952 = vadd.f32 %v2825, %v2919
      %v2954 = vrot.slane %v223, 5
      %v2955 = vrot.slane %v2954, 4
      %v2956 = vrot.slane %v224, 5
      %v2957 = vsel %vm1372, %v2955, %v2956
      %v2958 = vrot.slane %v2956, 4
      %v2959 = vrot.slane %v225, 5
      %v2960 = vsel %vm1372, %v2958, %v2959
      %s2961 = scalar_lea.vmem %s1, 30
      %v2962 = vld [vmem:[%s2961] sm:$0x3]
      %v2963 = vunpack.c.l.b16 %v2957
      %v2964 = vunpack.c.l.b16 %v2960
      %v2965 = vpack.c.b16 %v2964, %v2963
      %v2967 = vsel %vm665, %v2965, 0
      %v2970 = vsel %vm714, %v2962, 0
      %2972 = vmatpush.bf16.msra.mxu0 0
      %2973 = vmatpush.bf16.msra.mxu0 0
      %2974 = vmatpush.bf16.msra.mxu0 0
      %2975 = vmatpush.bf16.msra.mxu0 0
      %2976 = vmatpush.bf16.msra.mxu0 0
      %2977 = vmatpush.bf16.msra.mxu0 0
      %2978 = vmatpush.bf16.msra.mxu0 0
      %2979 = vmatpush.bf16.msra.mxu0 %v2970
      %2980 = vmatmul.bf16.gmra.mxu0 %v1542
      %v2981 = vpop.f32.mrf.mxu0
      %v2982 = vadd.f32 0.0, %v2981
      %v2983 = vpop.f32.mrf.mxu0
      %v2984 = vadd.f32 0.0, %v2983
      %2985 = vmatmul.bf16.gmra.mxu0 %v1545
      %v2986 = vpop.f32.mrf.mxu0
      %v2987 = vadd.f32 0.0, %v2986
      %v2988 = vpop.f32.mrf.mxu0
      %v2989 = vadd.f32 0.0, %v2988
      %2990 = vmatmul.bf16.gmra.mxu0 %v1548
      %v2991 = vpop.f32.mrf.mxu0
      %v2992 = vadd.f32 0.0, %v2991
      %v2993 = vpop.f32.mrf.mxu0
      %v2994 = vadd.f32 0.0, %v2993
      %2995 = vmatmul.bf16.gmra.mxu0 %v1551
      %v2996 = vpop.f32.mrf.mxu0
      %v2997 = vadd.f32 0.0, %v2996
      %v2998 = vpop.f32.mrf.mxu0
      %v2999 = vadd.f32 0.0, %v2998
      %3000 = vmatmul.bf16.gmra.mxu0 %v1554
      %v3001 = vpop.f32.mrf.mxu0
      %v3002 = vadd.f32 0.0, %v3001
      %v3003 = vpop.f32.mrf.mxu0
      %v3004 = vadd.f32 0.0, %v3003
      %3005 = vmatmul.bf16.gmra.mxu0 %v1557
      %v3006 = vpop.f32.mrf.mxu0
      %v3007 = vadd.f32 0.0, %v3006
      %v3008 = vpop.f32.mrf.mxu0
      %v3009 = vadd.f32 0.0, %v3008
      %3010 = vmatmul.bf16.gmra.mxu0 %v1560
      %v3011 = vpop.f32.mrf.mxu0
      %v3012 = vadd.f32 0.0, %v3011
      %v3013 = vpop.f32.mrf.mxu0
      %v3014 = vadd.f32 0.0, %v3013
      %3015 = vmatmul.bf16.gmra.mxu0 %v1563
      %v3016 = vpop.f32.mrf.mxu0
      %v3017 = vadd.f32 0.0, %v3016
      %v3018 = vpop.f32.mrf.mxu0
      %v3019 = vadd.f32 0.0, %v3018
      %3020 = vmatmul.bf16.gmra.mxu0 %v1566
      %v3021 = vpop.f32.mrf.mxu0
      %v3022 = vadd.f32 0.0, %v3021
      %v3023 = vpop.f32.mrf.mxu0
      %v3024 = vadd.f32 0.0, %v3023
      %3025 = vmatmul.bf16.gmra.mxu0 %v1569
      %v3026 = vpop.f32.mrf.mxu0
      %v3027 = vadd.f32 0.0, %v3026
      %v3028 = vpop.f32.mrf.mxu0
      %v3029 = vadd.f32 0.0, %v3028
      %3030 = vmatmul.bf16.gmra.mxu0 %v1572
      %v3031 = vpop.f32.mrf.mxu0
      %v3032 = vadd.f32 0.0, %v3031
      %v3033 = vpop.f32.mrf.mxu0
      %v3034 = vadd.f32 0.0, %v3033
      %3035 = vmatmul.bf16.gmra.mxu0 %v1575
      %v3036 = vpop.f32.mrf.mxu0
      %v3037 = vadd.f32 0.0, %v3036
      %v3038 = vpop.f32.mrf.mxu0
      %v3039 = vadd.f32 0.0, %v3038
      %3040 = vmatmul.bf16.gmra.mxu0 %v1578
      %v3041 = vpop.f32.mrf.mxu0
      %v3042 = vadd.f32 0.0, %v3041
      %v3043 = vpop.f32.mrf.mxu0
      %v3044 = vadd.f32 0.0, %v3043
      %3045 = vmatmul.bf16.gmra.mxu0 %v1581
      %v3046 = vpop.f32.mrf.mxu0
      %v3047 = vadd.f32 0.0, %v3046
      %v3048 = vpop.f32.mrf.mxu0
      %v3049 = vadd.f32 0.0, %v3048
      %3050 = vmatmul.bf16.gmra.mxu0 %v1907
      %v3051 = vpop.f32.mrf.mxu0
      %v3052 = vadd.f32 0.0, %v3051
      %v3053 = vpop.f32.mrf.mxu0
      %v3054 = vadd.f32 0.0, %v3053
      %3055 = vmatmul.bf16.gmra.mxu0 %v2967
      %v3056 = vpop.f32.mrf.mxu0
      %v3057 = vadd.f32 0.0, %v3056
      %v3058 = vpop.f32.mrf.mxu0
      %v3059 = vadd.f32 0.0, %v3058
      %3060 = vdwg.mxu0
      %v3061 = vadd.f32 %v2921, %v2982
      %v3062 = vadd.f32 %v2922, %v2984
      %v3063 = vadd.f32 %v2923, %v2987
      %v3064 = vadd.f32 %v2924, %v2989
      %v3065 = vadd.f32 %v2925, %v2992
      %v3066 = vadd.f32 %v2926, %v2994
      %v3067 = vadd.f32 %v2927, %v2997
      %v3068 = vadd.f32 %v2928, %v2999
      %v3069 = vadd.f32 %v2929, %v3002
      %v3070 = vadd.f32 %v2930, %v3004
      %v3071 = vadd.f32 %v2931, %v3007
      %v3072 = vadd.f32 %v2932, %v3009
      %v3073 = vadd.f32 %v2933, %v3012
      %v3074 = vadd.f32 %v2934, %v3014
      %v3075 = vadd.f32 %v2935, %v3017
      %v3076 = vadd.f32 %v2936, %v3019
      %v3077 = vadd.f32 %v2937, %v3022
      %v3078 = vadd.f32 %v2938, %v3024
      %v3079 = vadd.f32 %v2939, %v3027
      %v3080 = vadd.f32 %v2940, %v3029
      %v3081 = vadd.f32 %v2941, %v3032
      %v3082 = vadd.f32 %v2942, %v3034
      %v3083 = vadd.f32 %v2943, %v3037
      %v3084 = vadd.f32 %v2944, %v3039
      %v3085 = vadd.f32 %v2945, %v3042
      %v3086 = vadd.f32 %v2946, %v3044
      %v3087 = vadd.f32 %v2947, %v3047
      %v3088 = vadd.f32 %v2948, %v3049
      %v3089 = vadd.f32 %v2949, %v3052
      %v3090 = vadd.f32 %v2950, %v3054
      %v3091 = vadd.f32 %v2951, %v3057
      %v3092 = vadd.f32 %v2952, %v3059
      %v3093 = vadd.f32 %v3061, %v1318
      %v3094 = vadd.f32 %v3062, %v1318
      %v3095 = vadd.f32 %v3063, %v1318
      %v3096 = vadd.f32 %v3064, %v1318
      %v3097 = vadd.f32 %v3065, %v1318
      %v3098 = vadd.f32 %v3066, %v1318
      %v3099 = vadd.f32 %v3067, %v1318
      %v3100 = vadd.f32 %v3068, %v1318
      %v3101 = vadd.f32 %v3069, %v1318
      %v3102 = vadd.f32 %v3070, %v1318
      %v3103 = vadd.f32 %v3071, %v1318
      %v3104 = vadd.f32 %v3072, %v1318
      %v3105 = vadd.f32 %v3073, %v1318
      %v3106 = vadd.f32 %v3074, %v1318
      %v3107 = vadd.f32 %v3075, %v1318
      %v3108 = vadd.f32 %v3076, %v1318
      %v3109 = vadd.f32 %v3077, %v1318
      %v3110 = vadd.f32 %v3078, %v1318
      %v3111 = vadd.f32 %v3079, %v1318
      %v3112 = vadd.f32 %v3080, %v1318
      %v3113 = vadd.f32 %v3081, %v1318
      %v3114 = vadd.f32 %v3082, %v1318
      %v3115 = vadd.f32 %v3083, %v1318
      %v3116 = vadd.f32 %v3084, %v1318
      %v3117 = vadd.f32 %v3085, %v1318
      %v3118 = vadd.f32 %v3086, %v1318
      %v3119 = vadd.f32 %v3087, %v1318
      %v3120 = vadd.f32 %v3088, %v1318
      %v3121 = vadd.f32 %v3089, %v1318
      %v3122 = vadd.f32 %v3090, %v1318
      %v3123 = vadd.f32 %v3091, %v1318
      %v3124 = vadd.f32 %v3092, %v1318
      %s3125 = scalar_lea.vmem %s170, 32
      %3126 = vst [vmem:[%s3125] sm:$0xff] %v2607
      %3127 = vst [vmem:[%s3125 + $0x8] sm:$0xff] %v3093
      %3128 = vst [vmem:[%s3125 + $0x10] sm:$0xff] %v2608
      %3129 = vst [vmem:[%s3125 + $0x18] sm:$0xff] %v3094
      %3130 = vst [vmem:[%s3125 + $0x40] sm:$0xff] %v2609
      %3131 = vst [vmem:[%s3125 + $0x48] sm:$0xff] %v3095
      %3132 = vst [vmem:[%s3125 + $0x50] sm:$0xff] %v2610
      %3133 = vst [vmem:[%s3125 + $0x58] sm:$0xff] %v3096
      %3134 = vst [vmem:[%s3125 + $0x80] sm:$0xff] %v2611
      %3135 = vst [vmem:[%s3125 + $0x88] sm:$0xff] %v3097
      %3136 = vst [vmem:[%s3125 + $0x90] sm:$0xff] %v2612
      %3137 = vst [vmem:[%s3125 + $0x98] sm:$0xff] %v3098
      %3138 = vst [vmem:[%s3125 + $0xc0] sm:$0xff] %v2613
      %3139 = vst [vmem:[%s3125 + $0xc8] sm:$0xff] %v3099
      %3140 = vst [vmem:[%s3125 + $0xd0] sm:$0xff] %v2614
      %3141 = vst [vmem:[%s3125 + $0xd8] sm:$0xff] %v3100
      %3142 = vst [vmem:[%s3125 + $0x100] sm:$0xff] %v2615
      %3143 = vst [vmem:[%s3125 + $0x108] sm:$0xff] %v3101
      %3144 = vst [vmem:[%s3125 + $0x110] sm:$0xff] %v2616
      %3145 = vst [vmem:[%s3125 + $0x118] sm:$0xff] %v3102
      %3146 = vst [vmem:[%s3125 + $0x140] sm:$0xff] %v2617
      %3147 = vst [vmem:[%s3125 + $0x148] sm:$0xff] %v3103
      %3148 = vst [vmem:[%s3125 + $0x150] sm:$0xff] %v2618
      %3149 = vst [vmem:[%s3125 + $0x158] sm:$0xff] %v3104
      %3150 = vst [vmem:[%s3125 + $0x180] sm:$0xff] %v2619
      %3151 = vst [vmem:[%s3125 + $0x188] sm:$0xff] %v3105
      %3152 = vst [vmem:[%s3125 + $0x190] sm:$0xff] %v2620
      %3153 = vst [vmem:[%s3125 + $0x198] sm:$0xff] %v3106
      %3154 = vst [vmem:[%s3125 + $0x1c0] sm:$0xff] %v2621
      %3155 = vst [vmem:[%s3125 + $0x1c8] sm:$0xff] %v3107
      %3156 = vst [vmem:[%s3125 + $0x1d0] sm:$0xff] %v2622
      %3157 = vst [vmem:[%s3125 + $0x1d8] sm:$0xff] %v3108
      %3158 = vst [vmem:[%s3125 + $0x200] sm:$0xff] %v2623
      %3159 = vst [vmem:[%s3125 + $0x208] sm:$0xff] %v3109
      %3160 = vst [vmem:[%s3125 + $0x210] sm:$0xff] %v2624
      %3161 = vst [vmem:[%s3125 + $0x218] sm:$0xff] %v3110
      %3162 = vst [vmem:[%s3125 + $0x240] sm:$0xff] %v2625
      %3163 = vst [vmem:[%s3125 + $0x248] sm:$0xff] %v3111
      %3164 = vst [vmem:[%s3125 + $0x250] sm:$0xff] %v2626
      %3165 = vst [vmem:[%s3125 + $0x258] sm:$0xff] %v3112
      %3166 = vst [vmem:[%s3125 + $0x280] sm:$0xff] %v2627
      %3167 = vst [vmem:[%s3125 + $0x288] sm:$0xff] %v3113
      %3168 = vst [vmem:[%s3125 + $0x290] sm:$0xff] %v2628
      %3169 = vst [vmem:[%s3125 + $0x298] sm:$0xff] %v3114
      %3170 = vst [vmem:[%s3125 + $0x2c0] sm:$0xff] %v2629
      %3171 = vst [vmem:[%s3125 + $0x2c8] sm:$0xff] %v3115
      %3172 = vst [vmem:[%s3125 + $0x2d0] sm:$0xff] %v2630
      %3173 = vst [vmem:[%s3125 + $0x2d8] sm:$0xff] %v3116
      %3174 = vst [vmem:[%s3125 + $0x300] sm:$0xff] %v2631
      %3175 = vst [vmem:[%s3125 + $0x308] sm:$0xff] %v3117
      %3176 = vst [vmem:[%s3125 + $0x310] sm:$0xff] %v2632
      %3177 = vst [vmem:[%s3125 + $0x318] sm:$0xff] %v3118
      %3178 = vst [vmem:[%s3125 + $0x340] sm:$0xff] %v2633
      %3179 = vst [vmem:[%s3125 + $0x348] sm:$0xff] %v3119
      %3180 = vst [vmem:[%s3125 + $0x350] sm:$0xff] %v2634
      %3181 = vst [vmem:[%s3125 + $0x358] sm:$0xff] %v3120
      %3182 = vst [vmem:[%s3125 + $0x380] sm:$0xff] %v2635
      %3183 = vst [vmem:[%s3125 + $0x388] sm:$0xff] %v3121
      %3184 = vst [vmem:[%s3125 + $0x390] sm:$0xff] %v2636
      %3185 = vst [vmem:[%s3125 + $0x398] sm:$0xff] %v3122
      %3186 = vst [vmem:[%s3125 + $0x3c0] sm:$0xff] %v2637
      %3187 = vst [vmem:[%s3125 + $0x3c8] sm:$0xff] %v3123
      %3188 = vst [vmem:[%s3125 + $0x3d0] sm:$0xff] %v2638
      %3189 = vst [vmem:[%s3125 + $0x3d8] sm:$0xff] %v3124
      %p3190 = scmp.lt.s32.totalorder %s14, 1
      %s3191 = scalar_select %p3190, %s14, 1
      %s3192 = smul.addr %s3191, 128
      %s3193 = smul.addr %s3192, 8
      %s3194 = scalar_lea.vmem %s3, %s3193
      // Predicated region
      $region33: #{upsample_forward.1} parent=31 // pred_check
        %p3195 = pneg %p100
      $region34: #{upsample_forward.1} parent=31 // pred_check_branch
        %3197 = sbr.rel (%p3195) target = $region36
      $region35: #{upsample_forward.1} parent=31 // pred_region
        _
      $region36: #{upsample_forward.1} parent=31 // pred_fallthru
        _
    $region32: #{upsample_forward.1} parent=5 // pred_fallthru
      _
    %p3198 = scmp.le.s32.totalorder 2, %s9
    // Predicated region
    $region37: #{upsample_forward.1} parent=5 // pred_check
      %p3199 = pneg %p3198
    $region38: #{upsample_forward.1} parent=5 // pred_check_branch
      %3201 = sbr.rel (%p3199) target = $region40
    $region39: #{upsample_forward.1} parent=5 // pred_region
      %s3202 = ssub.s32 %s9, 2
      // Predicated region
      $region41: #{upsample_forward.1} parent=39 // pred_check
        %p3203 = pneg %p106
      $region42: #{upsample_forward.1} parent=39 // pred_check_branch
        %3205 = sbr.rel (%p3203) target = $region44
      $region43: #{upsample_forward.1} parent=39 // pred_region
        %p3206 = scmp.lt.s32.totalorder %s15, 1
        %s3207 = scalar_select %p3206, %s15, 1
        %s3208 = smul.addr %s3207, 128
        %s3209 = smul.addr %s3208, 8
        %s3210 = scalar_lea.vmem %s3, %s3209
      $region44: #{upsample_forward.1} parent=39 // pred_fallthru
        _
    $region40: #{upsample_forward.1} parent=5 // pred_fallthru
      _
  $region6: #{upsample_forward.1} parent=0 // loop_footer
    %s13 = sadd.s32 1, %s9
  $region7: #{upsample_forward.1} parent=0 // loop_footer_branch
    %8 = sbr.rel target = $region3
  $region8: #{upsample_forward.1} parent=0 // loop_exit
    _

</llo_original>
